<compile_context>
chip_gen: v7x
topology: tpu7x:2x2x1
jax: 0.10.0
libtpu: 0.0.40
codegen_flags: <defaults>
</compile_context>

<pallas_src>
import jax
import jax.numpy as jnp
from jax.experimental import pallas as pl
from jax.experimental.pallas import tpu as pltpu

N_BLOCKS = 4
N_LAYERS = 6


def _round_up(n, m):
    return ((n + m - 1) // m) * m


def _vmem_capacity_bytes():
    """Physical VMEM per TensorCore (128 MiB on v5e/v6e, 64 MiB on v7x)."""
    try:
        info = pltpu.get_tpu_info()
        cap = getattr(info, "vmem_capacity_bytes", None)
        if cap and int(cap) >= (32 << 20):
            return int(cap)
    except Exception:
        pass
    return 128 * 1024 * 1024


def _pick_tb(B, vmem_cap):
    """Batch-tile rows.  128 MiB chips: up to 512.  64 MiB dual-TC chips (v7x):
    up to 256 and at least 2 tiles so the 'parallel' axis feeds both cores."""
    dual_tc = vmem_cap <= (64 << 20)
    tb_cap = 256 if dual_tc else 512
    if B <= 8:
        return B  # single tile; block equals full (padded) array dim -> always legal
    if dual_tc:
        tb = _round_up(pl.cdiv(B, 2), 8)
    else:
        tb = _round_up(B, 8)
    return min(tb_cap, tb)


def _resident_spec(shape):
    """Constant-index, single-buffered BlockSpec: DMA'd once, one VMEM buffer."""
    idx_map = lambda i: (0, 0)
    if hasattr(pl, "Buffered"):
        try:
            return pl.BlockSpec(shape, idx_map, pipeline_mode=pl.Buffered(1))
        except TypeError:
            pass
    return pl.BlockSpec(shape, idx_map)


# ----------------------------------------------------------------------------
# Kernel factory: fuse a contiguous range of coupling blocks (+ optional exp(s))
# ----------------------------------------------------------------------------
def _make_chunk_kernel(block_ids, apply_scale):
    n_wb = len(block_ids) * N_LAYERS * 2

    def kernel(*refs):
        # refs: x1 (TB,half) f32, x2 (TB,half) f32,
        #       [w bf16, b f32] * (len(block_ids)*6),
        #       [exp_s_even, exp_s_odd] if apply_scale,
        #       z1, z2 outputs.
        x1_ref, x2_ref = refs[0], refs[1]
        wb = refs[2:2 + n_wb]
        pos = 2 + n_wb
        if apply_scale:
            es1_ref, es2_ref = refs[pos], refs[pos + 1]
            pos += 2
        z1_ref, z2_ref = refs[pos], refs[pos + 1]

        u = x1_ref[...]          # values currently at even positions (f32)
        v = x2_ref[...]          # values currently at odd positions  (f32)

        for j, blk in enumerate(block_ids):
            base = j * N_LAYERS * 2
            # PyTorch: x1 = even half (blk even) else odd half; x2 = the other.
            x1, x2 = (u, v) if blk % 2 == 0 else (v, u)
            h = x1
            for k in range(N_LAYERS):
                w = wb[base + 2 * k][...]          # bf16 (in, out) -- MXU native
                b = wb[base + 2 * k + 1][...]      # f32  (1, out)
                h = jnp.dot(h.astype(jnp.bfloat16), w,
                            preferred_element_type=jnp.float32) + b
                if k < N_LAYERS - 1:
                    h = jnp.maximum(h, 0.0)
            x2 = x2 + h
            # New even positions <- x1, new odd positions <- x2 + m(x1).
            u, v = x1, x2

        if apply_scale:
            u = es1_ref[...] * u
            v = es2_ref[...] * v
        z1_ref[...] = u.astype(z1_ref.dtype)
        z2_ref[...] = v.astype(z2_ref.dtype)

    return kernel


# ----------------------------------------------------------------------------
# One-time parameter packing (outside the per-step jit)
# ----------------------------------------------------------------------------
def pack_params(params, s, lane=128):
    """bf16 weights, hidden zero-padded to a multiple of `lane`, biases as (1,N) f32,
    exp(s) precomputed and split even/odd, sum(s) precomputed.  Done once so the 48
    casts/pads/reshapes (an extra HBM pass over the weights) are not re-emitted per
    forward call."""
    half, hidden = params[0]["ws"][0].shape
    hidden_p = _round_up(hidden, lane)
    # NOTE: half = data_dim // 2 is already lane-aligned at real scale (1536 = 12*128).
    blocks = []
    for blk in params:
        ws, bs = [], []
        for k in range(N_LAYERS):
            w = jnp.asarray(blk["ws"][k], jnp.float32)
            b = jnp.asarray(blk["bs"][k], jnp.float32)
            in_p = half if k == 0 else hidden_p
            out_p = half if k == N_LAYERS - 1 else hidden_p
            w = jnp.pad(w, ((0, in_p - w.shape[0]), (0, out_p - w.shape[1])))
            b = jnp.pad(b, ((0, out_p - b.shape[0]),))
            ws.append(w.astype(jnp.bfloat16))
            bs.append(b.reshape(1, out_p))
        blocks.append({"ws": ws, "bs": bs})
    s = jnp.asarray(s, jnp.float32)
    return {
        "blocks": blocks,
        "exp_s1": jnp.exp(s[::2]).reshape(1, half),
        "exp_s2": jnp.exp(s[1::2]).reshape(1, half),
        "sum_s": jnp.sum(s),
    }


# ----------------------------------------------------------------------------
# Forward wrapper: one de-interleave, N fused pallas_calls, one interleave
# ----------------------------------------------------------------------------
def nice_forward(x, packed):
    B, D = x.shape
    half = D // 2
    blocks = packed["blocks"]
    hidden_p = blocks[0]["ws"][0].shape[1]

    vmem_cap = _vmem_capacity_bytes()
    TB = _pick_tb(B, vmem_cap)
    num_tiles = pl.cdiv(B, TB)
    Bp = num_tiles * TB

    # De-interleave ONCE (the only strided pass over the activations).
    x1 = x[:, ::2].astype(jnp.float32)   # even positions
    x2 = x[:, 1::2].astype(jnp.float32)  # odd positions
    if Bp != B:
        x1 = jnp.pad(x1, ((0, Bp - B), (0, 0)))
        x2 = jnp.pad(x2, ((0, Bp - B), (0, 0)))

    # --- VMEM accounting (bytes): single-buffered weights, double-buffered IO ---
    io_bytes = 8 * TB * half * 4                      # x1,x2,z1,z2 x 2 pipeline bufs
    act_bytes = 6 * TB * max(half, hidden_p) * 4      # layer temporaries headroom
    s_bytes = 2 * half * 4                            # exp(s) halves (1 buffer each)
    blk_bytes = []
    for blk in blocks:
        wbytes = sum(int(w.size) * w.dtype.itemsize for w in blk["ws"])
        wbytes += sum(int(b.size) * 4 for b in blk["bs"])
        blk_bytes.append(wbytes)
    usable = vmem_cap - (8 << 20)

    # Greedily fuse as many coupling blocks per pallas_call as fit VMEM.
    # 128 MiB chips -> one call with all 4 blocks; 64 MiB (v7x) -> two calls of 2.
    chunks, cur, cur_w = [], [], 0
    for i, wbytes in enumerate(blk_bytes):
        if cur and (cur_w + wbytes + io_bytes + act_bytes + s_bytes) > usable:
            chunks.append(cur)
            cur, cur_w = [], 0
        cur.append(i)
        cur_w += wbytes
    chunks.append(cur)
    # TODO(synk): for tiny batches (or a single block exceeding VMEM) stream weights
    # per coupling block with manual double-buffered DMA to hide the weight prologue.

    batch_spec = pl.BlockSpec((TB, half), lambda i: (i, 0))

    u, v = x1, x2
    for ci, chunk in enumerate(chunks):
        is_last = ci == len(chunks) - 1
        args = [u, v]
        in_specs = [batch_spec, batch_spec]
        need = io_bytes + act_bytes
        for i in chunk:
            need += blk_bytes[i]
            for w, b in zip(blocks[i]["ws"], blocks[i]["bs"]):
                args += [w, b]
                in_specs += [_resident_spec(w.shape), _resident_spec(b.shape)]
        if is_last:
            args += [packed["exp_s1"], packed["exp_s2"]]
            in_specs += [_resident_spec(packed["exp_s1"].shape),
                         _resident_spec(packed["exp_s2"].shape)]
            need += s_bytes
        vmem_limit = int(min(vmem_cap - (4 << 20),
                             max(need + (16 << 20), 32 << 20)))

        u, v = pl.pallas_call(
            _make_chunk_kernel(tuple(chunk), is_last),
            grid=(num_tiles,),
            out_shape=(jax.ShapeDtypeStruct((Bp, half), jnp.float32),
                       jax.ShapeDtypeStruct((Bp, half), jnp.float32)),
            in_specs=in_specs,
            out_specs=(batch_spec, batch_spec),
            compiler_params=pltpu.CompilerParams(
                dimension_semantics=("parallel",),   # megacore / dual-TC sharding
                vmem_limit_bytes=vmem_limit,
            ),
        )(*args)

    z1, z2 = u[:B], v[:B]
    # Interleave ONCE: z[:, ::2] = z1 (even), z[:, 1::2] = z2 (odd).
    z = jnp.stack([z1, z2], axis=-1).reshape(B, D)
    return z, packed["sum_s"]


# ----------------------------------------------------------------------------
# Pure-JAX reference (same bf16 weight contract as the kernel, unpadded params)
# ----------------------------------------------------------------------------
def nice_forward_ref(x, params, s):
    B, D = x.shape
    x = x.astype(jnp.float32)
    for i in range(N_BLOCKS):
        if i % 2 == 0:
            x_i1, x_i2 = x[:, ::2], x[:, 1::2]
        else:
            x_i1, x_i2 = x[:, 1::2], x[:, ::2]
        h = x_i1
        for k in range(N_LAYERS):
            h = jnp.dot(h.astype(jnp.bfloat16),
                        params[i]["ws"][k].astype(jnp.bfloat16),
                        preferred_element_type=jnp.float32) + params[i]["bs"][k]
            if k < N_LAYERS - 1:
                h = jnp.maximum(h, 0.0)
        h_i2 = x_i2 + h
        x = jnp.stack([x_i1, h_i2], axis=-1).reshape(B, D)
    return jnp.exp(s) * x, jnp.sum(s)


# ----------------------------------------------------------------------------
# Deterministic parameter construction (f32, matching the nn.Module layout)
# ----------------------------------------------------------------------------
def make_params(key, data_dim, hidden_dim):
    half = data_dim // 2
    dims = [half] + [hidden_dim] * (N_LAYERS - 1) + [half]
    params = []
    for _ in range(N_BLOCKS):
        ws, bs = [], []
        for k in range(N_LAYERS):
            key, kw, kb = jax.random.split(key, 3)
            w = jax.random.normal(kw, (dims[k], dims[k + 1]), jnp.float32) / jnp.sqrt(dims[k])
            b = jax.random.normal(kb, (dims[k + 1],), jnp.float32) * 0.01
            ws.append(w)
            bs.append(b)
        params.append({"ws": ws, "bs": bs})
    key, ks = jax.random.split(key)
    s = jax.random.normal(ks, (data_dim,), jnp.float32) * 0.1
    return params, s, key


if __name__ == "__main__":
    # Small shapes consistent with the module's forward: x is (batch, data_dim).
    # half = 128 is lane-aligned; hidden = 100 exercises the 100 -> 128 lane-padding
    # path (real scale: data_dim=3072 -> half=1536, hidden=1000 -> padded to 1024).
    batch, data_dim, hidden_dim = 8, 256, 100

    key = jax.random.PRNGKey(0)
    params, s, key = make_params(key, data_dim, hidden_dim)
    key, kx = jax.random.split(key)
    x = jax.random.normal(kx, (batch, data_dim), jnp.float32)

    packed = pack_params(params, s)     # one-time bf16 cast + lane padding + exp(s)
    fwd = jax.jit(nice_forward)
    z, log_jac = fwd(x, packed)
    z = jax.block_until_ready(z)
    log_jac = jax.block_until_ready(log_jac)

    z_ref, lj_ref = nice_forward_ref(x, params, s)
    assert z.shape == (batch, data_dim)
    assert jnp.allclose(z, z_ref, rtol=1e-3, atol=1e-3), "z mismatch vs reference"
    assert jnp.allclose(log_jac, lj_ref, rtol=1e-5, atol=1e-6), "log_jacobian mismatch"

    print("KERNEL_OK")
</pallas_src>

<mosaic_0001>
module attributes {stable_mosaic.version = 11 : i64} {
  func.func @kernel(%arg0: i32, %arg1: memref<8x128xf32, #tpu.memory_space<vmem>>, %arg2: memref<8x128xf32, #tpu.memory_space<vmem>>, %arg3: memref<128x128xbf16, #tpu.memory_space<vmem>>, %arg4: memref<1x128xf32, #tpu.memory_space<vmem>>, %arg5: memref<128x128xbf16, #tpu.memory_space<vmem>>, %arg6: memref<1x128xf32, #tpu.memory_space<vmem>>, %arg7: memref<128x128xbf16, #tpu.memory_space<vmem>>, %arg8: memref<1x128xf32, #tpu.memory_space<vmem>>, %arg9: memref<128x128xbf16, #tpu.memory_space<vmem>>, %arg10: memref<1x128xf32, #tpu.memory_space<vmem>>, %arg11: memref<128x128xbf16, #tpu.memory_space<vmem>>, %arg12: memref<1x128xf32, #tpu.memory_space<vmem>>, %arg13: memref<128x128xbf16, #tpu.memory_space<vmem>>, %arg14: memref<1x128xf32, #tpu.memory_space<vmem>>, %arg15: memref<128x128xbf16, #tpu.memory_space<vmem>>, %arg16: memref<1x128xf32, #tpu.memory_space<vmem>>, %arg17: memref<128x128xbf16, #tpu.memory_space<vmem>>, %arg18: memref<1x128xf32, #tpu.memory_space<vmem>>, %arg19: memref<128x128xbf16, #tpu.memory_space<vmem>>, %arg20: memref<1x128xf32, #tpu.memory_space<vmem>>, %arg21: memref<128x128xbf16, #tpu.memory_space<vmem>>, %arg22: memref<1x128xf32, #tpu.memory_space<vmem>>, %arg23: memref<128x128xbf16, #tpu.memory_space<vmem>>, %arg24: memref<1x128xf32, #tpu.memory_space<vmem>>, %arg25: memref<128x128xbf16, #tpu.memory_space<vmem>>, %arg26: memref<1x128xf32, #tpu.memory_space<vmem>>, %arg27: memref<128x128xbf16, #tpu.memory_space<vmem>>, %arg28: memref<1x128xf32, #tpu.memory_space<vmem>>, %arg29: memref<128x128xbf16, #tpu.memory_space<vmem>>, %arg30: memref<1x128xf32, #tpu.memory_space<vmem>>, %arg31: memref<128x128xbf16, #tpu.memory_space<vmem>>, %arg32: memref<1x128xf32, #tpu.memory_space<vmem>>, %arg33: memref<128x128xbf16, #tpu.memory_space<vmem>>, %arg34: memref<1x128xf32, #tpu.memory_space<vmem>>, %arg35: memref<128x128xbf16, #tpu.memory_space<vmem>>, %arg36: memref<1x128xf32, #tpu.memory_space<vmem>>, %arg37: memref<128x128xbf16, #tpu.memory_space<vmem>>, %arg38: memref<1x128xf32, #tpu.memory_space<vmem>>, %arg39: memref<128x128xbf16, #tpu.memory_space<vmem>>, %arg40: memref<1x128xf32, #tpu.memory_space<vmem>>, %arg41: memref<128x128xbf16, #tpu.memory_space<vmem>>, %arg42: memref<1x128xf32, #tpu.memory_space<vmem>>, %arg43: memref<128x128xbf16, #tpu.memory_space<vmem>>, %arg44: memref<1x128xf32, #tpu.memory_space<vmem>>, %arg45: memref<128x128xbf16, #tpu.memory_space<vmem>>, %arg46: memref<1x128xf32, #tpu.memory_space<vmem>>, %arg47: memref<128x128xbf16, #tpu.memory_space<vmem>>, %arg48: memref<1x128xf32, #tpu.memory_space<vmem>>, %arg49: memref<128x128xbf16, #tpu.memory_space<vmem>>, %arg50: memref<1x128xf32, #tpu.memory_space<vmem>>, %arg51: memref<1x128xf32, #tpu.memory_space<vmem>>, %arg52: memref<1x128xf32, #tpu.memory_space<vmem>>, %arg53: memref<8x128xf32, #tpu.memory_space<vmem>>, %arg54: memref<8x128xf32, #tpu.memory_space<vmem>>) attributes {dimension_semantics = [#tpu.dimension_semantics<parallel>], iteration_bounds = array<i64: 1>, scalar_prefetch = 0 : i64, scratch_operands = 0 : i64, tpu.core_type = #tpu.core_type<tc>, window_params = [{transform_indices = @transform_0, window_bounds = array<i64: 8, 128>}, {transform_indices = @transform_1, window_bounds = array<i64: 8, 128>}, {pipeline_mode = #tpu.pipeline_mode<synchronous>, transform_indices = @transform_2, window_bounds = array<i64: 128, 128>}, {pipeline_mode = #tpu.pipeline_mode<synchronous>, transform_indices = @transform_3, window_bounds = array<i64: 1, 128>}, {pipeline_mode = #tpu.pipeline_mode<synchronous>, transform_indices = @transform_4, window_bounds = array<i64: 128, 128>}, {pipeline_mode = #tpu.pipeline_mode<synchronous>, transform_indices = @transform_5, window_bounds = array<i64: 1, 128>}, {pipeline_mode = #tpu.pipeline_mode<synchronous>, transform_indices = @transform_6, window_bounds = array<i64: 128, 128>}, {pipeline_mode = #tpu.pipeline_mode<synchronous>, transform_indices = @transform_7, window_bounds = array<i64: 1, 128>}, {pipeline_mode = #tpu.pipeline_mode<synchronous>, transform_indices = @transform_8, window_bounds = array<i64: 128, 128>}, {pipeline_mode = #tpu.pipeline_mode<synchronous>, transform_indices = @transform_9, window_bounds = array<i64: 1, 128>}, {pipeline_mode = #tpu.pipeline_mode<synchronous>, transform_indices = @transform_10, window_bounds = array<i64: 128, 128>}, {pipeline_mode = #tpu.pipeline_mode<synchronous>, transform_indices = @transform_11, window_bounds = array<i64: 1, 128>}, {pipeline_mode = #tpu.pipeline_mode<synchronous>, transform_indices = @transform_12, window_bounds = array<i64: 128, 128>}, {pipeline_mode = #tpu.pipeline_mode<synchronous>, transform_indices = @transform_13, window_bounds = array<i64: 1, 128>}, {pipeline_mode = #tpu.pipeline_mode<synchronous>, transform_indices = @transform_14, window_bounds = array<i64: 128, 128>}, {pipeline_mode = #tpu.pipeline_mode<synchronous>, transform_indices = @transform_15, window_bounds = array<i64: 1, 128>}, {pipeline_mode = #tpu.pipeline_mode<synchronous>, transform_indices = @transform_16, window_bounds = array<i64: 128, 128>}, {pipeline_mode = #tpu.pipeline_mode<synchronous>, transform_indices = @transform_17, window_bounds = array<i64: 1, 128>}, {pipeline_mode = #tpu.pipeline_mode<synchronous>, transform_indices = @transform_18, window_bounds = array<i64: 128, 128>}, {pipeline_mode = #tpu.pipeline_mode<synchronous>, transform_indices = @transform_19, window_bounds = array<i64: 1, 128>}, {pipeline_mode = #tpu.pipeline_mode<synchronous>, transform_indices = @transform_20, window_bounds = array<i64: 128, 128>}, {pipeline_mode = #tpu.pipeline_mode<synchronous>, transform_indices = @transform_21, window_bounds = array<i64: 1, 128>}, {pipeline_mode = #tpu.pipeline_mode<synchronous>, transform_indices = @transform_22, window_bounds = array<i64: 128, 128>}, {pipeline_mode = #tpu.pipeline_mode<synchronous>, transform_indices = @transform_23, window_bounds = array<i64: 1, 128>}, {pipeline_mode = #tpu.pipeline_mode<synchronous>, transform_indices = @transform_24, window_bounds = array<i64: 128, 128>}, {pipeline_mode = #tpu.pipeline_mode<synchronous>, transform_indices = @transform_25, window_bounds = array<i64: 1, 128>}, {pipeline_mode = #tpu.pipeline_mode<synchronous>, transform_indices = @transform_26, window_bounds = array<i64: 128, 128>}, {pipeline_mode = #tpu.pipeline_mode<synchronous>, transform_indices = @transform_27, window_bounds = array<i64: 1, 128>}, {pipeline_mode = #tpu.pipeline_mode<synchronous>, transform_indices = @transform_28, window_bounds = array<i64: 128, 128>}, {pipeline_mode = #tpu.pipeline_mode<synchronous>, transform_indices = @transform_29, window_bounds = array<i64: 1, 128>}, {pipeline_mode = #tpu.pipeline_mode<synchronous>, transform_indices = @transform_30, window_bounds = array<i64: 128, 128>}, {pipeline_mode = #tpu.pipeline_mode<synchronous>, transform_indices = @transform_31, window_bounds = array<i64: 1, 128>}, {pipeline_mode = #tpu.pipeline_mode<synchronous>, transform_indices = @transform_32, window_bounds = array<i64: 128, 128>}, {pipeline_mode = #tpu.pipeline_mode<synchronous>, transform_indices = @transform_33, window_bounds = array<i64: 1, 128>}, {pipeline_mode = #tpu.pipeline_mode<synchronous>, transform_indices = @transform_34, window_bounds = array<i64: 128, 128>}, {pipeline_mode = #tpu.pipeline_mode<synchronous>, transform_indices = @transform_35, window_bounds = array<i64: 1, 128>}, {pipeline_mode = #tpu.pipeline_mode<synchronous>, transform_indices = @transform_36, window_bounds = array<i64: 128, 128>}, {pipeline_mode = #tpu.pipeline_mode<synchronous>, transform_indices = @transform_37, window_bounds = array<i64: 1, 128>}, {pipeline_mode = #tpu.pipeline_mode<synchronous>, transform_indices = @transform_38, window_bounds = array<i64: 128, 128>}, {pipeline_mode = #tpu.pipeline_mode<synchronous>, transform_indices = @transform_39, window_bounds = array<i64: 1, 128>}, {pipeline_mode = #tpu.pipeline_mode<synchronous>, transform_indices = @transform_40, window_bounds = array<i64: 128, 128>}, {pipeline_mode = #tpu.pipeline_mode<synchronous>, transform_indices = @transform_41, window_bounds = array<i64: 1, 128>}, {pipeline_mode = #tpu.pipeline_mode<synchronous>, transform_indices = @transform_42, window_bounds = array<i64: 128, 128>}, {pipeline_mode = #tpu.pipeline_mode<synchronous>, transform_indices = @transform_43, window_bounds = array<i64: 1, 128>}, {pipeline_mode = #tpu.pipeline_mode<synchronous>, transform_indices = @transform_44, window_bounds = array<i64: 128, 128>}, {pipeline_mode = #tpu.pipeline_mode<synchronous>, transform_indices = @transform_45, window_bounds = array<i64: 1, 128>}, {pipeline_mode = #tpu.pipeline_mode<synchronous>, transform_indices = @transform_46, window_bounds = array<i64: 128, 128>}, {pipeline_mode = #tpu.pipeline_mode<synchronous>, transform_indices = @transform_47, window_bounds = array<i64: 1, 128>}, {pipeline_mode = #tpu.pipeline_mode<synchronous>, transform_indices = @transform_48, window_bounds = array<i64: 128, 128>}, {pipeline_mode = #tpu.pipeline_mode<synchronous>, transform_indices = @transform_49, window_bounds = array<i64: 1, 128>}, {pipeline_mode = #tpu.pipeline_mode<synchronous>, transform_indices = @transform_50, window_bounds = array<i64: 1, 128>}, {pipeline_mode = #tpu.pipeline_mode<synchronous>, transform_indices = @transform_51, window_bounds = array<i64: 1, 128>}, {transform_indices = @transform_52, window_bounds = array<i64: 8, 128>}, {transform_indices = @transform_53, window_bounds = array<i64: 8, 128>}]} {
    %c0 = arith.constant 0 : index
    %c0_0 = arith.constant 0 : index
    %0 = vector.load %arg1[%c0, %c0_0] : memref<8x128xf32, #tpu.memory_space<vmem>>, vector<8x128xf32>
    %c0_1 = arith.constant 0 : index
    %c0_2 = arith.constant 0 : index
    %1 = vector.load %arg2[%c0_1, %c0_2] : memref<8x128xf32, #tpu.memory_space<vmem>>, vector<8x128xf32>
    %c0_3 = arith.constant 0 : index
    %c0_4 = arith.constant 0 : index
    %2 = vector.load %arg3[%c0_3, %c0_4] : memref<128x128xbf16, #tpu.memory_space<vmem>>, vector<128x128xbf16>
    %c0_5 = arith.constant 0 : index
    %c0_6 = arith.constant 0 : index
    %3 = vector.load %arg4[%c0_5, %c0_6] : memref<1x128xf32, #tpu.memory_space<vmem>>, vector<1x128xf32>
    %4 = arith.truncf %0 : vector<8x128xf32> to vector<8x128xbf16>
    %cst = arith.constant dense<0.000000e+00> : vector<8x128xf32>
    %5 = tpu.matmul %4, %2, %cst {dimension_numbers = #tpu.dot_dimension_numbers<[1], [0], [0], [1], [0, 0, 1, 1], [], []>} : vector<8x128xbf16>, vector<128x128xbf16>, vector<8x128xf32> -> vector<8x128xf32>
    %6 = vector.broadcast %3 : vector<1x128xf32> to vector<8x128xf32>
    %7 = arith.addf %5, %6 : vector<8x128xf32>
    %cst_7 = arith.constant 0.000000e+00 : f32
    %8 = vector.broadcast %cst_7 : f32 to vector<8x128xf32>
    %9 = arith.maximumf %7, %8 : vector<8x128xf32>
    %c0_8 = arith.constant 0 : index
    %c0_9 = arith.constant 0 : index
    %10 = vector.load %arg5[%c0_8, %c0_9] : memref<128x128xbf16, #tpu.memory_space<vmem>>, vector<128x128xbf16>
    %c0_10 = arith.constant 0 : index
    %c0_11 = arith.constant 0 : index
    %11 = vector.load %arg6[%c0_10, %c0_11] : memref<1x128xf32, #tpu.memory_space<vmem>>, vector<1x128xf32>
    %12 = arith.truncf %9 : vector<8x128xf32> to vector<8x128xbf16>
    %cst_12 = arith.constant dense<0.000000e+00> : vector<8x128xf32>
    %13 = tpu.matmul %12, %10, %cst_12 {dimension_numbers = #tpu.dot_dimension_numbers<[1], [0], [0], [1], [0, 0, 1, 1], [], []>} : vector<8x128xbf16>, vector<128x128xbf16>, vector<8x128xf32> -> vector<8x128xf32>
    %14 = vector.broadcast %11 : vector<1x128xf32> to vector<8x128xf32>
    %15 = arith.addf %13, %14 : vector<8x128xf32>
    %cst_13 = arith.constant 0.000000e+00 : f32
    %16 = vector.broadcast %cst_13 : f32 to vector<8x128xf32>
    %17 = arith.maximumf %15, %16 : vector<8x128xf32>
    %c0_14 = arith.constant 0 : index
    %c0_15 = arith.constant 0 : index
    %18 = vector.load %arg7[%c0_14, %c0_15] : memref<128x128xbf16, #tpu.memory_space<vmem>>, vector<128x128xbf16>
    %c0_16 = arith.constant 0 : index
    %c0_17 = arith.constant 0 : index
    %19 = vector.load %arg8[%c0_16, %c0_17] : memref<1x128xf32, #tpu.memory_space<vmem>>, vector<1x128xf32>
    %20 = arith.truncf %17 : vector<8x128xf32> to vector<8x128xbf16>
    %cst_18 = arith.constant dense<0.000000e+00> : vector<8x128xf32>
    %21 = tpu.matmul %20, %18, %cst_18 {dimension_numbers = #tpu.dot_dimension_numbers<[1], [0], [0], [1], [0, 0, 1, 1], [], []>} : vector<8x128xbf16>, vector<128x128xbf16>, vector<8x128xf32> -> vector<8x128xf32>
    %22 = vector.broadcast %19 : vector<1x128xf32> to vector<8x128xf32>
    %23 = arith.addf %21, %22 : vector<8x128xf32>
    %cst_19 = arith.constant 0.000000e+00 : f32
    %24 = vector.broadcast %cst_19 : f32 to vector<8x128xf32>
    %25 = arith.maximumf %23, %24 : vector<8x128xf32>
    %c0_20 = arith.constant 0 : index
    %c0_21 = arith.constant 0 : index
    %26 = vector.load %arg9[%c0_20, %c0_21] : memref<128x128xbf16, #tpu.memory_space<vmem>>, vector<128x128xbf16>
    %c0_22 = arith.constant 0 : index
    %c0_23 = arith.constant 0 : index
    %27 = vector.load %arg10[%c0_22, %c0_23] : memref<1x128xf32, #tpu.memory_space<vmem>>, vector<1x128xf32>
    %28 = arith.truncf %25 : vector<8x128xf32> to vector<8x128xbf16>
    %cst_24 = arith.constant dense<0.000000e+00> : vector<8x128xf32>
    %29 = tpu.matmul %28, %26, %cst_24 {dimension_numbers = #tpu.dot_dimension_numbers<[1], [0], [0], [1], [0, 0, 1, 1], [], []>} : vector<8x128xbf16>, vector<128x128xbf16>, vector<8x128xf32> -> vector<8x128xf32>
    %30 = vector.broadcast %27 : vector<1x128xf32> to vector<8x128xf32>
    %31 = arith.addf %29, %30 : vector<8x128xf32>
    %cst_25 = arith.constant 0.000000e+00 : f32
    %32 = vector.broadcast %cst_25 : f32 to vector<8x128xf32>
    %33 = arith.maximumf %31, %32 : vector<8x128xf32>
    %c0_26 = arith.constant 0 : index
    %c0_27 = arith.constant 0 : index
    %34 = vector.load %arg11[%c0_26, %c0_27] : memref<128x128xbf16, #tpu.memory_space<vmem>>, vector<128x128xbf16>
    %c0_28 = arith.constant 0 : index
    %c0_29 = arith.constant 0 : index
    %35 = vector.load %arg12[%c0_28, %c0_29] : memref<1x128xf32, #tpu.memory_space<vmem>>, vector<1x128xf32>
    %36 = arith.truncf %33 : vector<8x128xf32> to vector<8x128xbf16>
    %cst_30 = arith.constant dense<0.000000e+00> : vector<8x128xf32>
    %37 = tpu.matmul %36, %34, %cst_30 {dimension_numbers = #tpu.dot_dimension_numbers<[1], [0], [0], [1], [0, 0, 1, 1], [], []>} : vector<8x128xbf16>, vector<128x128xbf16>, vector<8x128xf32> -> vector<8x128xf32>
    %38 = vector.broadcast %35 : vector<1x128xf32> to vector<8x128xf32>
    %39 = arith.addf %37, %38 : vector<8x128xf32>
    %cst_31 = arith.constant 0.000000e+00 : f32
    %40 = vector.broadcast %cst_31 : f32 to vector<8x128xf32>
    %41 = arith.maximumf %39, %40 : vector<8x128xf32>
    %c0_32 = arith.constant 0 : index
    %c0_33 = arith.constant 0 : index
    %42 = vector.load %arg13[%c0_32, %c0_33] : memref<128x128xbf16, #tpu.memory_space<vmem>>, vector<128x128xbf16>
    %c0_34 = arith.constant 0 : index
    %c0_35 = arith.constant 0 : index
    %43 = vector.load %arg14[%c0_34, %c0_35] : memref<1x128xf32, #tpu.memory_space<vmem>>, vector<1x128xf32>
    %44 = arith.truncf %41 : vector<8x128xf32> to vector<8x128xbf16>
    %cst_36 = arith.constant dense<0.000000e+00> : vector<8x128xf32>
    %45 = tpu.matmul %44, %42, %cst_36 {dimension_numbers = #tpu.dot_dimension_numbers<[1], [0], [0], [1], [0, 0, 1, 1], [], []>} : vector<8x128xbf16>, vector<128x128xbf16>, vector<8x128xf32> -> vector<8x128xf32>
    %46 = vector.broadcast %43 : vector<1x128xf32> to vector<8x128xf32>
    %47 = arith.addf %45, %46 : vector<8x128xf32>
    %48 = arith.addf %1, %47 : vector<8x128xf32>
    %c0_37 = arith.constant 0 : index
    %c0_38 = arith.constant 0 : index
    %49 = vector.load %arg15[%c0_37, %c0_38] : memref<128x128xbf16, #tpu.memory_space<vmem>>, vector<128x128xbf16>
    %c0_39 = arith.constant 0 : index
    %c0_40 = arith.constant 0 : index
    %50 = vector.load %arg16[%c0_39, %c0_40] : memref<1x128xf32, #tpu.memory_space<vmem>>, vector<1x128xf32>
    %51 = arith.truncf %48 : vector<8x128xf32> to vector<8x128xbf16>
    %cst_41 = arith.constant dense<0.000000e+00> : vector<8x128xf32>
    %52 = tpu.matmul %51, %49, %cst_41 {dimension_numbers = #tpu.dot_dimension_numbers<[1], [0], [0], [1], [0, 0, 1, 1], [], []>} : vector<8x128xbf16>, vector<128x128xbf16>, vector<8x128xf32> -> vector<8x128xf32>
    %53 = vector.broadcast %50 : vector<1x128xf32> to vector<8x128xf32>
    %54 = arith.addf %52, %53 : vector<8x128xf32>
    %cst_42 = arith.constant 0.000000e+00 : f32
    %55 = vector.broadcast %cst_42 : f32 to vector<8x128xf32>
    %56 = arith.maximumf %54, %55 : vector<8x128xf32>
    %c0_43 = arith.constant 0 : index
    %c0_44 = arith.constant 0 : index
    %57 = vector.load %arg17[%c0_43, %c0_44] : memref<128x128xbf16, #tpu.memory_space<vmem>>, vector<128x128xbf16>
    %c0_45 = arith.constant 0 : index
    %c0_46 = arith.constant 0 : index
    %58 = vector.load %arg18[%c0_45, %c0_46] : memref<1x128xf32, #tpu.memory_space<vmem>>, vector<1x128xf32>
    %59 = arith.truncf %56 : vector<8x128xf32> to vector<8x128xbf16>
    %cst_47 = arith.constant dense<0.000000e+00> : vector<8x128xf32>
    %60 = tpu.matmul %59, %57, %cst_47 {dimension_numbers = #tpu.dot_dimension_numbers<[1], [0], [0], [1], [0, 0, 1, 1], [], []>} : vector<8x128xbf16>, vector<128x128xbf16>, vector<8x128xf32> -> vector<8x128xf32>
    %61 = vector.broadcast %58 : vector<1x128xf32> to vector<8x128xf32>
    %62 = arith.addf %60, %61 : vector<8x128xf32>
    %cst_48 = arith.constant 0.000000e+00 : f32
    %63 = vector.broadcast %cst_48 : f32 to vector<8x128xf32>
    %64 = arith.maximumf %62, %63 : vector<8x128xf32>
    %c0_49 = arith.constant 0 : index
    %c0_50 = arith.constant 0 : index
    %65 = vector.load %arg19[%c0_49, %c0_50] : memref<128x128xbf16, #tpu.memory_space<vmem>>, vector<128x128xbf16>
    %c0_51 = arith.constant 0 : index
    %c0_52 = arith.constant 0 : index
    %66 = vector.load %arg20[%c0_51, %c0_52] : memref<1x128xf32, #tpu.memory_space<vmem>>, vector<1x128xf32>
    %67 = arith.truncf %64 : vector<8x128xf32> to vector<8x128xbf16>
    %cst_53 = arith.constant dense<0.000000e+00> : vector<8x128xf32>
    %68 = tpu.matmul %67, %65, %cst_53 {dimension_numbers = #tpu.dot_dimension_numbers<[1], [0], [0], [1], [0, 0, 1, 1], [], []>} : vector<8x128xbf16>, vector<128x128xbf16>, vector<8x128xf32> -> vector<8x128xf32>
    %69 = vector.broadcast %66 : vector<1x128xf32> to vector<8x128xf32>
    %70 = arith.addf %68, %69 : vector<8x128xf32>
    %cst_54 = arith.constant 0.000000e+00 : f32
    %71 = vector.broadcast %cst_54 : f32 to vector<8x128xf32>
    %72 = arith.maximumf %70, %71 : vector<8x128xf32>
    %c0_55 = arith.constant 0 : index
    %c0_56 = arith.constant 0 : index
    %73 = vector.load %arg21[%c0_55, %c0_56] : memref<128x128xbf16, #tpu.memory_space<vmem>>, vector<128x128xbf16>
    %c0_57 = arith.constant 0 : index
    %c0_58 = arith.constant 0 : index
    %74 = vector.load %arg22[%c0_57, %c0_58] : memref<1x128xf32, #tpu.memory_space<vmem>>, vector<1x128xf32>
    %75 = arith.truncf %72 : vector<8x128xf32> to vector<8x128xbf16>
    %cst_59 = arith.constant dense<0.000000e+00> : vector<8x128xf32>
    %76 = tpu.matmul %75, %73, %cst_59 {dimension_numbers = #tpu.dot_dimension_numbers<[1], [0], [0], [1], [0, 0, 1, 1], [], []>} : vector<8x128xbf16>, vector<128x128xbf16>, vector<8x128xf32> -> vector<8x128xf32>
    %77 = vector.broadcast %74 : vector<1x128xf32> to vector<8x128xf32>
    %78 = arith.addf %76, %77 : vector<8x128xf32>
    %cst_60 = arith.constant 0.000000e+00 : f32
    %79 = vector.broadcast %cst_60 : f32 to vector<8x128xf32>
    %80 = arith.maximumf %78, %79 : vector<8x128xf32>
    %c0_61 = arith.constant 0 : index
    %c0_62 = arith.constant 0 : index
    %81 = vector.load %arg23[%c0_61, %c0_62] : memref<128x128xbf16, #tpu.memory_space<vmem>>, vector<128x128xbf16>
    %c0_63 = arith.constant 0 : index
    %c0_64 = arith.constant 0 : index
    %82 = vector.load %arg24[%c0_63, %c0_64] : memref<1x128xf32, #tpu.memory_space<vmem>>, vector<1x128xf32>
    %83 = arith.truncf %80 : vector<8x128xf32> to vector<8x128xbf16>
    %cst_65 = arith.constant dense<0.000000e+00> : vector<8x128xf32>
    %84 = tpu.matmul %83, %81, %cst_65 {dimension_numbers = #tpu.dot_dimension_numbers<[1], [0], [0], [1], [0, 0, 1, 1], [], []>} : vector<8x128xbf16>, vector<128x128xbf16>, vector<8x128xf32> -> vector<8x128xf32>
    %85 = vector.broadcast %82 : vector<1x128xf32> to vector<8x128xf32>
    %86 = arith.addf %84, %85 : vector<8x128xf32>
    %cst_66 = arith.constant 0.000000e+00 : f32
    %87 = vector.broadcast %cst_66 : f32 to vector<8x128xf32>
    %88 = arith.maximumf %86, %87 : vector<8x128xf32>
    %c0_67 = arith.constant 0 : index
    %c0_68 = arith.constant 0 : index
    %89 = vector.load %arg25[%c0_67, %c0_68] : memref<128x128xbf16, #tpu.memory_space<vmem>>, vector<128x128xbf16>
    %c0_69 = arith.constant 0 : index
    %c0_70 = arith.constant 0 : index
    %90 = vector.load %arg26[%c0_69, %c0_70] : memref<1x128xf32, #tpu.memory_space<vmem>>, vector<1x128xf32>
    %91 = arith.truncf %88 : vector<8x128xf32> to vector<8x128xbf16>
    %cst_71 = arith.constant dense<0.000000e+00> : vector<8x128xf32>
    %92 = tpu.matmul %91, %89, %cst_71 {dimension_numbers = #tpu.dot_dimension_numbers<[1], [0], [0], [1], [0, 0, 1, 1], [], []>} : vector<8x128xbf16>, vector<128x128xbf16>, vector<8x128xf32> -> vector<8x128xf32>
    %93 = vector.broadcast %90 : vector<1x128xf32> to vector<8x128xf32>
    %94 = arith.addf %92, %93 : vector<8x128xf32>
    %95 = arith.addf %0, %94 : vector<8x128xf32>
    %c0_72 = arith.constant 0 : index
    %c0_73 = arith.constant 0 : index
    %96 = vector.load %arg27[%c0_72, %c0_73] : memref<128x128xbf16, #tpu.memory_space<vmem>>, vector<128x128xbf16>
    %c0_74 = arith.constant 0 : index
    %c0_75 = arith.constant 0 : index
    %97 = vector.load %arg28[%c0_74, %c0_75] : memref<1x128xf32, #tpu.memory_space<vmem>>, vector<1x128xf32>
    %98 = arith.truncf %48 : vector<8x128xf32> to vector<8x128xbf16>
    %cst_76 = arith.constant dense<0.000000e+00> : vector<8x128xf32>
    %99 = tpu.matmul %98, %96, %cst_76 {dimension_numbers = #tpu.dot_dimension_numbers<[1], [0], [0], [1], [0, 0, 1, 1], [], []>} : vector<8x128xbf16>, vector<128x128xbf16>, vector<8x128xf32> -> vector<8x128xf32>
    %100 = vector.broadcast %97 : vector<1x128xf32> to vector<8x128xf32>
    %101 = arith.addf %99, %100 : vector<8x128xf32>
    %cst_77 = arith.constant 0.000000e+00 : f32
    %102 = vector.broadcast %cst_77 : f32 to vector<8x128xf32>
    %103 = arith.maximumf %101, %102 : vector<8x128xf32>
    %c0_78 = arith.constant 0 : index
    %c0_79 = arith.constant 0 : index
    %104 = vector.load %arg29[%c0_78, %c0_79] : memref<128x128xbf16, #tpu.memory_space<vmem>>, vector<128x128xbf16>
    %c0_80 = arith.constant 0 : index
    %c0_81 = arith.constant 0 : index
    %105 = vector.load %arg30[%c0_80, %c0_81] : memref<1x128xf32, #tpu.memory_space<vmem>>, vector<1x128xf32>
    %106 = arith.truncf %103 : vector<8x128xf32> to vector<8x128xbf16>
    %cst_82 = arith.constant dense<0.000000e+00> : vector<8x128xf32>
    %107 = tpu.matmul %106, %104, %cst_82 {dimension_numbers = #tpu.dot_dimension_numbers<[1], [0], [0], [1], [0, 0, 1, 1], [], []>} : vector<8x128xbf16>, vector<128x128xbf16>, vector<8x128xf32> -> vector<8x128xf32>
    %108 = vector.broadcast %105 : vector<1x128xf32> to vector<8x128xf32>
    %109 = arith.addf %107, %108 : vector<8x128xf32>
    %cst_83 = arith.constant 0.000000e+00 : f32
    %110 = vector.broadcast %cst_83 : f32 to vector<8x128xf32>
    %111 = arith.maximumf %109, %110 : vector<8x128xf32>
    %c0_84 = arith.constant 0 : index
    %c0_85 = arith.constant 0 : index
    %112 = vector.load %arg31[%c0_84, %c0_85] : memref<128x128xbf16, #tpu.memory_space<vmem>>, vector<128x128xbf16>
    %c0_86 = arith.constant 0 : index
    %c0_87 = arith.constant 0 : index
    %113 = vector.load %arg32[%c0_86, %c0_87] : memref<1x128xf32, #tpu.memory_space<vmem>>, vector<1x128xf32>
    %114 = arith.truncf %111 : vector<8x128xf32> to vector<8x128xbf16>
    %cst_88 = arith.constant dense<0.000000e+00> : vector<8x128xf32>
    %115 = tpu.matmul %114, %112, %cst_88 {dimension_numbers = #tpu.dot_dimension_numbers<[1], [0], [0], [1], [0, 0, 1, 1], [], []>} : vector<8x128xbf16>, vector<128x128xbf16>, vector<8x128xf32> -> vector<8x128xf32>
    %116 = vector.broadcast %113 : vector<1x128xf32> to vector<8x128xf32>
    %117 = arith.addf %115, %116 : vector<8x128xf32>
    %cst_89 = arith.constant 0.000000e+00 : f32
    %118 = vector.broadcast %cst_89 : f32 to vector<8x128xf32>
    %119 = arith.maximumf %117, %118 : vector<8x128xf32>
    %c0_90 = arith.constant 0 : index
    %c0_91 = arith.constant 0 : index
    %120 = vector.load %arg33[%c0_90, %c0_91] : memref<128x128xbf16, #tpu.memory_space<vmem>>, vector<128x128xbf16>
    %c0_92 = arith.constant 0 : index
    %c0_93 = arith.constant 0 : index
    %121 = vector.load %arg34[%c0_92, %c0_93] : memref<1x128xf32, #tpu.memory_space<vmem>>, vector<1x128xf32>
    %122 = arith.truncf %119 : vector<8x128xf32> to vector<8x128xbf16>
    %cst_94 = arith.constant dense<0.000000e+00> : vector<8x128xf32>
    %123 = tpu.matmul %122, %120, %cst_94 {dimension_numbers = #tpu.dot_dimension_numbers<[1], [0], [0], [1], [0, 0, 1, 1], [], []>} : vector<8x128xbf16>, vector<128x128xbf16>, vector<8x128xf32> -> vector<8x128xf32>
    %124 = vector.broadcast %121 : vector<1x128xf32> to vector<8x128xf32>
    %125 = arith.addf %123, %124 : vector<8x128xf32>
    %cst_95 = arith.constant 0.000000e+00 : f32
    %126 = vector.broadcast %cst_95 : f32 to vector<8x128xf32>
    %127 = arith.maximumf %125, %126 : vector<8x128xf32>
    %c0_96 = arith.constant 0 : index
    %c0_97 = arith.constant 0 : index
    %128 = vector.load %arg35[%c0_96, %c0_97] : memref<128x128xbf16, #tpu.memory_space<vmem>>, vector<128x128xbf16>
    %c0_98 = arith.constant 0 : index
    %c0_99 = arith.constant 0 : index
    %129 = vector.load %arg36[%c0_98, %c0_99] : memref<1x128xf32, #tpu.memory_space<vmem>>, vector<1x128xf32>
    %130 = arith.truncf %127 : vector<8x128xf32> to vector<8x128xbf16>
    %cst_100 = arith.constant dense<0.000000e+00> : vector<8x128xf32>
    %131 = tpu.matmul %130, %128, %cst_100 {dimension_numbers = #tpu.dot_dimension_numbers<[1], [0], [0], [1], [0, 0, 1, 1], [], []>} : vector<8x128xbf16>, vector<128x128xbf16>, vector<8x128xf32> -> vector<8x128xf32>
    %132 = vector.broadcast %129 : vector<1x128xf32> to vector<8x128xf32>
    %133 = arith.addf %131, %132 : vector<8x128xf32>
    %cst_101 = arith.constant 0.000000e+00 : f32
    %134 = vector.broadcast %cst_101 : f32 to vector<8x128xf32>
    %135 = arith.maximumf %133, %134 : vector<8x128xf32>
    %c0_102 = arith.constant 0 : index
    %c0_103 = arith.constant 0 : index
    %136 = vector.load %arg37[%c0_102, %c0_103] : memref<128x128xbf16, #tpu.memory_space<vmem>>, vector<128x128xbf16>
    %c0_104 = arith.constant 0 : index
    %c0_105 = arith.constant 0 : index
    %137 = vector.load %arg38[%c0_104, %c0_105] : memref<1x128xf32, #tpu.memory_space<vmem>>, vector<1x128xf32>
    %138 = arith.truncf %135 : vector<8x128xf32> to vector<8x128xbf16>
    %cst_106 = arith.constant dense<0.000000e+00> : vector<8x128xf32>
    %139 = tpu.matmul %138, %136, %cst_106 {dimension_numbers = #tpu.dot_dimension_numbers<[1], [0], [0], [1], [0, 0, 1, 1], [], []>} : vector<8x128xbf16>, vector<128x128xbf16>, vector<8x128xf32> -> vector<8x128xf32>
    %140 = vector.broadcast %137 : vector<1x128xf32> to vector<8x128xf32>
    %141 = arith.addf %139, %140 : vector<8x128xf32>
    %142 = arith.addf %95, %141 : vector<8x128xf32>
    %c0_107 = arith.constant 0 : index
    %c0_108 = arith.constant 0 : index
    %143 = vector.load %arg39[%c0_107, %c0_108] : memref<128x128xbf16, #tpu.memory_space<vmem>>, vector<128x128xbf16>
    %c0_109 = arith.constant 0 : index
    %c0_110 = arith.constant 0 : index
    %144 = vector.load %arg40[%c0_109, %c0_110] : memref<1x128xf32, #tpu.memory_space<vmem>>, vector<1x128xf32>
    %145 = arith.truncf %142 : vector<8x128xf32> to vector<8x128xbf16>
    %cst_111 = arith.constant dense<0.000000e+00> : vector<8x128xf32>
    %146 = tpu.matmul %145, %143, %cst_111 {dimension_numbers = #tpu.dot_dimension_numbers<[1], [0], [0], [1], [0, 0, 1, 1], [], []>} : vector<8x128xbf16>, vector<128x128xbf16>, vector<8x128xf32> -> vector<8x128xf32>
    %147 = vector.broadcast %144 : vector<1x128xf32> to vector<8x128xf32>
    %148 = arith.addf %146, %147 : vector<8x128xf32>
    %cst_112 = arith.constant 0.000000e+00 : f32
    %149 = vector.broadcast %cst_112 : f32 to vector<8x128xf32>
    %150 = arith.maximumf %148, %149 : vector<8x128xf32>
    %c0_113 = arith.constant 0 : index
    %c0_114 = arith.constant 0 : index
    %151 = vector.load %arg41[%c0_113, %c0_114] : memref<128x128xbf16, #tpu.memory_space<vmem>>, vector<128x128xbf16>
    %c0_115 = arith.constant 0 : index
    %c0_116 = arith.constant 0 : index
    %152 = vector.load %arg42[%c0_115, %c0_116] : memref<1x128xf32, #tpu.memory_space<vmem>>, vector<1x128xf32>
    %153 = arith.truncf %150 : vector<8x128xf32> to vector<8x128xbf16>
    %cst_117 = arith.constant dense<0.000000e+00> : vector<8x128xf32>
    %154 = tpu.matmul %153, %151, %cst_117 {dimension_numbers = #tpu.dot_dimension_numbers<[1], [0], [0], [1], [0, 0, 1, 1], [], []>} : vector<8x128xbf16>, vector<128x128xbf16>, vector<8x128xf32> -> vector<8x128xf32>
    %155 = vector.broadcast %152 : vector<1x128xf32> to vector<8x128xf32>
    %156 = arith.addf %154, %155 : vector<8x128xf32>
    %cst_118 = arith.constant 0.000000e+00 : f32
    %157 = vector.broadcast %cst_118 : f32 to vector<8x128xf32>
    %158 = arith.maximumf %156, %157 : vector<8x128xf32>
    %c0_119 = arith.constant 0 : index
    %c0_120 = arith.constant 0 : index
    %159 = vector.load %arg43[%c0_119, %c0_120] : memref<128x128xbf16, #tpu.memory_space<vmem>>, vector<128x128xbf16>
    %c0_121 = arith.constant 0 : index
    %c0_122 = arith.constant 0 : index
    %160 = vector.load %arg44[%c0_121, %c0_122] : memref<1x128xf32, #tpu.memory_space<vmem>>, vector<1x128xf32>
    %161 = arith.truncf %158 : vector<8x128xf32> to vector<8x128xbf16>
    %cst_123 = arith.constant dense<0.000000e+00> : vector<8x128xf32>
    %162 = tpu.matmul %161, %159, %cst_123 {dimension_numbers = #tpu.dot_dimension_numbers<[1], [0], [0], [1], [0, 0, 1, 1], [], []>} : vector<8x128xbf16>, vector<128x128xbf16>, vector<8x128xf32> -> vector<8x128xf32>
    %163 = vector.broadcast %160 : vector<1x128xf32> to vector<8x128xf32>
    %164 = arith.addf %162, %163 : vector<8x128xf32>
    %cst_124 = arith.constant 0.000000e+00 : f32
    %165 = vector.broadcast %cst_124 : f32 to vector<8x128xf32>
    %166 = arith.maximumf %164, %165 : vector<8x128xf32>
    %c0_125 = arith.constant 0 : index
    %c0_126 = arith.constant 0 : index
    %167 = vector.load %arg45[%c0_125, %c0_126] : memref<128x128xbf16, #tpu.memory_space<vmem>>, vector<128x128xbf16>
    %c0_127 = arith.constant 0 : index
    %c0_128 = arith.constant 0 : index
    %168 = vector.load %arg46[%c0_127, %c0_128] : memref<1x128xf32, #tpu.memory_space<vmem>>, vector<1x128xf32>
    %169 = arith.truncf %166 : vector<8x128xf32> to vector<8x128xbf16>
    %cst_129 = arith.constant dense<0.000000e+00> : vector<8x128xf32>
    %170 = tpu.matmul %169, %167, %cst_129 {dimension_numbers = #tpu.dot_dimension_numbers<[1], [0], [0], [1], [0, 0, 1, 1], [], []>} : vector<8x128xbf16>, vector<128x128xbf16>, vector<8x128xf32> -> vector<8x128xf32>
    %171 = vector.broadcast %168 : vector<1x128xf32> to vector<8x128xf32>
    %172 = arith.addf %170, %171 : vector<8x128xf32>
    %cst_130 = arith.constant 0.000000e+00 : f32
    %173 = vector.broadcast %cst_130 : f32 to vector<8x128xf32>
    %174 = arith.maximumf %172, %173 : vector<8x128xf32>
    %c0_131 = arith.constant 0 : index
    %c0_132 = arith.constant 0 : index
    %175 = vector.load %arg47[%c0_131, %c0_132] : memref<128x128xbf16, #tpu.memory_space<vmem>>, vector<128x128xbf16>
    %c0_133 = arith.constant 0 : index
    %c0_134 = arith.constant 0 : index
    %176 = vector.load %arg48[%c0_133, %c0_134] : memref<1x128xf32, #tpu.memory_space<vmem>>, vector<1x128xf32>
    %177 = arith.truncf %174 : vector<8x128xf32> to vector<8x128xbf16>
    %cst_135 = arith.constant dense<0.000000e+00> : vector<8x128xf32>
    %178 = tpu.matmul %177, %175, %cst_135 {dimension_numbers = #tpu.dot_dimension_numbers<[1], [0], [0], [1], [0, 0, 1, 1], [], []>} : vector<8x128xbf16>, vector<128x128xbf16>, vector<8x128xf32> -> vector<8x128xf32>
    %179 = vector.broadcast %176 : vector<1x128xf32> to vector<8x128xf32>
    %180 = arith.addf %178, %179 : vector<8x128xf32>
    %cst_136 = arith.constant 0.000000e+00 : f32
    %181 = vector.broadcast %cst_136 : f32 to vector<8x128xf32>
    %182 = arith.maximumf %180, %181 : vector<8x128xf32>
    %c0_137 = arith.constant 0 : index
    %c0_138 = arith.constant 0 : index
    %183 = vector.load %arg49[%c0_137, %c0_138] : memref<128x128xbf16, #tpu.memory_space<vmem>>, vector<128x128xbf16>
    %c0_139 = arith.constant 0 : index
    %c0_140 = arith.constant 0 : index
    %184 = vector.load %arg50[%c0_139, %c0_140] : memref<1x128xf32, #tpu.memory_space<vmem>>, vector<1x128xf32>
    %185 = arith.truncf %182 : vector<8x128xf32> to vector<8x128xbf16>
    %cst_141 = arith.constant dense<0.000000e+00> : vector<8x128xf32>
    %186 = tpu.matmul %185, %183, %cst_141 {dimension_numbers = #tpu.dot_dimension_numbers<[1], [0], [0], [1], [0, 0, 1, 1], [], []>} : vector<8x128xbf16>, vector<128x128xbf16>, vector<8x128xf32> -> vector<8x128xf32>
    %187 = vector.broadcast %184 : vector<1x128xf32> to vector<8x128xf32>
    %188 = arith.addf %186, %187 : vector<8x128xf32>
    %189 = arith.addf %48, %188 : vector<8x128xf32>
    %c0_142 = arith.constant 0 : index
    %c0_143 = arith.constant 0 : index
    %190 = vector.load %arg51[%c0_142, %c0_143] : memref<1x128xf32, #tpu.memory_space<vmem>>, vector<1x128xf32>
    %191 = vector.broadcast %190 : vector<1x128xf32> to vector<8x128xf32>
    %192 = arith.mulf %191, %142 : vector<8x128xf32>
    %c0_144 = arith.constant 0 : index
    %c0_145 = arith.constant 0 : index
    %193 = vector.load %arg52[%c0_144, %c0_145] : memref<1x128xf32, #tpu.memory_space<vmem>>, vector<1x128xf32>
    %194 = vector.broadcast %193 : vector<1x128xf32> to vector<8x128xf32>
    %195 = arith.mulf %194, %189 : vector<8x128xf32>
    %c0_146 = arith.constant 0 : index
    %c0_147 = arith.constant 0 : index
    %196 = vector.load %arg53[%c0_146, %c0_147] : memref<8x128xf32, #tpu.memory_space<vmem>>, vector<8x128xf32>
    tpu.vector_store %arg53[%c0_146, %c0_147], %192 {strides = array<i32>} : memref<8x128xf32, #tpu.memory_space<vmem>>, vector<8x128xf32>,
    %c0_148 = arith.constant 0 : index
    %c0_149 = arith.constant 0 : index
    %197 = vector.load %arg54[%c0_148, %c0_149] : memref<8x128xf32, #tpu.memory_space<vmem>>, vector<8x128xf32>
    tpu.vector_store %arg54[%c0_148, %c0_149], %195 {strides = array<i32>} : memref<8x128xf32, #tpu.memory_space<vmem>>, vector<8x128xf32>,
    return
  }
  func.func @transform_0(%arg0: i32) -> (i32, i32) {
    %c0_i32 = arith.constant 0 : i32
    %c0_i32_0 = arith.constant 0 : i32
    return %arg0, %c0_i32 : i32, i32
  }
  func.func @transform_1(%arg0: i32) -> (i32, i32) {
    %c0_i32 = arith.constant 0 : i32
    %c0_i32_0 = arith.constant 0 : i32
    return %arg0, %c0_i32 : i32, i32
  }
  func.func @transform_2(%arg0: i32) -> (i32, i32) {
    %c0_i32 = arith.constant 0 : i32
    %c0_i32_0 = arith.constant 0 : i32
    %c0_i32_1 = arith.constant 0 : i32
    return %c0_i32, %c0_i32_0 : i32, i32
  }
  func.func @transform_3(%arg0: i32) -> (i32, i32) {
    %c0_i32 = arith.constant 0 : i32
    %c0_i32_0 = arith.constant 0 : i32
    %c0_i32_1 = arith.constant 0 : i32
    return %c0_i32, %c0_i32_0 : i32, i32
  }
  func.func @transform_4(%arg0: i32) -> (i32, i32) {
    %c0_i32 = arith.constant 0 : i32
    %c0_i32_0 = arith.constant 0 : i32
    %c0_i32_1 = arith.constant 0 : i32
    return %c0_i32, %c0_i32_0 : i32, i32
  }
  func.func @transform_5(%arg0: i32) -> (i32, i32) {
    %c0_i32 = arith.constant 0 : i32
    %c0_i32_0 = arith.constant 0 : i32
    %c0_i32_1 = arith.constant 0 : i32
    return %c0_i32, %c0_i32_0 : i32, i32
  }
  func.func @transform_6(%arg0: i32) -> (i32, i32) {
    %c0_i32 = arith.constant 0 : i32
    %c0_i32_0 = arith.constant 0 : i32
    %c0_i32_1 = arith.constant 0 : i32
    return %c0_i32, %c0_i32_0 : i32, i32
  }
  func.func @transform_7(%arg0: i32) -> (i32, i32) {
    %c0_i32 = arith.constant 0 : i32
    %c0_i32_0 = arith.constant 0 : i32
    %c0_i32_1 = arith.constant 0 : i32
    return %c0_i32, %c0_i32_0 : i32, i32
  }
  func.func @transform_8(%arg0: i32) -> (i32, i32) {
    %c0_i32 = arith.constant 0 : i32
    %c0_i32_0 = arith.constant 0 : i32
    %c0_i32_1 = arith.constant 0 : i32
    return %c0_i32, %c0_i32_0 : i32, i32
  }
  func.func @transform_9(%arg0: i32) -> (i32, i32) {
    %c0_i32 = arith.constant 0 : i32
    %c0_i32_0 = arith.constant 0 : i32
    %c0_i32_1 = arith.constant 0 : i32
    return %c0_i32, %c0_i32_0 : i32, i32
  }
  func.func @transform_10(%arg0: i32) -> (i32, i32) {
    %c0_i32 = arith.constant 0 : i32
    %c0_i32_0 = arith.constant 0 : i32
    %c0_i32_1 = arith.constant 0 : i32
    return %c0_i32, %c0_i32_0 : i32, i32
  }
  func.func @transform_11(%arg0: i32) -> (i32, i32) {
    %c0_i32 = arith.constant 0 : i32
    %c0_i32_0 = arith.constant 0 : i32
    %c0_i32_1 = arith.constant 0 : i32
    return %c0_i32, %c0_i32_0 : i32, i32
  }
  func.func @transform_12(%arg0: i32) -> (i32, i32) {
    %c0_i32 = arith.constant 0 : i32
    %c0_i32_0 = arith.constant 0 : i32
    %c0_i32_1 = arith.constant 0 : i32
    return %c0_i32, %c0_i32_0 : i32, i32
  }
  func.func @transform_13(%arg0: i32) -> (i32, i32) {
    %c0_i32 = arith.constant 0 : i32
    %c0_i32_0 = arith.constant 0 : i32
    %c0_i32_1 = arith.constant 0 : i32
    return %c0_i32, %c0_i32_0 : i32, i32
  }
  func.func @transform_14(%arg0: i32) -> (i32, i32) {
    %c0_i32 = arith.constant 0 : i32
    %c0_i32_0 = arith.constant 0 : i32
    %c0_i32_1 = arith.constant 0 : i32
    return %c0_i32, %c0_i32_0 : i32, i32
  }
  func.func @transform_15(%arg0: i32) -> (i32, i32) {
    %c0_i32 = arith.constant 0 : i32
    %c0_i32_0 = arith.constant 0 : i32
    %c0_i32_1 = arith.constant 0 : i32
    return %c0_i32, %c0_i32_0 : i32, i32
  }
  func.func @transform_16(%arg0: i32) -> (i32, i32) {
    %c0_i32 = arith.constant 0 : i32
    %c0_i32_0 = arith.constant 0 : i32
    %c0_i32_1 = arith.constant 0 : i32
    return %c0_i32, %c0_i32_0 : i32, i32
  }
  func.func @transform_17(%arg0: i32) -> (i32, i32) {
    %c0_i32 = arith.constant 0 : i32
    %c0_i32_0 = arith.constant 0 : i32
    %c0_i32_1 = arith.constant 0 : i32
    return %c0_i32, %c0_i32_0 : i32, i32
  }
  func.func @transform_18(%arg0: i32) -> (i32, i32) {
    %c0_i32 = arith.constant 0 : i32
    %c0_i32_0 = arith.constant 0 : i32
    %c0_i32_1 = arith.constant 0 : i32
    return %c0_i32, %c0_i32_0 : i32, i32
  }
  func.func @transform_19(%arg0: i32) -> (i32, i32) {
    %c0_i32 = arith.constant 0 : i32
    %c0_i32_0 = arith.constant 0 : i32
    %c0_i32_1 = arith.constant 0 : i32
    return %c0_i32, %c0_i32_0 : i32, i32
  }
  func.func @transform_20(%arg0: i32) -> (i32, i32) {
    %c0_i32 = arith.constant 0 : i32
    %c0_i32_0 = arith.constant 0 : i32
    %c0_i32_1 = arith.constant 0 : i32
    return %c0_i32, %c0_i32_0 : i32, i32
  }
  func.func @transform_21(%arg0: i32) -> (i32, i32) {
    %c0_i32 = arith.constant 0 : i32
    %c0_i32_0 = arith.constant 0 : i32
    %c0_i32_1 = arith.constant 0 : i32
    return %c0_i32, %c0_i32_0 : i32, i32
  }
  func.func @transform_22(%arg0: i32) -> (i32, i32) {
    %c0_i32 = arith.constant 0 : i32
    %c0_i32_0 = arith.constant 0 : i32
    %c0_i32_1 = arith.constant 0 : i32
    return %c0_i32, %c0_i32_0 : i32, i32
  }
  func.func @transform_23(%arg0: i32) -> (i32, i32) {
    %c0_i32 = arith.constant 0 : i32
    %c0_i32_0 = arith.constant 0 : i32
    %c0_i32_1 = arith.constant 0 : i32
    return %c0_i32, %c0_i32_0 : i32, i32
  }
  func.func @transform_24(%arg0: i32) -> (i32, i32) {
    %c0_i32 = arith.constant 0 : i32
    %c0_i32_0 = arith.constant 0 : i32
    %c0_i32_1 = arith.constant 0 : i32
    return %c0_i32, %c0_i32_0 : i32, i32
  }
  func.func @transform_25(%arg0: i32) -> (i32, i32) {
    %c0_i32 = arith.constant 0 : i32
    %c0_i32_0 = arith.constant 0 : i32
    %c0_i32_1 = arith.constant 0 : i32
    return %c0_i32, %c0_i32_0 : i32, i32
  }
  func.func @transform_26(%arg0: i32) -> (i32, i32) {
    %c0_i32 = arith.constant 0 : i32
    %c0_i32_0 = arith.constant 0 : i32
    %c0_i32_1 = arith.constant 0 : i32
    return %c0_i32, %c0_i32_0 : i32, i32
  }
  func.func @transform_27(%arg0: i32) -> (i32, i32) {
    %c0_i32 = arith.constant 0 : i32
    %c0_i32_0 = arith.constant 0 : i32
    %c0_i32_1 = arith.constant 0 : i32
    return %c0_i32, %c0_i32_0 : i32, i32
  }
  func.func @transform_28(%arg0: i32) -> (i32, i32) {
    %c0_i32 = arith.constant 0 : i32
    %c0_i32_0 = arith.constant 0 : i32
    %c0_i32_1 = arith.constant 0 : i32
    return %c0_i32, %c0_i32_0 : i32, i32
  }
  func.func @transform_29(%arg0: i32) -> (i32, i32) {
    %c0_i32 = arith.constant 0 : i32
    %c0_i32_0 = arith.constant 0 : i32
    %c0_i32_1 = arith.constant 0 : i32
    return %c0_i32, %c0_i32_0 : i32, i32
  }
  func.func @transform_30(%arg0: i32) -> (i32, i32) {
    %c0_i32 = arith.constant 0 : i32
    %c0_i32_0 = arith.constant 0 : i32
    %c0_i32_1 = arith.constant 0 : i32
    return %c0_i32, %c0_i32_0 : i32, i32
  }
  func.func @transform_31(%arg0: i32) -> (i32, i32) {
    %c0_i32 = arith.constant 0 : i32
    %c0_i32_0 = arith.constant 0 : i32
    %c0_i32_1 = arith.constant 0 : i32
    return %c0_i32, %c0_i32_0 : i32, i32
  }
  func.func @transform_32(%arg0: i32) -> (i32, i32) {
    %c0_i32 = arith.constant 0 : i32
    %c0_i32_0 = arith.constant 0 : i32
    %c0_i32_1 = arith.constant 0 : i32
    return %c0_i32, %c0_i32_0 : i32, i32
  }
  func.func @transform_33(%arg0: i32) -> (i32, i32) {
    %c0_i32 = arith.constant 0 : i32
    %c0_i32_0 = arith.constant 0 : i32
    %c0_i32_1 = arith.constant 0 : i32
    return %c0_i32, %c0_i32_0 : i32, i32
  }
  func.func @transform_34(%arg0: i32) -> (i32, i32) {
    %c0_i32 = arith.constant 0 : i32
    %c0_i32_0 = arith.constant 0 : i32
    %c0_i32_1 = arith.constant 0 : i32
    return %c0_i32, %c0_i32_0 : i32, i32
  }
  func.func @transform_35(%arg0: i32) -> (i32, i32) {
    %c0_i32 = arith.constant 0 : i32
    %c0_i32_0 = arith.constant 0 : i32
    %c0_i32_1 = arith.constant 0 : i32
    return %c0_i32, %c0_i32_0 : i32, i32
  }
  func.func @transform_36(%arg0: i32) -> (i32, i32) {
    %c0_i32 = arith.constant 0 : i32
    %c0_i32_0 = arith.constant 0 : i32
    %c0_i32_1 = arith.constant 0 : i32
    return %c0_i32, %c0_i32_0 : i32, i32
  }
  func.func @transform_37(%arg0: i32) -> (i32, i32) {
    %c0_i32 = arith.constant 0 : i32
    %c0_i32_0 = arith.constant 0 : i32
    %c0_i32_1 = arith.constant 0 : i32
    return %c0_i32, %c0_i32_0 : i32, i32
  }
  func.func @transform_38(%arg0: i32) -> (i32, i32) {
    %c0_i32 = arith.constant 0 : i32
    %c0_i32_0 = arith.constant 0 : i32
    %c0_i32_1 = arith.constant 0 : i32
    return %c0_i32, %c0_i32_0 : i32, i32
  }
  func.func @transform_39(%arg0: i32) -> (i32, i32) {
    %c0_i32 = arith.constant 0 : i32
    %c0_i32_0 = arith.constant 0 : i32
    %c0_i32_1 = arith.constant 0 : i32
    return %c0_i32, %c0_i32_0 : i32, i32
  }
  func.func @transform_40(%arg0: i32) -> (i32, i32) {
    %c0_i32 = arith.constant 0 : i32
    %c0_i32_0 = arith.constant 0 : i32
    %c0_i32_1 = arith.constant 0 : i32
    return %c0_i32, %c0_i32_0 : i32, i32
  }
  func.func @transform_41(%arg0: i32) -> (i32, i32) {
    %c0_i32 = arith.constant 0 : i32
    %c0_i32_0 = arith.constant 0 : i32
    %c0_i32_1 = arith.constant 0 : i32
    return %c0_i32, %c0_i32_0 : i32, i32
  }
  func.func @transform_42(%arg0: i32) -> (i32, i32) {
    %c0_i32 = arith.constant 0 : i32
    %c0_i32_0 = arith.constant 0 : i32
    %c0_i32_1 = arith.constant 0 : i32
    return %c0_i32, %c0_i32_0 : i32, i32
  }
  func.func @transform_43(%arg0: i32) -> (i32, i32) {
    %c0_i32 = arith.constant 0 : i32
    %c0_i32_0 = arith.constant 0 : i32
    %c0_i32_1 = arith.constant 0 : i32
    return %c0_i32, %c0_i32_0 : i32, i32
  }
  func.func @transform_44(%arg0: i32) -> (i32, i32) {
    %c0_i32 = arith.constant 0 : i32
    %c0_i32_0 = arith.constant 0 : i32
    %c0_i32_1 = arith.constant 0 : i32
    return %c0_i32, %c0_i32_0 : i32, i32
  }
  func.func @transform_45(%arg0: i32) -> (i32, i32) {
    %c0_i32 = arith.constant 0 : i32
    %c0_i32_0 = arith.constant 0 : i32
    %c0_i32_1 = arith.constant 0 : i32
    return %c0_i32, %c0_i32_0 : i32, i32
  }
  func.func @transform_46(%arg0: i32) -> (i32, i32) {
    %c0_i32 = arith.constant 0 : i32
    %c0_i32_0 = arith.constant 0 : i32
    %c0_i32_1 = arith.constant 0 : i32
    return %c0_i32, %c0_i32_0 : i32, i32
  }
  func.func @transform_47(%arg0: i32) -> (i32, i32) {
    %c0_i32 = arith.constant 0 : i32
    %c0_i32_0 = arith.constant 0 : i32
    %c0_i32_1 = arith.constant 0 : i32
    return %c0_i32, %c0_i32_0 : i32, i32
  }
  func.func @transform_48(%arg0: i32) -> (i32, i32) {
    %c0_i32 = arith.constant 0 : i32
    %c0_i32_0 = arith.constant 0 : i32
    %c0_i32_1 = arith.constant 0 : i32
    return %c0_i32, %c0_i32_0 : i32, i32
  }
  func.func @transform_49(%arg0: i32) -> (i32, i32) {
    %c0_i32 = arith.constant 0 : i32
    %c0_i32_0 = arith.constant 0 : i32
    %c0_i32_1 = arith.constant 0 : i32
    return %c0_i32, %c0_i32_0 : i32, i32
  }
  func.func @transform_50(%arg0: i32) -> (i32, i32) {
    %c0_i32 = arith.constant 0 : i32
    %c0_i32_0 = arith.constant 0 : i32
    %c0_i32_1 = arith.constant 0 : i32
    return %c0_i32, %c0_i32_0 : i32, i32
  }
  func.func @transform_51(%arg0: i32) -> (i32, i32) {
    %c0_i32 = arith.constant 0 : i32
    %c0_i32_0 = arith.constant 0 : i32
    %c0_i32_1 = arith.constant 0 : i32
    return %c0_i32, %c0_i32_0 : i32, i32
  }
  func.func @transform_52(%arg0: i32) -> (i32, i32) {
    %c0_i32 = arith.constant 0 : i32
    %c0_i32_0 = arith.constant 0 : i32
    return %arg0, %c0_i32 : i32, i32
  }
  func.func @transform_53(%arg0: i32) -> (i32, i32) {
    %c0_i32 = arith.constant 0 : i32
    %c0_i32_0 = arith.constant 0 : i32
    return %arg0, %c0_i32 : i32, i32
  }
}

</mosaic_0001>

<llo_original>
// kernel: nice_forward.1
$region0: #{nice_forward.1}
  #allocation0 [shape = 'u32[]', space=smem, size = 0x4, offset = 0x4, fixed_abs, tag = 'smem constant byte address 0x4 - core index']
  #allocation1 [shape = 'u32[144,128]{1,0:T(1,128)}', space=vmem, size = 0x12000, scoped, tag = 'internal scratch']
  %s0 = inlined_call_operand.smem [shape: u32[54], index: -1, kind: input, shape index: {}]
  %s1 = sld [smem:[%s0]]
  %s2 = scalar_lea.smem %s0, 1
  %s3 = sld [smem:[%s2]]
  %s4 = scalar_lea.smem %s0, 2
  %s5 = sld [smem:[%s4]]
  %s6 = scalar_lea.smem %s0, 3
  %s7 = sld [smem:[%s6]]
  %s8 = scalar_lea.smem %s0, 4
  %s9 = sld [smem:[%s8]]
  %s10 = scalar_lea.smem %s0, 5
  %s11 = sld [smem:[%s10]]
  %s12 = scalar_lea.smem %s0, 6
  %s13 = sld [smem:[%s12]]
  %s14 = scalar_lea.smem %s0, 7
  %s15 = sld [smem:[%s14]]
  %s16 = scalar_lea.smem %s0, 8
  %s17 = sld [smem:[%s16]]
  %s18 = scalar_lea.smem %s0, 9
  %s19 = sld [smem:[%s18]]
  %s20 = scalar_lea.smem %s0, 10
  %s21 = sld [smem:[%s20]]
  %s22 = scalar_lea.smem %s0, 11
  %s23 = sld [smem:[%s22]]
  %s24 = scalar_lea.smem %s0, 12
  %s25 = sld [smem:[%s24]]
  %s26 = scalar_lea.smem %s0, 13
  %s27 = sld [smem:[%s26]]
  %s28 = scalar_lea.smem %s0, 14
  %s29 = sld [smem:[%s28]]
  %s30 = scalar_lea.smem %s0, 15
  %s31 = sld [smem:[%s30]]
  %s32 = scalar_lea.smem %s0, 16
  %s33 = sld [smem:[%s32]]
  %s34 = scalar_lea.smem %s0, 17
  %s35 = sld [smem:[%s34]]
  %s36 = scalar_lea.smem %s0, 18
  %s37 = sld [smem:[%s36]]
  %s38 = scalar_lea.smem %s0, 19
  %s39 = sld [smem:[%s38]]
  %s40 = scalar_lea.smem %s0, 20
  %s41 = sld [smem:[%s40]]
  %s42 = scalar_lea.smem %s0, 21
  %s43 = sld [smem:[%s42]]
  %s44 = scalar_lea.smem %s0, 22
  %s45 = sld [smem:[%s44]]
  %s46 = scalar_lea.smem %s0, 23
  %s47 = sld [smem:[%s46]]
  %s48 = scalar_lea.smem %s0, 24
  %s49 = sld [smem:[%s48]]
  %s50 = scalar_lea.smem %s0, 25
  %s51 = sld [smem:[%s50]]
  %s52 = scalar_lea.smem %s0, 26
  %s53 = sld [smem:[%s52]]
  %s54 = scalar_lea.smem %s0, 27
  %s55 = sld [smem:[%s54]]
  %s56 = scalar_lea.smem %s0, 28
  %s57 = sld [smem:[%s56]]
  %s58 = scalar_lea.smem %s0, 29
  %s59 = sld [smem:[%s58]]
  %s60 = scalar_lea.smem %s0, 30
  %s61 = sld [smem:[%s60]]
  %s62 = scalar_lea.smem %s0, 31
  %s63 = sld [smem:[%s62]]
  %s64 = scalar_lea.smem %s0, 32
  %s65 = sld [smem:[%s64]]
  %s66 = scalar_lea.smem %s0, 33
  %s67 = sld [smem:[%s66]]
  %s68 = scalar_lea.smem %s0, 34
  %s69 = sld [smem:[%s68]]
  %s70 = scalar_lea.smem %s0, 35
  %s71 = sld [smem:[%s70]]
  %s72 = scalar_lea.smem %s0, 36
  %s73 = sld [smem:[%s72]]
  %s74 = scalar_lea.smem %s0, 37
  %s75 = sld [smem:[%s74]]
  %s76 = scalar_lea.smem %s0, 38
  %s77 = sld [smem:[%s76]]
  %s78 = scalar_lea.smem %s0, 39
  %s79 = sld [smem:[%s78]]
  %s80 = scalar_lea.smem %s0, 40
  %s81 = sld [smem:[%s80]]
  %s82 = scalar_lea.smem %s0, 41
  %s83 = sld [smem:[%s82]]
  %s84 = scalar_lea.smem %s0, 42
  %s85 = sld [smem:[%s84]]
  %s86 = scalar_lea.smem %s0, 43
  %s87 = sld [smem:[%s86]]
  %s88 = scalar_lea.smem %s0, 44
  %s89 = sld [smem:[%s88]]
  %s90 = scalar_lea.smem %s0, 45
  %s91 = sld [smem:[%s90]]
  %s92 = scalar_lea.smem %s0, 46
  %s93 = sld [smem:[%s92]]
  %s94 = scalar_lea.smem %s0, 47
  %s95 = sld [smem:[%s94]]
  %s96 = scalar_lea.smem %s0, 48
  %s97 = sld [smem:[%s96]]
  %s98 = scalar_lea.smem %s0, 49
  %s99 = sld [smem:[%s98]]
  %s100 = scalar_lea.smem %s0, 50
  %s101 = sld [smem:[%s100]]
  %s102 = scalar_lea.smem %s0, 51
  %s103 = sld [smem:[%s102]]
  %s104 = scalar_lea.smem %s0, 52
  %s105 = sld [smem:[%s104]]
  %s106 = scalar_lea.smem %s0, 53
  %s107 = sld [smem:[%s106]]
  %108 = xla_tuple %s105, %s107
  %s109 = sld [smem:[#allocation0]]
  $region370: #{nice_forward.1} parent=0
    _
  %s111 = ssub.s32 1, %s109
  %s112 = scalar_select 0, %s111, %s109
  $region1: #{nice_forward.1} parent=0
    #allocation2 [shape = 'u8[32768]{0}', space=vmem, size = 0x8000, scoped, tag = 'input window, operand 6, single buffered']
    #allocation3 [shape = 's32[1]{0}', space=sflag, size = 0x4, scoped, tag = 'scoped memory for nice_forward.1']
    #allocation4 [shape = 'u8[32768]{0}', space=vmem, size = 0x8000, scoped, tag = 'input window, operand 8, single buffered']
    #allocation5 [shape = 's32[1]{0}', space=sflag, size = 0x4, scoped, tag = 'scoped memory for nice_forward.1']
    #allocation6 [shape = 'u8[32768]{0}', space=vmem, size = 0x8000, scoped, tag = 'input window, operand 10, single buffered']
    #allocation7 [shape = 'u8[32768]{0}', space=vmem, size = 0x8000, scoped, tag = 'input window, operand 12, single buffered']
    #allocation8 [shape = 's32[1]{0}', space=sflag, size = 0x4, scoped, tag = 'scoped memory for nice_forward.1']
    #allocation9 [shape = 'u8[32768]{0}', space=vmem, size = 0x8000, scoped, tag = 'input window, operand 14, single buffered']
    #allocation10 [shape = 'u8[32768]{0}', space=vmem, size = 0x8000, scoped, tag = 'input window, operand 16, single buffered']
    #allocation11 [shape = 's32[1]{0}', space=sflag, size = 0x4, scoped, tag = 'scoped memory for nice_forward.1']
    #allocation12 [shape = 'u8[32768]{0}', space=vmem, size = 0x8000, scoped, tag = 'input window, operand 18, single buffered']
    #allocation13 [shape = 'u8[32768]{0}', space=vmem, size = 0x8000, scoped, tag = 'input window, operand 20, single buffered']
    #allocation14 [shape = 's32[1]{0}', space=sflag, size = 0x4, scoped, tag = 'scoped memory for nice_forward.1']
    #allocation15 [shape = 'u8[32768]{0}', space=vmem, size = 0x8000, scoped, tag = 'input window, operand 22, single buffered']
    #allocation16 [shape = 'u8[32768]{0}', space=vmem, size = 0x8000, scoped, tag = 'input window, operand 24, single buffered']
    #allocation17 [shape = 's32[1]{0}', space=sflag, size = 0x4, scoped, tag = 'scoped memory for nice_forward.1']
    #allocation18 [shape = 'u8[32768]{0}', space=vmem, size = 0x8000, scoped, tag = 'input window, operand 26, single buffered']
    #allocation19 [shape = 'u8[512]{0}', space=vmem, size = 0x400, scoped, tag = 'input window, operand 27, single buffered']
    #allocation20 [shape = 's32[1]{0}', space=sflag, size = 0x4, scoped, tag = 'scoped memory for nice_forward.1']
    #allocation21 [shape = 'u8[32768]{0}', space=vmem, size = 0x8000, scoped, tag = 'input window, operand 28, single buffered']
    #allocation22 [shape = 'u8[512]{0}', space=vmem, size = 0x400, scoped, tag = 'input window, operand 29, single buffered']
    #allocation23 [shape = 's32[1]{0}', space=sflag, size = 0x4, scoped, tag = 'scoped memory for nice_forward.1']
    #allocation24 [shape = 'u8[32768]{0}', space=vmem, size = 0x8000, scoped, tag = 'input window, operand 30, single buffered']
    #allocation25 [shape = 'u8[512]{0}', space=vmem, size = 0x400, scoped, tag = 'input window, operand 31, single buffered']
    #allocation26 [shape = 's32[1]{0}', space=sflag, size = 0x4, scoped, tag = 'scoped memory for nice_forward.1']
    #allocation27 [shape = 'u8[32768]{0}', space=vmem, size = 0x8000, scoped, tag = 'input window, operand 32, single buffered']
    #allocation28 [shape = 'u8[512]{0}', space=vmem, size = 0x400, scoped, tag = 'input window, operand 33, single buffered']
    #allocation29 [shape = 's32[1]{0}', space=sflag, size = 0x4, scoped, tag = 'scoped memory for nice_forward.1']
    #allocation30 [shape = 'u8[32768]{0}', space=vmem, size = 0x8000, scoped, tag = 'input window, operand 34, single buffered']
    #allocation31 [shape = 'u8[512]{0}', space=vmem, size = 0x400, scoped, tag = 'input window, operand 35, single buffered']
    #allocation32 [shape = 's32[1]{0}', space=sflag, size = 0x4, scoped, tag = 'scoped memory for nice_forward.1']
    #allocation33 [shape = 'u8[32768]{0}', space=vmem, size = 0x8000, scoped, tag = 'input window, operand 36, single buffered']
    #allocation34 [shape = 'u8[512]{0}', space=vmem, size = 0x400, scoped, tag = 'input window, operand 37, single buffered']
    #allocation35 [shape = 's32[1]{0}', space=sflag, size = 0x4, scoped, tag = 'scoped memory for nice_forward.1']
    #allocation36 [shape = 'u8[32768]{0}', space=vmem, size = 0x8000, scoped, tag = 'input window, operand 38, single buffered']
    #allocation37 [shape = 'u8[512]{0}', space=vmem, size = 0x400, scoped, tag = 'input window, operand 39, single buffered']
    #allocation38 [shape = 's32[1]{0}', space=sflag, size = 0x4, scoped, tag = 'scoped memory for nice_forward.1']
    #allocation39 [shape = 'u8[32768]{0}', space=vmem, size = 0x8000, scoped, tag = 'input window, operand 40, single buffered']
    #allocation40 [shape = 'u8[512]{0}', space=vmem, size = 0x400, scoped, tag = 'input window, operand 41, single buffered']
    #allocation41 [shape = 's32[1]{0}', space=sflag, size = 0x4, scoped, tag = 'scoped memory for nice_forward.1']
    #allocation42 [shape = 'u8[32768]{0}', space=vmem, size = 0x8000, scoped, tag = 'input window, operand 42, single buffered']
    #allocation43 [shape = 'u8[512]{0}', space=vmem, size = 0x400, scoped, tag = 'input window, operand 43, single buffered']
    #allocation44 [shape = 's32[1]{0}', space=sflag, size = 0x4, scoped, tag = 'scoped memory for nice_forward.1']
    #allocation45 [shape = 'u8[32768]{0}', space=vmem, size = 0x8000, scoped, tag = 'input window, operand 44, single buffered']
    #allocation46 [shape = 'u8[512]{0}', space=vmem, size = 0x400, scoped, tag = 'input window, operand 45, single buffered']
    #allocation47 [shape = 's32[1]{0}', space=sflag, size = 0x4, scoped, tag = 'scoped memory for nice_forward.1']
    #allocation48 [shape = 'u8[32768]{0}', space=vmem, size = 0x8000, scoped, tag = 'input window, operand 46, single buffered']
    #allocation49 [shape = 'u8[512]{0}', space=vmem, size = 0x400, scoped, tag = 'input window, operand 47, single buffered']
    #allocation50 [shape = 's32[1]{0}', space=sflag, size = 0x4, scoped, tag = 'scoped memory for nice_forward.1']
    #allocation51 [shape = 'u8[32768]{0}', space=vmem, size = 0x8000, scoped, tag = 'input window, operand 48, single buffered']
    #allocation52 [shape = 'u8[512]{0}', space=vmem, size = 0x400, scoped, tag = 'input window, operand 49, single buffered']
    #allocation53 [shape = 's32[1]{0}', space=sflag, size = 0x4, scoped, tag = 'scoped memory for nice_forward.1']
    #allocation54 [shape = 'u8[512]{0}', space=vmem, size = 0x400, scoped, tag = 'input window, operand 50, single buffered']
    #allocation55 [shape = 'u8[512]{0}', space=vmem, size = 0x400, scoped, tag = 'input window, operand 51, single buffered']
    #allocation56 [shape = 's32[1]{0}', space=sflag, size = 0x4, scoped, tag = 'scoped memory for nice_forward.1']
    %113 = vsyncpa [#allocation3], 0
    %114 = vsyncpa [#allocation5], 0
    %115 = vsyncpa [#allocation8], 0
    %116 = vsyncpa [#allocation11], 0
    %117 = vsyncpa [#allocation14], 0
    %118 = vsyncpa [#allocation17], 0
    %119 = vsyncpa [#allocation20], 0
    %120 = vsyncpa [#allocation23], 0
    %121 = vsyncpa [#allocation26], 0
    %122 = vsyncpa [#allocation29], 0
    %123 = vsyncpa [#allocation32], 0
    %124 = vsyncpa [#allocation35], 0
    %125 = vsyncpa [#allocation38], 0
    %126 = vsyncpa [#allocation41], 0
    %127 = vsyncpa [#allocation44], 0
    %128 = vsyncpa [#allocation47], 0
    %129 = vsyncpa [#allocation50], 0
    %130 = vsyncpa [#allocation53], 0
    %131 = vsyncpa [#allocation56], 0
    // Predicated region
    $region2: #{nice_forward.1} parent=1 // pred_check
      _
    $region3: #{nice_forward.1} parent=1 // pred_check_branch
      %133 = sbr.rel (0) target = $region5
    $region4: #{nice_forward.1} parent=1 // pred_region
      _
    $region5: #{nice_forward.1} parent=1 // pred_fallthru
      _
    // Predicated region
    $region6: #{nice_forward.1} parent=1 // pred_check
      _
    $region7: #{nice_forward.1} parent=1 // pred_check_branch
      %135 = sbr.rel (0) target = $region9
    $region8: #{nice_forward.1} parent=1 // pred_region
      _
    $region9: #{nice_forward.1} parent=1 // pred_fallthru
      _
    // Predicated region
    $region10: #{nice_forward.1} parent=1 // pred_check
      _
    $region11: #{nice_forward.1} parent=1 // pred_check_branch
      %137 = sbr.rel (0) target = $region13
    $region12: #{nice_forward.1} parent=1 // pred_region
      _
    $region13: #{nice_forward.1} parent=1 // pred_fallthru
      _
    // Predicated region
    $region14: #{nice_forward.1} parent=1 // pred_check
      _
    $region15: #{nice_forward.1} parent=1 // pred_check_branch
      %139 = sbr.rel (0) target = $region17
    $region16: #{nice_forward.1} parent=1 // pred_region
      _
    $region17: #{nice_forward.1} parent=1 // pred_fallthru
      _
    // Predicated region
    $region18: #{nice_forward.1} parent=1 // pred_check
      _
    $region19: #{nice_forward.1} parent=1 // pred_check_branch
      %141 = sbr.rel (0) target = $region21
    $region20: #{nice_forward.1} parent=1 // pred_region
      _
    $region21: #{nice_forward.1} parent=1 // pred_fallthru
      _
    // Predicated region
    $region22: #{nice_forward.1} parent=1 // pred_check
      _
    $region23: #{nice_forward.1} parent=1 // pred_check_branch
      %143 = sbr.rel (0) target = $region25
    $region24: #{nice_forward.1} parent=1 // pred_region
      _
    $region25: #{nice_forward.1} parent=1 // pred_fallthru
      _
    // Predicated region
    $region26: #{nice_forward.1} parent=1 // pred_check
      _
    $region27: #{nice_forward.1} parent=1 // pred_check_branch
      %145 = sbr.rel (0) target = $region29
    $region28: #{nice_forward.1} parent=1 // pred_region
      %s147 = ssub.s32 1024, 1024
      %148 = vsyncadd [#allocation3], %s147
      %s149 = sshll.u32 [#allocation2], 4
      %s150 = int_to_ptr.vmem [resolvable:$true] %s149
      %155 = dma.hbm_to_vmem [thread:$0]  %s13, 1024, %s150, [#allocation3], 64, 64, 4
    $region29: #{nice_forward.1} parent=1 // pred_fallthru
      _
    // Predicated region
    $region30: #{nice_forward.1} parent=1 // pred_check
      _
    $region31: #{nice_forward.1} parent=1 // pred_check_branch
      %157 = sbr.rel (0) target = $region33
    $region32: #{nice_forward.1} parent=1 // pred_region
      _
    $region33: #{nice_forward.1} parent=1 // pred_fallthru
      _
    // Predicated region
    $region34: #{nice_forward.1} parent=1 // pred_check
      _
    $region35: #{nice_forward.1} parent=1 // pred_check_branch
      %159 = sbr.rel (0) target = $region37
    $region36: #{nice_forward.1} parent=1 // pred_region
      %s161 = ssub.s32 1024, 1024
      %162 = vsyncadd [#allocation5], %s161
      %s163 = sshll.u32 [#allocation4], 4
      %s164 = int_to_ptr.vmem [resolvable:$true] %s163
      %169 = dma.hbm_to_vmem [thread:$0]  %s17, 1024, %s164, [#allocation5], 64, 64, 4
    $region37: #{nice_forward.1} parent=1 // pred_fallthru
      _
    // Predicated region
    $region38: #{nice_forward.1} parent=1 // pred_check
      _
    $region39: #{nice_forward.1} parent=1 // pred_check_branch
      %171 = sbr.rel (0) target = $region41
    $region40: #{nice_forward.1} parent=1 // pred_region
      _
    $region41: #{nice_forward.1} parent=1 // pred_fallthru
      _
    // Predicated region
    $region42: #{nice_forward.1} parent=1 // pred_check
      _
    $region43: #{nice_forward.1} parent=1 // pred_check_branch
      %173 = sbr.rel (0) target = $region45
    $region44: #{nice_forward.1} parent=1 // pred_region
      %s175 = ssub.s32 1024, 1024
      %176 = vsyncadd [#allocation5], %s175
      %s177 = sshll.u32 [#allocation6], 4
      %s178 = int_to_ptr.vmem [resolvable:$true] %s177
      %183 = dma.hbm_to_vmem [thread:$0]  %s21, 1024, %s178, [#allocation5], 64, 64, 4
    $region45: #{nice_forward.1} parent=1 // pred_fallthru
      _
    // Predicated region
    $region46: #{nice_forward.1} parent=1 // pred_check
      _
    $region47: #{nice_forward.1} parent=1 // pred_check_branch
      %185 = sbr.rel (0) target = $region49
    $region48: #{nice_forward.1} parent=1 // pred_region
      _
    $region49: #{nice_forward.1} parent=1 // pred_fallthru
      _
    // Predicated region
    $region50: #{nice_forward.1} parent=1 // pred_check
      _
    $region51: #{nice_forward.1} parent=1 // pred_check_branch
      %187 = sbr.rel (0) target = $region53
    $region52: #{nice_forward.1} parent=1 // pred_region
      %s189 = ssub.s32 1024, 1024
      %190 = vsyncadd [#allocation8], %s189
      %s191 = sshll.u32 [#allocation7], 4
      %s192 = int_to_ptr.vmem [resolvable:$true] %s191
      %197 = dma.hbm_to_vmem [thread:$0]  %s25, 1024, %s192, [#allocation8], 64, 64, 4
    $region53: #{nice_forward.1} parent=1 // pred_fallthru
      _
    // Predicated region
    $region54: #{nice_forward.1} parent=1 // pred_check
      _
    $region55: #{nice_forward.1} parent=1 // pred_check_branch
      %199 = sbr.rel (0) target = $region57
    $region56: #{nice_forward.1} parent=1 // pred_region
      _
    $region57: #{nice_forward.1} parent=1 // pred_fallthru
      _
    // Predicated region
    $region58: #{nice_forward.1} parent=1 // pred_check
      _
    $region59: #{nice_forward.1} parent=1 // pred_check_branch
      %201 = sbr.rel (0) target = $region61
    $region60: #{nice_forward.1} parent=1 // pred_region
      %s203 = ssub.s32 1024, 1024
      %204 = vsyncadd [#allocation8], %s203
      %s205 = sshll.u32 [#allocation9], 4
      %s206 = int_to_ptr.vmem [resolvable:$true] %s205
      %211 = dma.hbm_to_vmem [thread:$0]  %s29, 1024, %s206, [#allocation8], 64, 64, 4
    $region61: #{nice_forward.1} parent=1 // pred_fallthru
      _
    // Predicated region
    $region62: #{nice_forward.1} parent=1 // pred_check
      _
    $region63: #{nice_forward.1} parent=1 // pred_check_branch
      %213 = sbr.rel (0) target = $region65
    $region64: #{nice_forward.1} parent=1 // pred_region
      _
    $region65: #{nice_forward.1} parent=1 // pred_fallthru
      _
    // Predicated region
    $region66: #{nice_forward.1} parent=1 // pred_check
      _
    $region67: #{nice_forward.1} parent=1 // pred_check_branch
      %215 = sbr.rel (0) target = $region69
    $region68: #{nice_forward.1} parent=1 // pred_region
      %s217 = ssub.s32 1024, 1024
      %218 = vsyncadd [#allocation11], %s217
      %s219 = sshll.u32 [#allocation10], 4
      %s220 = int_to_ptr.vmem [resolvable:$true] %s219
      %225 = dma.hbm_to_vmem [thread:$0]  %s33, 1024, %s220, [#allocation11], 64, 64, 4
    $region69: #{nice_forward.1} parent=1 // pred_fallthru
      _
    // Predicated region
    $region70: #{nice_forward.1} parent=1 // pred_check
      _
    $region71: #{nice_forward.1} parent=1 // pred_check_branch
      %227 = sbr.rel (0) target = $region73
    $region72: #{nice_forward.1} parent=1 // pred_region
      _
    $region73: #{nice_forward.1} parent=1 // pred_fallthru
      _
    // Predicated region
    $region74: #{nice_forward.1} parent=1 // pred_check
      _
    $region75: #{nice_forward.1} parent=1 // pred_check_branch
      %229 = sbr.rel (0) target = $region77
    $region76: #{nice_forward.1} parent=1 // pred_region
      %s231 = ssub.s32 1024, 1024
      %232 = vsyncadd [#allocation11], %s231
      %s233 = sshll.u32 [#allocation12], 4
      %s234 = int_to_ptr.vmem [resolvable:$true] %s233
      %239 = dma.hbm_to_vmem [thread:$0]  %s37, 1024, %s234, [#allocation11], 64, 64, 4
    $region77: #{nice_forward.1} parent=1 // pred_fallthru
      _
    // Predicated region
    $region78: #{nice_forward.1} parent=1 // pred_check
      _
    $region79: #{nice_forward.1} parent=1 // pred_check_branch
      %241 = sbr.rel (0) target = $region81
    $region80: #{nice_forward.1} parent=1 // pred_region
      _
    $region81: #{nice_forward.1} parent=1 // pred_fallthru
      _
    // Predicated region
    $region82: #{nice_forward.1} parent=1 // pred_check
      _
    $region83: #{nice_forward.1} parent=1 // pred_check_branch
      %243 = sbr.rel (0) target = $region85
    $region84: #{nice_forward.1} parent=1 // pred_region
      %s245 = ssub.s32 1024, 1024
      %246 = vsyncadd [#allocation14], %s245
      %s247 = sshll.u32 [#allocation13], 4
      %s248 = int_to_ptr.vmem [resolvable:$true] %s247
      %253 = dma.hbm_to_vmem [thread:$0]  %s41, 1024, %s248, [#allocation14], 64, 64, 4
    $region85: #{nice_forward.1} parent=1 // pred_fallthru
      _
    // Predicated region
    $region86: #{nice_forward.1} parent=1 // pred_check
      _
    $region87: #{nice_forward.1} parent=1 // pred_check_branch
      %255 = sbr.rel (0) target = $region89
    $region88: #{nice_forward.1} parent=1 // pred_region
      _
    $region89: #{nice_forward.1} parent=1 // pred_fallthru
      _
    // Predicated region
    $region90: #{nice_forward.1} parent=1 // pred_check
      _
    $region91: #{nice_forward.1} parent=1 // pred_check_branch
      %257 = sbr.rel (0) target = $region93
    $region92: #{nice_forward.1} parent=1 // pred_region
      %s259 = ssub.s32 1024, 1024
      %260 = vsyncadd [#allocation14], %s259
      %s261 = sshll.u32 [#allocation15], 4
      %s262 = int_to_ptr.vmem [resolvable:$true] %s261
      %267 = dma.hbm_to_vmem [thread:$0]  %s45, 1024, %s262, [#allocation14], 64, 64, 4
    $region93: #{nice_forward.1} parent=1 // pred_fallthru
      _
    // Predicated region
    $region94: #{nice_forward.1} parent=1 // pred_check
      _
    $region95: #{nice_forward.1} parent=1 // pred_check_branch
      %269 = sbr.rel (0) target = $region97
    $region96: #{nice_forward.1} parent=1 // pred_region
      _
    $region97: #{nice_forward.1} parent=1 // pred_fallthru
      _
    // Predicated region
    $region98: #{nice_forward.1} parent=1 // pred_check
      _
    $region99: #{nice_forward.1} parent=1 // pred_check_branch
      %271 = sbr.rel (0) target = $region101
    $region100: #{nice_forward.1} parent=1 // pred_region
      %s273 = ssub.s32 1024, 1024
      %274 = vsyncadd [#allocation17], %s273
      %s275 = sshll.u32 [#allocation16], 4
      %s276 = int_to_ptr.vmem [resolvable:$true] %s275
      %281 = dma.hbm_to_vmem [thread:$0]  %s49, 1024, %s276, [#allocation17], 64, 64, 4
    $region101: #{nice_forward.1} parent=1 // pred_fallthru
      _
    // Predicated region
    $region102: #{nice_forward.1} parent=1 // pred_check
      _
    $region103: #{nice_forward.1} parent=1 // pred_check_branch
      %283 = sbr.rel (0) target = $region105
    $region104: #{nice_forward.1} parent=1 // pred_region
      _
    $region105: #{nice_forward.1} parent=1 // pred_fallthru
      _
    // Predicated region
    $region106: #{nice_forward.1} parent=1 // pred_check
      _
    $region107: #{nice_forward.1} parent=1 // pred_check_branch
      %285 = sbr.rel (0) target = $region109
    $region108: #{nice_forward.1} parent=1 // pred_region
      %s287 = ssub.s32 1024, 1024
      %288 = vsyncadd [#allocation17], %s287
      %s289 = sshll.u32 [#allocation18], 4
      %s290 = int_to_ptr.vmem [resolvable:$true] %s289
      %295 = dma.hbm_to_vmem [thread:$0]  %s53, 1024, %s290, [#allocation17], 64, 64, 4
    $region109: #{nice_forward.1} parent=1 // pred_fallthru
      _
    // Predicated region
    $region110: #{nice_forward.1} parent=1 // pred_check
      _
    $region111: #{nice_forward.1} parent=1 // pred_check_branch
      %297 = sbr.rel (0) target = $region113
    $region112: #{nice_forward.1} parent=1 // pred_region
      %s299 = ssub.s32 16, 16
      %300 = vsyncadd [#allocation20], %s299
      %s302 = sshll.u32 [#allocation19], 4
      %s303 = int_to_ptr.vmem [resolvable:$true] %s302
      %305 = dma.hbm_to_vmem [thread:$0]  %s55, 16, %s303, [#allocation20]
    $region113: #{nice_forward.1} parent=1 // pred_fallthru
      _
    // Predicated region
    $region114: #{nice_forward.1} parent=1 // pred_check
      _
    $region115: #{nice_forward.1} parent=1 // pred_check_branch
      %307 = sbr.rel (0) target = $region117
    $region116: #{nice_forward.1} parent=1 // pred_region
      %s309 = ssub.s32 1024, 1024
      %310 = vsyncadd [#allocation20], %s309
      %s311 = sshll.u32 [#allocation21], 4
      %s312 = int_to_ptr.vmem [resolvable:$true] %s311
      %317 = dma.hbm_to_vmem [thread:$0]  %s57, 1024, %s312, [#allocation20], 64, 64, 4
    $region117: #{nice_forward.1} parent=1 // pred_fallthru
      _
    // Predicated region
    $region118: #{nice_forward.1} parent=1 // pred_check
      _
    $region119: #{nice_forward.1} parent=1 // pred_check_branch
      %319 = sbr.rel (0) target = $region121
    $region120: #{nice_forward.1} parent=1 // pred_region
      %s321 = ssub.s32 16, 16
      %322 = vsyncadd [#allocation23], %s321
      %s324 = sshll.u32 [#allocation22], 4
      %s325 = int_to_ptr.vmem [resolvable:$true] %s324
      %327 = dma.hbm_to_vmem [thread:$0]  %s59, 16, %s325, [#allocation23]
    $region121: #{nice_forward.1} parent=1 // pred_fallthru
      _
    // Predicated region
    $region122: #{nice_forward.1} parent=1 // pred_check
      _
    $region123: #{nice_forward.1} parent=1 // pred_check_branch
      %329 = sbr.rel (0) target = $region125
    $region124: #{nice_forward.1} parent=1 // pred_region
      %s331 = ssub.s32 1024, 1024
      %332 = vsyncadd [#allocation23], %s331
      %s333 = sshll.u32 [#allocation24], 4
      %s334 = int_to_ptr.vmem [resolvable:$true] %s333
      %339 = dma.hbm_to_vmem [thread:$0]  %s61, 1024, %s334, [#allocation23], 64, 64, 4
    $region125: #{nice_forward.1} parent=1 // pred_fallthru
      _
    // Predicated region
    $region126: #{nice_forward.1} parent=1 // pred_check
      _
    $region127: #{nice_forward.1} parent=1 // pred_check_branch
      %341 = sbr.rel (0) target = $region129
    $region128: #{nice_forward.1} parent=1 // pred_region
      %s343 = ssub.s32 16, 16
      %344 = vsyncadd [#allocation26], %s343
      %s346 = sshll.u32 [#allocation25], 4
      %s347 = int_to_ptr.vmem [resolvable:$true] %s346
      %349 = dma.hbm_to_vmem [thread:$0]  %s63, 16, %s347, [#allocation26]
    $region129: #{nice_forward.1} parent=1 // pred_fallthru
      _
    // Predicated region
    $region130: #{nice_forward.1} parent=1 // pred_check
      _
    $region131: #{nice_forward.1} parent=1 // pred_check_branch
      %351 = sbr.rel (0) target = $region133
    $region132: #{nice_forward.1} parent=1 // pred_region
      %s353 = ssub.s32 1024, 1024
      %354 = vsyncadd [#allocation26], %s353
      %s355 = sshll.u32 [#allocation27], 4
      %s356 = int_to_ptr.vmem [resolvable:$true] %s355
      %361 = dma.hbm_to_vmem [thread:$0]  %s65, 1024, %s356, [#allocation26], 64, 64, 4
    $region133: #{nice_forward.1} parent=1 // pred_fallthru
      _
    // Predicated region
    $region134: #{nice_forward.1} parent=1 // pred_check
      _
    $region135: #{nice_forward.1} parent=1 // pred_check_branch
      %363 = sbr.rel (0) target = $region137
    $region136: #{nice_forward.1} parent=1 // pred_region
      %s365 = ssub.s32 16, 16
      %366 = vsyncadd [#allocation29], %s365
      %s368 = sshll.u32 [#allocation28], 4
      %s369 = int_to_ptr.vmem [resolvable:$true] %s368
      %371 = dma.hbm_to_vmem [thread:$0]  %s67, 16, %s369, [#allocation29]
    $region137: #{nice_forward.1} parent=1 // pred_fallthru
      _
    // Predicated region
    $region138: #{nice_forward.1} parent=1 // pred_check
      _
    $region139: #{nice_forward.1} parent=1 // pred_check_branch
      %373 = sbr.rel (0) target = $region141
    $region140: #{nice_forward.1} parent=1 // pred_region
      %s375 = ssub.s32 1024, 1024
      %376 = vsyncadd [#allocation29], %s375
      %s377 = sshll.u32 [#allocation30], 4
      %s378 = int_to_ptr.vmem [resolvable:$true] %s377
      %383 = dma.hbm_to_vmem [thread:$0]  %s69, 1024, %s378, [#allocation29], 64, 64, 4
    $region141: #{nice_forward.1} parent=1 // pred_fallthru
      _
    // Predicated region
    $region142: #{nice_forward.1} parent=1 // pred_check
      _
    $region143: #{nice_forward.1} parent=1 // pred_check_branch
      %385 = sbr.rel (0) target = $region145
    $region144: #{nice_forward.1} parent=1 // pred_region
      %s387 = ssub.s32 16, 16
      %388 = vsyncadd [#allocation32], %s387
      %s390 = sshll.u32 [#allocation31], 4
      %s391 = int_to_ptr.vmem [resolvable:$true] %s390
      %393 = dma.hbm_to_vmem [thread:$0]  %s71, 16, %s391, [#allocation32]
    $region145: #{nice_forward.1} parent=1 // pred_fallthru
      _
    // Predicated region
    $region146: #{nice_forward.1} parent=1 // pred_check
      _
    $region147: #{nice_forward.1} parent=1 // pred_check_branch
      %395 = sbr.rel (0) target = $region149
    $region148: #{nice_forward.1} parent=1 // pred_region
      %s397 = ssub.s32 1024, 1024
      %398 = vsyncadd [#allocation32], %s397
      %s399 = sshll.u32 [#allocation33], 4
      %s400 = int_to_ptr.vmem [resolvable:$true] %s399
      %405 = dma.hbm_to_vmem [thread:$0]  %s73, 1024, %s400, [#allocation32], 64, 64, 4
    $region149: #{nice_forward.1} parent=1 // pred_fallthru
      _
    // Predicated region
    $region150: #{nice_forward.1} parent=1 // pred_check
      _
    $region151: #{nice_forward.1} parent=1 // pred_check_branch
      %407 = sbr.rel (0) target = $region153
    $region152: #{nice_forward.1} parent=1 // pred_region
      %s409 = ssub.s32 16, 16
      %410 = vsyncadd [#allocation35], %s409
      %s412 = sshll.u32 [#allocation34], 4
      %s413 = int_to_ptr.vmem [resolvable:$true] %s412
      %415 = dma.hbm_to_vmem [thread:$0]  %s75, 16, %s413, [#allocation35]
    $region153: #{nice_forward.1} parent=1 // pred_fallthru
      _
    // Predicated region
    $region154: #{nice_forward.1} parent=1 // pred_check
      _
    $region155: #{nice_forward.1} parent=1 // pred_check_branch
      %417 = sbr.rel (0) target = $region157
    $region156: #{nice_forward.1} parent=1 // pred_region
      %s419 = ssub.s32 1024, 1024
      %420 = vsyncadd [#allocation35], %s419
      %s421 = sshll.u32 [#allocation36], 4
      %s422 = int_to_ptr.vmem [resolvable:$true] %s421
      %427 = dma.hbm_to_vmem [thread:$0]  %s77, 1024, %s422, [#allocation35], 64, 64, 4
    $region157: #{nice_forward.1} parent=1 // pred_fallthru
      _
    // Predicated region
    $region158: #{nice_forward.1} parent=1 // pred_check
      _
    $region159: #{nice_forward.1} parent=1 // pred_check_branch
      %429 = sbr.rel (0) target = $region161
    $region160: #{nice_forward.1} parent=1 // pred_region
      %s431 = ssub.s32 16, 16
      %432 = vsyncadd [#allocation38], %s431
      %s434 = sshll.u32 [#allocation37], 4
      %s435 = int_to_ptr.vmem [resolvable:$true] %s434
      %437 = dma.hbm_to_vmem [thread:$0]  %s79, 16, %s435, [#allocation38]
    $region161: #{nice_forward.1} parent=1 // pred_fallthru
      _
    // Predicated region
    $region162: #{nice_forward.1} parent=1 // pred_check
      _
    $region163: #{nice_forward.1} parent=1 // pred_check_branch
      %439 = sbr.rel (0) target = $region165
    $region164: #{nice_forward.1} parent=1 // pred_region
      %s441 = ssub.s32 1024, 1024
      %442 = vsyncadd [#allocation38], %s441
      %s443 = sshll.u32 [#allocation39], 4
      %s444 = int_to_ptr.vmem [resolvable:$true] %s443
      %449 = dma.hbm_to_vmem [thread:$0]  %s81, 1024, %s444, [#allocation38], 64, 64, 4
    $region165: #{nice_forward.1} parent=1 // pred_fallthru
      _
    // Predicated region
    $region166: #{nice_forward.1} parent=1 // pred_check
      _
    $region167: #{nice_forward.1} parent=1 // pred_check_branch
      %451 = sbr.rel (0) target = $region169
    $region168: #{nice_forward.1} parent=1 // pred_region
      %s453 = ssub.s32 16, 16
      %454 = vsyncadd [#allocation41], %s453
      %s456 = sshll.u32 [#allocation40], 4
      %s457 = int_to_ptr.vmem [resolvable:$true] %s456
      %459 = dma.hbm_to_vmem [thread:$0]  %s83, 16, %s457, [#allocation41]
    $region169: #{nice_forward.1} parent=1 // pred_fallthru
      _
    // Predicated region
    $region170: #{nice_forward.1} parent=1 // pred_check
      _
    $region171: #{nice_forward.1} parent=1 // pred_check_branch
      %461 = sbr.rel (0) target = $region173
    $region172: #{nice_forward.1} parent=1 // pred_region
      %s463 = ssub.s32 1024, 1024
      %464 = vsyncadd [#allocation41], %s463
      %s465 = sshll.u32 [#allocation42], 4
      %s466 = int_to_ptr.vmem [resolvable:$true] %s465
      %471 = dma.hbm_to_vmem [thread:$0]  %s85, 1024, %s466, [#allocation41], 64, 64, 4
    $region173: #{nice_forward.1} parent=1 // pred_fallthru
      _
    // Predicated region
    $region174: #{nice_forward.1} parent=1 // pred_check
      _
    $region175: #{nice_forward.1} parent=1 // pred_check_branch
      %473 = sbr.rel (0) target = $region177
    $region176: #{nice_forward.1} parent=1 // pred_region
      %s475 = ssub.s32 16, 16
      %476 = vsyncadd [#allocation44], %s475
      %s478 = sshll.u32 [#allocation43], 4
      %s479 = int_to_ptr.vmem [resolvable:$true] %s478
      %481 = dma.hbm_to_vmem [thread:$0]  %s87, 16, %s479, [#allocation44]
    $region177: #{nice_forward.1} parent=1 // pred_fallthru
      _
    // Predicated region
    $region178: #{nice_forward.1} parent=1 // pred_check
      _
    $region179: #{nice_forward.1} parent=1 // pred_check_branch
      %483 = sbr.rel (0) target = $region181
    $region180: #{nice_forward.1} parent=1 // pred_region
      %s485 = ssub.s32 1024, 1024
      %486 = vsyncadd [#allocation44], %s485
      %s487 = sshll.u32 [#allocation45], 4
      %s488 = int_to_ptr.vmem [resolvable:$true] %s487
      %493 = dma.hbm_to_vmem [thread:$0]  %s89, 1024, %s488, [#allocation44], 64, 64, 4
    $region181: #{nice_forward.1} parent=1 // pred_fallthru
      _
    // Predicated region
    $region182: #{nice_forward.1} parent=1 // pred_check
      _
    $region183: #{nice_forward.1} parent=1 // pred_check_branch
      %495 = sbr.rel (0) target = $region185
    $region184: #{nice_forward.1} parent=1 // pred_region
      %s497 = ssub.s32 16, 16
      %498 = vsyncadd [#allocation47], %s497
      %s500 = sshll.u32 [#allocation46], 4
      %s501 = int_to_ptr.vmem [resolvable:$true] %s500
      %503 = dma.hbm_to_vmem [thread:$0]  %s91, 16, %s501, [#allocation47]
    $region185: #{nice_forward.1} parent=1 // pred_fallthru
      _
    // Predicated region
    $region186: #{nice_forward.1} parent=1 // pred_check
      _
    $region187: #{nice_forward.1} parent=1 // pred_check_branch
      %505 = sbr.rel (0) target = $region189
    $region188: #{nice_forward.1} parent=1 // pred_region
      %s507 = ssub.s32 1024, 1024
      %508 = vsyncadd [#allocation47], %s507
      %s509 = sshll.u32 [#allocation48], 4
      %s510 = int_to_ptr.vmem [resolvable:$true] %s509
      %515 = dma.hbm_to_vmem [thread:$0]  %s93, 1024, %s510, [#allocation47], 64, 64, 4
    $region189: #{nice_forward.1} parent=1 // pred_fallthru
      _
    // Predicated region
    $region190: #{nice_forward.1} parent=1 // pred_check
      _
    $region191: #{nice_forward.1} parent=1 // pred_check_branch
      %517 = sbr.rel (0) target = $region193
    $region192: #{nice_forward.1} parent=1 // pred_region
      %s519 = ssub.s32 16, 16
      %520 = vsyncadd [#allocation50], %s519
      %s522 = sshll.u32 [#allocation49], 4
      %s523 = int_to_ptr.vmem [resolvable:$true] %s522
      %525 = dma.hbm_to_vmem [thread:$0]  %s95, 16, %s523, [#allocation50]
    $region193: #{nice_forward.1} parent=1 // pred_fallthru
      _
    // Predicated region
    $region194: #{nice_forward.1} parent=1 // pred_check
      _
    $region195: #{nice_forward.1} parent=1 // pred_check_branch
      %527 = sbr.rel (0) target = $region197
    $region196: #{nice_forward.1} parent=1 // pred_region
      %s529 = ssub.s32 1024, 1024
      %530 = vsyncadd [#allocation50], %s529
      %s531 = sshll.u32 [#allocation51], 4
      %s532 = int_to_ptr.vmem [resolvable:$true] %s531
      %537 = dma.hbm_to_vmem [thread:$0]  %s97, 1024, %s532, [#allocation50], 64, 64, 4
    $region197: #{nice_forward.1} parent=1 // pred_fallthru
      _
    // Predicated region
    $region198: #{nice_forward.1} parent=1 // pred_check
      _
    $region199: #{nice_forward.1} parent=1 // pred_check_branch
      %539 = sbr.rel (0) target = $region201
    $region200: #{nice_forward.1} parent=1 // pred_region
      %s541 = ssub.s32 16, 16
      %542 = vsyncadd [#allocation53], %s541
      %s544 = sshll.u32 [#allocation52], 4
      %s545 = int_to_ptr.vmem [resolvable:$true] %s544
      %547 = dma.hbm_to_vmem [thread:$0]  %s99, 16, %s545, [#allocation53]
    $region201: #{nice_forward.1} parent=1 // pred_fallthru
      _
    // Predicated region
    $region202: #{nice_forward.1} parent=1 // pred_check
      _
    $region203: #{nice_forward.1} parent=1 // pred_check_branch
      %549 = sbr.rel (0) target = $region205
    $region204: #{nice_forward.1} parent=1 // pred_region
      %s551 = ssub.s32 16, 16
      %552 = vsyncadd [#allocation53], %s551
      %s554 = sshll.u32 [#allocation54], 4
      %s555 = int_to_ptr.vmem [resolvable:$true] %s554
      %557 = dma.hbm_to_vmem [thread:$0]  %s101, 16, %s555, [#allocation53]
    $region205: #{nice_forward.1} parent=1 // pred_fallthru
      _
    // Predicated region
    $region206: #{nice_forward.1} parent=1 // pred_check
      _
    $region207: #{nice_forward.1} parent=1 // pred_check_branch
      %559 = sbr.rel (0) target = $region209
    $region208: #{nice_forward.1} parent=1 // pred_region
      %s561 = ssub.s32 16, 16
      %562 = vsyncadd [#allocation56], %s561
      %s564 = sshll.u32 [#allocation55], 4
      %s565 = int_to_ptr.vmem [resolvable:$true] %s564
      %567 = dma.hbm_to_vmem [thread:$0]  %s103, 16, %s565, [#allocation56]
    $region209: #{nice_forward.1} parent=1 // pred_fallthru
      _
    // Predicated region
    $region210: #{nice_forward.1} parent=1 // pred_check
      _
    $region211: #{nice_forward.1} parent=1 // pred_check_branch
      %569 = sbr.rel (0) target = $region213
    $region212: #{nice_forward.1} parent=1 // pred_region
      %570 = dma.done [#allocation3], 1024
    $region213: #{nice_forward.1} parent=1 // pred_fallthru
      _
    // Predicated region
    $region214: #{nice_forward.1} parent=1 // pred_check
      _
    $region215: #{nice_forward.1} parent=1 // pred_check_branch
      %572 = sbr.rel (0) target = $region217
    $region216: #{nice_forward.1} parent=1 // pred_region
      %573 = dma.done [#allocation5], 1024
    $region217: #{nice_forward.1} parent=1 // pred_fallthru
      _
    // Predicated region
    $region218: #{nice_forward.1} parent=1 // pred_check
      _
    $region219: #{nice_forward.1} parent=1 // pred_check_branch
      %575 = sbr.rel (0) target = $region221
    $region220: #{nice_forward.1} parent=1 // pred_region
      %576 = dma.done [#allocation5], 1024
    $region221: #{nice_forward.1} parent=1 // pred_fallthru
      _
    // Predicated region
    $region222: #{nice_forward.1} parent=1 // pred_check
      _
    $region223: #{nice_forward.1} parent=1 // pred_check_branch
      %578 = sbr.rel (0) target = $region225
    $region224: #{nice_forward.1} parent=1 // pred_region
      %579 = dma.done [#allocation8], 1024
    $region225: #{nice_forward.1} parent=1 // pred_fallthru
      _
    // Predicated region
    $region226: #{nice_forward.1} parent=1 // pred_check
      _
    $region227: #{nice_forward.1} parent=1 // pred_check_branch
      %581 = sbr.rel (0) target = $region229
    $region228: #{nice_forward.1} parent=1 // pred_region
      %582 = dma.done [#allocation8], 1024
    $region229: #{nice_forward.1} parent=1 // pred_fallthru
      _
    // Predicated region
    $region230: #{nice_forward.1} parent=1 // pred_check
      _
    $region231: #{nice_forward.1} parent=1 // pred_check_branch
      %584 = sbr.rel (0) target = $region233
    $region232: #{nice_forward.1} parent=1 // pred_region
      %585 = dma.done [#allocation11], 1024
    $region233: #{nice_forward.1} parent=1 // pred_fallthru
      _
    // Predicated region
    $region234: #{nice_forward.1} parent=1 // pred_check
      _
    $region235: #{nice_forward.1} parent=1 // pred_check_branch
      %587 = sbr.rel (0) target = $region237
    $region236: #{nice_forward.1} parent=1 // pred_region
      %588 = dma.done [#allocation11], 1024
    $region237: #{nice_forward.1} parent=1 // pred_fallthru
      _
    // Predicated region
    $region238: #{nice_forward.1} parent=1 // pred_check
      _
    $region239: #{nice_forward.1} parent=1 // pred_check_branch
      %590 = sbr.rel (0) target = $region241
    $region240: #{nice_forward.1} parent=1 // pred_region
      %591 = dma.done [#allocation14], 1024
    $region241: #{nice_forward.1} parent=1 // pred_fallthru
      _
    // Predicated region
    $region242: #{nice_forward.1} parent=1 // pred_check
      _
    $region243: #{nice_forward.1} parent=1 // pred_check_branch
      %593 = sbr.rel (0) target = $region245
    $region244: #{nice_forward.1} parent=1 // pred_region
      %594 = dma.done [#allocation14], 1024
    $region245: #{nice_forward.1} parent=1 // pred_fallthru
      _
    // Predicated region
    $region246: #{nice_forward.1} parent=1 // pred_check
      _
    $region247: #{nice_forward.1} parent=1 // pred_check_branch
      %596 = sbr.rel (0) target = $region249
    $region248: #{nice_forward.1} parent=1 // pred_region
      %597 = dma.done [#allocation17], 1024
    $region249: #{nice_forward.1} parent=1 // pred_fallthru
      _
    // Predicated region
    $region250: #{nice_forward.1} parent=1 // pred_check
      _
    $region251: #{nice_forward.1} parent=1 // pred_check_branch
      %599 = sbr.rel (0) target = $region253
    $region252: #{nice_forward.1} parent=1 // pred_region
      %600 = dma.done [#allocation17], 1024
    $region253: #{nice_forward.1} parent=1 // pred_fallthru
      _
    // Predicated region
    $region254: #{nice_forward.1} parent=1 // pred_check
      _
    $region255: #{nice_forward.1} parent=1 // pred_check_branch
      %602 = sbr.rel (0) target = $region257
    $region256: #{nice_forward.1} parent=1 // pred_region
      %603 = dma.done [#allocation20], 16
    $region257: #{nice_forward.1} parent=1 // pred_fallthru
      _
    // Predicated region
    $region258: #{nice_forward.1} parent=1 // pred_check
      _
    $region259: #{nice_forward.1} parent=1 // pred_check_branch
      %605 = sbr.rel (0) target = $region261
    $region260: #{nice_forward.1} parent=1 // pred_region
      %606 = dma.done [#allocation20], 1024
    $region261: #{nice_forward.1} parent=1 // pred_fallthru
      _
    // Predicated region
    $region262: #{nice_forward.1} parent=1 // pred_check
      _
    $region263: #{nice_forward.1} parent=1 // pred_check_branch
      %608 = sbr.rel (0) target = $region265
    $region264: #{nice_forward.1} parent=1 // pred_region
      %609 = dma.done [#allocation23], 16
    $region265: #{nice_forward.1} parent=1 // pred_fallthru
      _
    // Predicated region
    $region266: #{nice_forward.1} parent=1 // pred_check
      _
    $region267: #{nice_forward.1} parent=1 // pred_check_branch
      %611 = sbr.rel (0) target = $region269
    $region268: #{nice_forward.1} parent=1 // pred_region
      %612 = dma.done [#allocation23], 1024
    $region269: #{nice_forward.1} parent=1 // pred_fallthru
      _
    // Predicated region
    $region270: #{nice_forward.1} parent=1 // pred_check
      _
    $region271: #{nice_forward.1} parent=1 // pred_check_branch
      %614 = sbr.rel (0) target = $region273
    $region272: #{nice_forward.1} parent=1 // pred_region
      %615 = dma.done [#allocation26], 16
    $region273: #{nice_forward.1} parent=1 // pred_fallthru
      _
    // Predicated region
    $region274: #{nice_forward.1} parent=1 // pred_check
      _
    $region275: #{nice_forward.1} parent=1 // pred_check_branch
      %617 = sbr.rel (0) target = $region277
    $region276: #{nice_forward.1} parent=1 // pred_region
      %618 = dma.done [#allocation26], 1024
    $region277: #{nice_forward.1} parent=1 // pred_fallthru
      _
    // Predicated region
    $region278: #{nice_forward.1} parent=1 // pred_check
      _
    $region279: #{nice_forward.1} parent=1 // pred_check_branch
      %620 = sbr.rel (0) target = $region281
    $region280: #{nice_forward.1} parent=1 // pred_region
      %621 = dma.done [#allocation29], 16
    $region281: #{nice_forward.1} parent=1 // pred_fallthru
      _
    // Predicated region
    $region282: #{nice_forward.1} parent=1 // pred_check
      _
    $region283: #{nice_forward.1} parent=1 // pred_check_branch
      %623 = sbr.rel (0) target = $region285
    $region284: #{nice_forward.1} parent=1 // pred_region
      %624 = dma.done [#allocation29], 1024
    $region285: #{nice_forward.1} parent=1 // pred_fallthru
      _
    // Predicated region
    $region286: #{nice_forward.1} parent=1 // pred_check
      _
    $region287: #{nice_forward.1} parent=1 // pred_check_branch
      %626 = sbr.rel (0) target = $region289
    $region288: #{nice_forward.1} parent=1 // pred_region
      %627 = dma.done [#allocation32], 16
    $region289: #{nice_forward.1} parent=1 // pred_fallthru
      _
    // Predicated region
    $region290: #{nice_forward.1} parent=1 // pred_check
      _
    $region291: #{nice_forward.1} parent=1 // pred_check_branch
      %629 = sbr.rel (0) target = $region293
    $region292: #{nice_forward.1} parent=1 // pred_region
      %630 = dma.done [#allocation32], 1024
    $region293: #{nice_forward.1} parent=1 // pred_fallthru
      _
    // Predicated region
    $region294: #{nice_forward.1} parent=1 // pred_check
      _
    $region295: #{nice_forward.1} parent=1 // pred_check_branch
      %632 = sbr.rel (0) target = $region297
    $region296: #{nice_forward.1} parent=1 // pred_region
      %633 = dma.done [#allocation35], 16
    $region297: #{nice_forward.1} parent=1 // pred_fallthru
      _
    // Predicated region
    $region298: #{nice_forward.1} parent=1 // pred_check
      _
    $region299: #{nice_forward.1} parent=1 // pred_check_branch
      %635 = sbr.rel (0) target = $region301
    $region300: #{nice_forward.1} parent=1 // pred_region
      %636 = dma.done [#allocation35], 1024
    $region301: #{nice_forward.1} parent=1 // pred_fallthru
      _
    // Predicated region
    $region302: #{nice_forward.1} parent=1 // pred_check
      _
    $region303: #{nice_forward.1} parent=1 // pred_check_branch
      %638 = sbr.rel (0) target = $region305
    $region304: #{nice_forward.1} parent=1 // pred_region
      %639 = dma.done [#allocation38], 16
    $region305: #{nice_forward.1} parent=1 // pred_fallthru
      _
    // Predicated region
    $region306: #{nice_forward.1} parent=1 // pred_check
      _
    $region307: #{nice_forward.1} parent=1 // pred_check_branch
      %641 = sbr.rel (0) target = $region309
    $region308: #{nice_forward.1} parent=1 // pred_region
      %642 = dma.done [#allocation38], 1024
    $region309: #{nice_forward.1} parent=1 // pred_fallthru
      _
    // Predicated region
    $region310: #{nice_forward.1} parent=1 // pred_check
      _
    $region311: #{nice_forward.1} parent=1 // pred_check_branch
      %644 = sbr.rel (0) target = $region313
    $region312: #{nice_forward.1} parent=1 // pred_region
      %645 = dma.done [#allocation41], 16
    $region313: #{nice_forward.1} parent=1 // pred_fallthru
      _
    // Predicated region
    $region314: #{nice_forward.1} parent=1 // pred_check
      _
    $region315: #{nice_forward.1} parent=1 // pred_check_branch
      %647 = sbr.rel (0) target = $region317
    $region316: #{nice_forward.1} parent=1 // pred_region
      %648 = dma.done [#allocation41], 1024
    $region317: #{nice_forward.1} parent=1 // pred_fallthru
      _
    // Predicated region
    $region318: #{nice_forward.1} parent=1 // pred_check
      _
    $region319: #{nice_forward.1} parent=1 // pred_check_branch
      %650 = sbr.rel (0) target = $region321
    $region320: #{nice_forward.1} parent=1 // pred_region
      %651 = dma.done [#allocation44], 16
    $region321: #{nice_forward.1} parent=1 // pred_fallthru
      _
    // Predicated region
    $region322: #{nice_forward.1} parent=1 // pred_check
      _
    $region323: #{nice_forward.1} parent=1 // pred_check_branch
      %653 = sbr.rel (0) target = $region325
    $region324: #{nice_forward.1} parent=1 // pred_region
      %654 = dma.done [#allocation44], 1024
    $region325: #{nice_forward.1} parent=1 // pred_fallthru
      _
    // Predicated region
    $region326: #{nice_forward.1} parent=1 // pred_check
      _
    $region327: #{nice_forward.1} parent=1 // pred_check_branch
      %656 = sbr.rel (0) target = $region329
    $region328: #{nice_forward.1} parent=1 // pred_region
      %657 = dma.done [#allocation47], 16
    $region329: #{nice_forward.1} parent=1 // pred_fallthru
      _
    // Predicated region
    $region330: #{nice_forward.1} parent=1 // pred_check
      _
    $region331: #{nice_forward.1} parent=1 // pred_check_branch
      %659 = sbr.rel (0) target = $region333
    $region332: #{nice_forward.1} parent=1 // pred_region
      %660 = dma.done [#allocation47], 1024
    $region333: #{nice_forward.1} parent=1 // pred_fallthru
      _
    // Predicated region
    $region334: #{nice_forward.1} parent=1 // pred_check
      _
    $region335: #{nice_forward.1} parent=1 // pred_check_branch
      %662 = sbr.rel (0) target = $region337
    $region336: #{nice_forward.1} parent=1 // pred_region
      %663 = dma.done [#allocation50], 16
    $region337: #{nice_forward.1} parent=1 // pred_fallthru
      _
    // Predicated region
    $region338: #{nice_forward.1} parent=1 // pred_check
      _
    $region339: #{nice_forward.1} parent=1 // pred_check_branch
      %665 = sbr.rel (0) target = $region341
    $region340: #{nice_forward.1} parent=1 // pred_region
      %666 = dma.done [#allocation50], 1024
    $region341: #{nice_forward.1} parent=1 // pred_fallthru
      _
    // Predicated region
    $region342: #{nice_forward.1} parent=1 // pred_check
      _
    $region343: #{nice_forward.1} parent=1 // pred_check_branch
      %668 = sbr.rel (0) target = $region345
    $region344: #{nice_forward.1} parent=1 // pred_region
      %669 = dma.done [#allocation53], 16
    $region345: #{nice_forward.1} parent=1 // pred_fallthru
      _
    // Predicated region
    $region346: #{nice_forward.1} parent=1 // pred_check
      _
    $region347: #{nice_forward.1} parent=1 // pred_check_branch
      %671 = sbr.rel (0) target = $region349
    $region348: #{nice_forward.1} parent=1 // pred_region
      %672 = dma.done [#allocation53], 16
    $region349: #{nice_forward.1} parent=1 // pred_fallthru
      _
    // Predicated region
    $region350: #{nice_forward.1} parent=1 // pred_check
      _
    $region351: #{nice_forward.1} parent=1 // pred_check_branch
      %674 = sbr.rel (0) target = $region353
    $region352: #{nice_forward.1} parent=1 // pred_region
      %675 = dma.done [#allocation56], 16
    $region353: #{nice_forward.1} parent=1 // pred_fallthru
      _
    %v677 = vld [vmem:[%s1] sm:$0xff]
    %v678 = vld [vmem:[%s3] sm:$0xff]
    %v679 = vld [vmem:[%s5] sm:$0xf]
    %v680 = vld [vmem:[%s5 + $0x4] sm:$0xf]
    %v681 = vld [vmem:[%s5 + $0x8] sm:$0xf]
    %v682 = vld [vmem:[%s5 + $0xc] sm:$0xf]
    %v683 = vld [vmem:[%s5 + $0x10] sm:$0xf]
    %v684 = vld [vmem:[%s5 + $0x14] sm:$0xf]
    %v685 = vld [vmem:[%s5 + $0x18] sm:$0xf]
    %v686 = vld [vmem:[%s5 + $0x1c] sm:$0xf]
    %v687 = vld [vmem:[%s5 + $0x20] sm:$0xf]
    %v688 = vld [vmem:[%s5 + $0x24] sm:$0xf]
    %v689 = vld [vmem:[%s5 + $0x28] sm:$0xf]
    %v690 = vld [vmem:[%s5 + $0x2c] sm:$0xf]
    %v691 = vld [vmem:[%s5 + $0x30] sm:$0xf]
    %v692 = vld [vmem:[%s5 + $0x34] sm:$0xf]
    %v693 = vld [vmem:[%s5 + $0x38] sm:$0xf]
    %v694 = vld [vmem:[%s5 + $0x3c] sm:$0xf]
    %v695 = vld [vmem:[%s7] sm:$0x1]
    %v696 = vpack.c.bf16 %v677, %v677
    %v698 = vlaneseq
    %v699 = vshrl.u32 %v698, 7
    %v700 = vsub.s32 0, %v699
    %v701 = vrot.slane %v695, %v700
    %v719 = vunpack.c.l.b16 %v679
    %v720 = vunpack.c.l.b16 %v680
    %v721 = vunpack.c.l.b16 %v681
    %v722 = vunpack.c.l.b16 %v682
    %v723 = vunpack.c.l.b16 %v683
    %v724 = vunpack.c.l.b16 %v684
    %v725 = vunpack.c.l.b16 %v685
    %v726 = vunpack.c.l.b16 %v686
    %v727 = vunpack.c.l.b16 %v687
    %v728 = vunpack.c.l.b16 %v688
    %v729 = vunpack.c.l.b16 %v689
    %v730 = vunpack.c.l.b16 %v690
    %v731 = vunpack.c.l.b16 %v691
    %v732 = vunpack.c.l.b16 %v692
    %v733 = vunpack.c.l.b16 %v693
    %v734 = vunpack.c.l.b16 %v694
    %v735 = vpack.c.b16 %v720, %v719
    %v736 = vpack.c.b16 %v722, %v721
    %v737 = vpack.c.b16 %v724, %v723
    %v738 = vpack.c.b16 %v726, %v725
    %v739 = vpack.c.b16 %v728, %v727
    %v740 = vpack.c.b16 %v730, %v729
    %v741 = vpack.c.b16 %v732, %v731
    %v742 = vpack.c.b16 %v734, %v733
    %751 = vmatprep.subr.bf16.mxu0 0
    %752 = vmatpush1.bf16.msra.mxu0 %v735
    %753 = vmatprep.subr.bf16.mxu0 0
    %754 = vmatpush1.bf16.msra.mxu0 %v736
    %755 = vmatprep.subr.bf16.mxu0 0
    %756 = vmatpush1.bf16.msra.mxu0 %v737
    %757 = vmatprep.subr.bf16.mxu0 0
    %758 = vmatpush1.bf16.msra.mxu0 %v738
    %759 = vmatprep.subr.bf16.mxu0 0
    %760 = vmatpush1.bf16.msra.mxu0 %v739
    %761 = vmatprep.subr.bf16.mxu0 0
    %762 = vmatpush1.bf16.msra.mxu0 %v740
    %763 = vmatprep.subr.bf16.mxu0 0
    %764 = vmatpush1.bf16.msra.mxu0 %v741
    %765 = vmatprep.subr.bf16.mxu0 0
    %766 = vmatpush1.bf16.msra.mxu0 %v742
    %767 = vmatprep.subr.bf16.mxu0 0
    %768 = vmatpush1.bf16.msra.mxu0 0
    %769 = vmatprep.subr.bf16.mxu0 0
    %770 = vmatpush1.bf16.msra.mxu0 0
    %771 = vmatprep.subr.bf16.mxu0 0
    %772 = vmatpush1.bf16.msra.mxu0 0
    %773 = vmatprep.subr.bf16.mxu0 0
    %774 = vmatpush1.bf16.msra.mxu0 0
    %775 = vmatprep.subr.bf16.mxu0 0
    %776 = vmatpush1.bf16.msra.mxu0 0
    %777 = vmatprep.subr.bf16.mxu0 0
    %778 = vmatpush1.bf16.msra.mxu0 0
    %779 = vmatprep.subr.bf16.mxu0 0
    %780 = vmatpush1.bf16.msra.mxu0 0
    %781 = vmatprep.subr.bf16.mxu0 0
    %782 = vmatpush1.bf16.msra.mxu0 0
    %783 = vmatprep.mubr.bf16.mxu0 0
    %784 = vmatmul.mubr.bf16.gmra.mrb[0].mxu0 %v696
    %v785 = vpop.f32.mrb[0].mxu0
    %v786 = vadd.f32 %v701, %v785
    %v787 = vpop.f32.mrb[0].mxu0
    %v788 = vpop.f32.mrb[0].mxu0
    %v789 = vpop.f32.mrb[0].mxu0
    %790 = vdwg.mxu0
    %v791 = vmax.f32 %v786, 0.0
    %v792 = vld [vmem:[%s9] sm:$0xf]
    %v793 = vld [vmem:[%s9 + $0x4] sm:$0xf]
    %v794 = vld [vmem:[%s9 + $0x8] sm:$0xf]
    %v795 = vld [vmem:[%s9 + $0xc] sm:$0xf]
    %v796 = vld [vmem:[%s9 + $0x10] sm:$0xf]
    %v797 = vld [vmem:[%s9 + $0x14] sm:$0xf]
    %v798 = vld [vmem:[%s9 + $0x18] sm:$0xf]
    %v799 = vld [vmem:[%s9 + $0x1c] sm:$0xf]
    %v800 = vld [vmem:[%s9 + $0x20] sm:$0xf]
    %v801 = vld [vmem:[%s9 + $0x24] sm:$0xf]
    %v802 = vld [vmem:[%s9 + $0x28] sm:$0xf]
    %v803 = vld [vmem:[%s9 + $0x2c] sm:$0xf]
    %v804 = vld [vmem:[%s9 + $0x30] sm:$0xf]
    %v805 = vld [vmem:[%s9 + $0x34] sm:$0xf]
    %v806 = vld [vmem:[%s9 + $0x38] sm:$0xf]
    %v807 = vld [vmem:[%s9 + $0x3c] sm:$0xf]
    %v808 = vld [vmem:[%s11] sm:$0x1]
    %v809 = vpack.c.bf16 %v791, %v791
    %v811 = vlaneseq
    %v812 = vshrl.u32 %v811, 7
    %v813 = vsub.s32 0, %v812
    %v814 = vrot.slane %v808, %v813
    %v832 = vunpack.c.l.b16 %v792
    %v833 = vunpack.c.l.b16 %v793
    %v834 = vunpack.c.l.b16 %v794
    %v835 = vunpack.c.l.b16 %v795
    %v836 = vunpack.c.l.b16 %v796
    %v837 = vunpack.c.l.b16 %v797
    %v838 = vunpack.c.l.b16 %v798
    %v839 = vunpack.c.l.b16 %v799
    %v840 = vunpack.c.l.b16 %v800
    %v841 = vunpack.c.l.b16 %v801
    %v842 = vunpack.c.l.b16 %v802
    %v843 = vunpack.c.l.b16 %v803
    %v844 = vunpack.c.l.b16 %v804
    %v845 = vunpack.c.l.b16 %v805
    %v846 = vunpack.c.l.b16 %v806
    %v847 = vunpack.c.l.b16 %v807
    %v848 = vpack.c.b16 %v833, %v832
    %v849 = vpack.c.b16 %v835, %v834
    %v850 = vpack.c.b16 %v837, %v836
    %v851 = vpack.c.b16 %v839, %v838
    %v852 = vpack.c.b16 %v841, %v840
    %v853 = vpack.c.b16 %v843, %v842
    %v854 = vpack.c.b16 %v845, %v844
    %v855 = vpack.c.b16 %v847, %v846
    %864 = vmatprep.subr.bf16.mxu0 0
    %865 = vmatpush1.bf16.msra.mxu0 %v848
    %866 = vmatprep.subr.bf16.mxu0 0
    %867 = vmatpush1.bf16.msra.mxu0 %v849
    %868 = vmatprep.subr.bf16.mxu0 0
    %869 = vmatpush1.bf16.msra.mxu0 %v850
    %870 = vmatprep.subr.bf16.mxu0 0
    %871 = vmatpush1.bf16.msra.mxu0 %v851
    %872 = vmatprep.subr.bf16.mxu0 0
    %873 = vmatpush1.bf16.msra.mxu0 %v852
    %874 = vmatprep.subr.bf16.mxu0 0
    %875 = vmatpush1.bf16.msra.mxu0 %v853
    %876 = vmatprep.subr.bf16.mxu0 0
    %877 = vmatpush1.bf16.msra.mxu0 %v854
    %878 = vmatprep.subr.bf16.mxu0 0
    %879 = vmatpush1.bf16.msra.mxu0 %v855
    %880 = vmatprep.subr.bf16.mxu0 0
    %881 = vmatpush1.bf16.msra.mxu0 0
    %882 = vmatprep.subr.bf16.mxu0 0
    %883 = vmatpush1.bf16.msra.mxu0 0
    %884 = vmatprep.subr.bf16.mxu0 0
    %885 = vmatpush1.bf16.msra.mxu0 0
    %886 = vmatprep.subr.bf16.mxu0 0
    %887 = vmatpush1.bf16.msra.mxu0 0
    %888 = vmatprep.subr.bf16.mxu0 0
    %889 = vmatpush1.bf16.msra.mxu0 0
    %890 = vmatprep.subr.bf16.mxu0 0
    %891 = vmatpush1.bf16.msra.mxu0 0
    %892 = vmatprep.subr.bf16.mxu0 0
    %893 = vmatpush1.bf16.msra.mxu0 0
    %894 = vmatprep.subr.bf16.mxu0 0
    %895 = vmatpush1.bf16.msra.mxu0 0
    %896 = vmatprep.mubr.bf16.mxu0 0
    %897 = vmatmul.mubr.bf16.gmra.mrb[0].mxu0 %v809
    %v898 = vpop.f32.mrb[0].mxu0
    %v899 = vadd.f32 %v814, %v898
    %v900 = vpop.f32.mrb[0].mxu0
    %v901 = vpop.f32.mrb[0].mxu0
    %v902 = vpop.f32.mrb[0].mxu0
    %903 = vdwg.mxu0
    %v904 = vmax.f32 %v899, 0.0
    %v905 = vld [vmem:[#allocation2] sm:$0xf]
    %v906 = vld [vmem:[#allocation2 + $0x4] sm:$0xf]
    %v907 = vld [vmem:[#allocation2 + $0x8] sm:$0xf]
    %v908 = vld [vmem:[#allocation2 + $0xc] sm:$0xf]
    %v909 = vld [vmem:[#allocation2 + $0x10] sm:$0xf]
    %v910 = vld [vmem:[#allocation2 + $0x14] sm:$0xf]
    %v911 = vld [vmem:[#allocation2 + $0x18] sm:$0xf]
    %v912 = vld [vmem:[#allocation2 + $0x1c] sm:$0xf]
    %v913 = vld [vmem:[#allocation2 + $0x20] sm:$0xf]
    %v914 = vld [vmem:[#allocation2 + $0x24] sm:$0xf]
    %v915 = vld [vmem:[#allocation2 + $0x28] sm:$0xf]
    %v916 = vld [vmem:[#allocation2 + $0x2c] sm:$0xf]
    %v917 = vld [vmem:[#allocation2 + $0x30] sm:$0xf]
    %v918 = vld [vmem:[#allocation2 + $0x34] sm:$0xf]
    %v919 = vld [vmem:[#allocation2 + $0x38] sm:$0xf]
    %v920 = vld [vmem:[#allocation2 + $0x3c] sm:$0xf]
    %v921 = vld [vmem:[%s15] sm:$0x1]
    %v922 = vpack.c.bf16 %v904, %v904
    %v924 = vlaneseq
    %v925 = vshrl.u32 %v924, 7
    %v926 = vsub.s32 0, %v925
    %v927 = vrot.slane %v921, %v926
    %v945 = vunpack.c.l.b16 %v905
    %v946 = vunpack.c.l.b16 %v906
    %v947 = vunpack.c.l.b16 %v907
    %v948 = vunpack.c.l.b16 %v908
    %v949 = vunpack.c.l.b16 %v909
    %v950 = vunpack.c.l.b16 %v910
    %v951 = vunpack.c.l.b16 %v911
    %v952 = vunpack.c.l.b16 %v912
    %v953 = vunpack.c.l.b16 %v913
    %v954 = vunpack.c.l.b16 %v914
    %v955 = vunpack.c.l.b16 %v915
    %v956 = vunpack.c.l.b16 %v916
    %v957 = vunpack.c.l.b16 %v917
    %v958 = vunpack.c.l.b16 %v918
    %v959 = vunpack.c.l.b16 %v919
    %v960 = vunpack.c.l.b16 %v920
    %v961 = vpack.c.b16 %v946, %v945
    %v962 = vpack.c.b16 %v948, %v947
    %v963 = vpack.c.b16 %v950, %v949
    %v964 = vpack.c.b16 %v952, %v951
    %v965 = vpack.c.b16 %v954, %v953
    %v966 = vpack.c.b16 %v956, %v955
    %v967 = vpack.c.b16 %v958, %v957
    %v968 = vpack.c.b16 %v960, %v959
    %977 = vmatprep.subr.bf16.mxu0 0
    %978 = vmatpush1.bf16.msra.mxu0 %v961
    %979 = vmatprep.subr.bf16.mxu0 0
    %980 = vmatpush1.bf16.msra.mxu0 %v962
    %981 = vmatprep.subr.bf16.mxu0 0
    %982 = vmatpush1.bf16.msra.mxu0 %v963
    %983 = vmatprep.subr.bf16.mxu0 0
    %984 = vmatpush1.bf16.msra.mxu0 %v964
    %985 = vmatprep.subr.bf16.mxu0 0
    %986 = vmatpush1.bf16.msra.mxu0 %v965
    %987 = vmatprep.subr.bf16.mxu0 0
    %988 = vmatpush1.bf16.msra.mxu0 %v966
    %989 = vmatprep.subr.bf16.mxu0 0
    %990 = vmatpush1.bf16.msra.mxu0 %v967
    %991 = vmatprep.subr.bf16.mxu0 0
    %992 = vmatpush1.bf16.msra.mxu0 %v968
    %993 = vmatprep.subr.bf16.mxu0 0
    %994 = vmatpush1.bf16.msra.mxu0 0
    %995 = vmatprep.subr.bf16.mxu0 0
    %996 = vmatpush1.bf16.msra.mxu0 0
    %997 = vmatprep.subr.bf16.mxu0 0
    %998 = vmatpush1.bf16.msra.mxu0 0
    %999 = vmatprep.subr.bf16.mxu0 0
    %1000 = vmatpush1.bf16.msra.mxu0 0
    %1001 = vmatprep.subr.bf16.mxu0 0
    %1002 = vmatpush1.bf16.msra.mxu0 0
    %1003 = vmatprep.subr.bf16.mxu0 0
    %1004 = vmatpush1.bf16.msra.mxu0 0
    %1005 = vmatprep.subr.bf16.mxu0 0
    %1006 = vmatpush1.bf16.msra.mxu0 0
    %1007 = vmatprep.subr.bf16.mxu0 0
    %1008 = vmatpush1.bf16.msra.mxu0 0
    %1009 = vmatprep.mubr.bf16.mxu0 0
    %1010 = vmatmul.mubr.bf16.gmra.mrb[0].mxu0 %v922
    %v1011 = vpop.f32.mrb[0].mxu0
    %v1012 = vadd.f32 %v927, %v1011
    %v1013 = vpop.f32.mrb[0].mxu0
    %v1014 = vpop.f32.mrb[0].mxu0
    %v1015 = vpop.f32.mrb[0].mxu0
    %1016 = vdwg.mxu0
    %v1017 = vmax.f32 %v1012, 0.0
    %v1018 = vld [vmem:[#allocation4] sm:$0xf]
    %v1019 = vld [vmem:[#allocation4 + $0x4] sm:$0xf]
    %v1020 = vld [vmem:[#allocation4 + $0x8] sm:$0xf]
    %v1021 = vld [vmem:[#allocation4 + $0xc] sm:$0xf]
    %v1022 = vld [vmem:[#allocation4 + $0x10] sm:$0xf]
    %v1023 = vld [vmem:[#allocation4 + $0x14] sm:$0xf]
    %v1024 = vld [vmem:[#allocation4 + $0x18] sm:$0xf]
    %v1025 = vld [vmem:[#allocation4 + $0x1c] sm:$0xf]
    %v1026 = vld [vmem:[#allocation4 + $0x20] sm:$0xf]
    %v1027 = vld [vmem:[#allocation4 + $0x24] sm:$0xf]
    %v1028 = vld [vmem:[#allocation4 + $0x28] sm:$0xf]
    %v1029 = vld [vmem:[#allocation4 + $0x2c] sm:$0xf]
    %v1030 = vld [vmem:[#allocation4 + $0x30] sm:$0xf]
    %v1031 = vld [vmem:[#allocation4 + $0x34] sm:$0xf]
    %v1032 = vld [vmem:[#allocation4 + $0x38] sm:$0xf]
    %v1033 = vld [vmem:[#allocation4 + $0x3c] sm:$0xf]
    %v1034 = vld [vmem:[%s19] sm:$0x1]
    %v1035 = vpack.c.bf16 %v1017, %v1017
    %v1037 = vlaneseq
    %v1038 = vshrl.u32 %v1037, 7
    %v1039 = vsub.s32 0, %v1038
    %v1040 = vrot.slane %v1034, %v1039
    %v1058 = vunpack.c.l.b16 %v1018
    %v1059 = vunpack.c.l.b16 %v1019
    %v1060 = vunpack.c.l.b16 %v1020
    %v1061 = vunpack.c.l.b16 %v1021
    %v1062 = vunpack.c.l.b16 %v1022
    %v1063 = vunpack.c.l.b16 %v1023
    %v1064 = vunpack.c.l.b16 %v1024
    %v1065 = vunpack.c.l.b16 %v1025
    %v1066 = vunpack.c.l.b16 %v1026
    %v1067 = vunpack.c.l.b16 %v1027
    %v1068 = vunpack.c.l.b16 %v1028
    %v1069 = vunpack.c.l.b16 %v1029
    %v1070 = vunpack.c.l.b16 %v1030
    %v1071 = vunpack.c.l.b16 %v1031
    %v1072 = vunpack.c.l.b16 %v1032
    %v1073 = vunpack.c.l.b16 %v1033
    %v1074 = vpack.c.b16 %v1059, %v1058
    %v1075 = vpack.c.b16 %v1061, %v1060
    %v1076 = vpack.c.b16 %v1063, %v1062
    %v1077 = vpack.c.b16 %v1065, %v1064
    %v1078 = vpack.c.b16 %v1067, %v1066
    %v1079 = vpack.c.b16 %v1069, %v1068
    %v1080 = vpack.c.b16 %v1071, %v1070
    %v1081 = vpack.c.b16 %v1073, %v1072
    %1090 = vmatprep.subr.bf16.mxu0 0
    %1091 = vmatpush1.bf16.msra.mxu0 %v1074
    %1092 = vmatprep.subr.bf16.mxu0 0
    %1093 = vmatpush1.bf16.msra.mxu0 %v1075
    %1094 = vmatprep.subr.bf16.mxu0 0
    %1095 = vmatpush1.bf16.msra.mxu0 %v1076
    %1096 = vmatprep.subr.bf16.mxu0 0
    %1097 = vmatpush1.bf16.msra.mxu0 %v1077
    %1098 = vmatprep.subr.bf16.mxu0 0
    %1099 = vmatpush1.bf16.msra.mxu0 %v1078
    %1100 = vmatprep.subr.bf16.mxu0 0
    %1101 = vmatpush1.bf16.msra.mxu0 %v1079
    %1102 = vmatprep.subr.bf16.mxu0 0
    %1103 = vmatpush1.bf16.msra.mxu0 %v1080
    %1104 = vmatprep.subr.bf16.mxu0 0
    %1105 = vmatpush1.bf16.msra.mxu0 %v1081
    %1106 = vmatprep.subr.bf16.mxu0 0
    %1107 = vmatpush1.bf16.msra.mxu0 0
    %1108 = vmatprep.subr.bf16.mxu0 0
    %1109 = vmatpush1.bf16.msra.mxu0 0
    %1110 = vmatprep.subr.bf16.mxu0 0
    %1111 = vmatpush1.bf16.msra.mxu0 0
    %1112 = vmatprep.subr.bf16.mxu0 0
    %1113 = vmatpush1.bf16.msra.mxu0 0
    %1114 = vmatprep.subr.bf16.mxu0 0
    %1115 = vmatpush1.bf16.msra.mxu0 0
    %1116 = vmatprep.subr.bf16.mxu0 0
    %1117 = vmatpush1.bf16.msra.mxu0 0
    %1118 = vmatprep.subr.bf16.mxu0 0
    %1119 = vmatpush1.bf16.msra.mxu0 0
    %1120 = vmatprep.subr.bf16.mxu0 0
    %1121 = vmatpush1.bf16.msra.mxu0 0
    %1122 = vmatprep.mubr.bf16.mxu0 0
    %1123 = vmatmul.mubr.bf16.gmra.mrb[0].mxu0 %v1035
    %v1124 = vpop.f32.mrb[0].mxu0
    %v1125 = vadd.f32 %v1040, %v1124
    %v1126 = vpop.f32.mrb[0].mxu0
    %v1127 = vpop.f32.mrb[0].mxu0
    %v1128 = vpop.f32.mrb[0].mxu0
    %1129 = vdwg.mxu0
    %v1130 = vmax.f32 %v1125, 0.0
    %v1131 = vld [vmem:[#allocation6] sm:$0xf]
    %v1132 = vld [vmem:[#allocation6 + $0x4] sm:$0xf]
    %v1133 = vld [vmem:[#allocation6 + $0x8] sm:$0xf]
    %v1134 = vld [vmem:[#allocation6 + $0xc] sm:$0xf]
    %v1135 = vld [vmem:[#allocation6 + $0x10] sm:$0xf]
    %v1136 = vld [vmem:[#allocation6 + $0x14] sm:$0xf]
    %v1137 = vld [vmem:[#allocation6 + $0x18] sm:$0xf]
    %v1138 = vld [vmem:[#allocation6 + $0x1c] sm:$0xf]
    %v1139 = vld [vmem:[#allocation6 + $0x20] sm:$0xf]
    %v1140 = vld [vmem:[#allocation6 + $0x24] sm:$0xf]
    %v1141 = vld [vmem:[#allocation6 + $0x28] sm:$0xf]
    %v1142 = vld [vmem:[#allocation6 + $0x2c] sm:$0xf]
    %v1143 = vld [vmem:[#allocation6 + $0x30] sm:$0xf]
    %v1144 = vld [vmem:[#allocation6 + $0x34] sm:$0xf]
    %v1145 = vld [vmem:[#allocation6 + $0x38] sm:$0xf]
    %v1146 = vld [vmem:[#allocation6 + $0x3c] sm:$0xf]
    %v1147 = vld [vmem:[%s23] sm:$0x1]
    %v1148 = vpack.c.bf16 %v1130, %v1130
    %v1150 = vlaneseq
    %v1151 = vshrl.u32 %v1150, 7
    %v1152 = vsub.s32 0, %v1151
    %v1153 = vrot.slane %v1147, %v1152
    %v1171 = vunpack.c.l.b16 %v1131
    %v1172 = vunpack.c.l.b16 %v1132
    %v1173 = vunpack.c.l.b16 %v1133
    %v1174 = vunpack.c.l.b16 %v1134
    %v1175 = vunpack.c.l.b16 %v1135
    %v1176 = vunpack.c.l.b16 %v1136
    %v1177 = vunpack.c.l.b16 %v1137
    %v1178 = vunpack.c.l.b16 %v1138
    %v1179 = vunpack.c.l.b16 %v1139
    %v1180 = vunpack.c.l.b16 %v1140
    %v1181 = vunpack.c.l.b16 %v1141
    %v1182 = vunpack.c.l.b16 %v1142
    %v1183 = vunpack.c.l.b16 %v1143
    %v1184 = vunpack.c.l.b16 %v1144
    %v1185 = vunpack.c.l.b16 %v1145
    %v1186 = vunpack.c.l.b16 %v1146
    %v1187 = vpack.c.b16 %v1172, %v1171
    %v1188 = vpack.c.b16 %v1174, %v1173
    %v1189 = vpack.c.b16 %v1176, %v1175
    %v1190 = vpack.c.b16 %v1178, %v1177
    %v1191 = vpack.c.b16 %v1180, %v1179
    %v1192 = vpack.c.b16 %v1182, %v1181
    %v1193 = vpack.c.b16 %v1184, %v1183
    %v1194 = vpack.c.b16 %v1186, %v1185
    %1203 = vmatprep.subr.bf16.mxu0 0
    %1204 = vmatpush1.bf16.msra.mxu0 %v1187
    %1205 = vmatprep.subr.bf16.mxu0 0
    %1206 = vmatpush1.bf16.msra.mxu0 %v1188
    %1207 = vmatprep.subr.bf16.mxu0 0
    %1208 = vmatpush1.bf16.msra.mxu0 %v1189
    %1209 = vmatprep.subr.bf16.mxu0 0
    %1210 = vmatpush1.bf16.msra.mxu0 %v1190
    %1211 = vmatprep.subr.bf16.mxu0 0
    %1212 = vmatpush1.bf16.msra.mxu0 %v1191
    %1213 = vmatprep.subr.bf16.mxu0 0
    %1214 = vmatpush1.bf16.msra.mxu0 %v1192
    %1215 = vmatprep.subr.bf16.mxu0 0
    %1216 = vmatpush1.bf16.msra.mxu0 %v1193
    %1217 = vmatprep.subr.bf16.mxu0 0
    %1218 = vmatpush1.bf16.msra.mxu0 %v1194
    %1219 = vmatprep.subr.bf16.mxu0 0
    %1220 = vmatpush1.bf16.msra.mxu0 0
    %1221 = vmatprep.subr.bf16.mxu0 0
    %1222 = vmatpush1.bf16.msra.mxu0 0
    %1223 = vmatprep.subr.bf16.mxu0 0
    %1224 = vmatpush1.bf16.msra.mxu0 0
    %1225 = vmatprep.subr.bf16.mxu0 0
    %1226 = vmatpush1.bf16.msra.mxu0 0
    %1227 = vmatprep.subr.bf16.mxu0 0
    %1228 = vmatpush1.bf16.msra.mxu0 0
    %1229 = vmatprep.subr.bf16.mxu0 0
    %1230 = vmatpush1.bf16.msra.mxu0 0
    %1231 = vmatprep.subr.bf16.mxu0 0
    %1232 = vmatpush1.bf16.msra.mxu0 0
    %1233 = vmatprep.subr.bf16.mxu0 0
    %1234 = vmatpush1.bf16.msra.mxu0 0
    %1235 = vmatprep.mubr.bf16.mxu0 0
    %1236 = vmatmul.mubr.bf16.gmra.mrb[0].mxu0 %v1148
    %v1237 = vpop.f32.mrb[0].mxu0
    %v1238 = vadd.f32 %v1153, %v1237
    %v1239 = vpop.f32.mrb[0].mxu0
    %v1240 = vpop.f32.mrb[0].mxu0
    %v1241 = vpop.f32.mrb[0].mxu0
    %1242 = vdwg.mxu0
    %v1243 = vmax.f32 %v1238, 0.0
    %v1244 = vld [vmem:[#allocation7] sm:$0xf]
    %v1245 = vld [vmem:[#allocation7 + $0x4] sm:$0xf]
    %v1246 = vld [vmem:[#allocation7 + $0x8] sm:$0xf]
    %v1247 = vld [vmem:[#allocation7 + $0xc] sm:$0xf]
    %v1248 = vld [vmem:[#allocation7 + $0x10] sm:$0xf]
    %v1249 = vld [vmem:[#allocation7 + $0x14] sm:$0xf]
    %v1250 = vld [vmem:[#allocation7 + $0x18] sm:$0xf]
    %v1251 = vld [vmem:[#allocation7 + $0x1c] sm:$0xf]
    %v1252 = vld [vmem:[#allocation7 + $0x20] sm:$0xf]
    %v1253 = vld [vmem:[#allocation7 + $0x24] sm:$0xf]
    %v1254 = vld [vmem:[#allocation7 + $0x28] sm:$0xf]
    %v1255 = vld [vmem:[#allocation7 + $0x2c] sm:$0xf]
    %v1256 = vld [vmem:[#allocation7 + $0x30] sm:$0xf]
    %v1257 = vld [vmem:[#allocation7 + $0x34] sm:$0xf]
    %v1258 = vld [vmem:[#allocation7 + $0x38] sm:$0xf]
    %v1259 = vld [vmem:[#allocation7 + $0x3c] sm:$0xf]
    %v1260 = vld [vmem:[%s27] sm:$0x1]
    %v1261 = vpack.c.bf16 %v1243, %v1243
    %v1263 = vlaneseq
    %v1264 = vshrl.u32 %v1263, 7
    %v1265 = vsub.s32 0, %v1264
    %v1266 = vrot.slane %v1260, %v1265
    %v1284 = vunpack.c.l.b16 %v1244
    %v1285 = vunpack.c.l.b16 %v1245
    %v1286 = vunpack.c.l.b16 %v1246
    %v1287 = vunpack.c.l.b16 %v1247
    %v1288 = vunpack.c.l.b16 %v1248
    %v1289 = vunpack.c.l.b16 %v1249
    %v1290 = vunpack.c.l.b16 %v1250
    %v1291 = vunpack.c.l.b16 %v1251
    %v1292 = vunpack.c.l.b16 %v1252
    %v1293 = vunpack.c.l.b16 %v1253
    %v1294 = vunpack.c.l.b16 %v1254
    %v1295 = vunpack.c.l.b16 %v1255
    %v1296 = vunpack.c.l.b16 %v1256
    %v1297 = vunpack.c.l.b16 %v1257
    %v1298 = vunpack.c.l.b16 %v1258
    %v1299 = vunpack.c.l.b16 %v1259
    %v1300 = vpack.c.b16 %v1285, %v1284
    %v1301 = vpack.c.b16 %v1287, %v1286
    %v1302 = vpack.c.b16 %v1289, %v1288
    %v1303 = vpack.c.b16 %v1291, %v1290
    %v1304 = vpack.c.b16 %v1293, %v1292
    %v1305 = vpack.c.b16 %v1295, %v1294
    %v1306 = vpack.c.b16 %v1297, %v1296
    %v1307 = vpack.c.b16 %v1299, %v1298
    %1316 = vmatprep.subr.bf16.mxu0 0
    %1317 = vmatpush1.bf16.msra.mxu0 %v1300
    %1318 = vmatprep.subr.bf16.mxu0 0
    %1319 = vmatpush1.bf16.msra.mxu0 %v1301
    %1320 = vmatprep.subr.bf16.mxu0 0
    %1321 = vmatpush1.bf16.msra.mxu0 %v1302
    %1322 = vmatprep.subr.bf16.mxu0 0
    %1323 = vmatpush1.bf16.msra.mxu0 %v1303
    %1324 = vmatprep.subr.bf16.mxu0 0
    %1325 = vmatpush1.bf16.msra.mxu0 %v1304
    %1326 = vmatprep.subr.bf16.mxu0 0
    %1327 = vmatpush1.bf16.msra.mxu0 %v1305
    %1328 = vmatprep.subr.bf16.mxu0 0
    %1329 = vmatpush1.bf16.msra.mxu0 %v1306
    %1330 = vmatprep.subr.bf16.mxu0 0
    %1331 = vmatpush1.bf16.msra.mxu0 %v1307
    %1332 = vmatprep.subr.bf16.mxu0 0
    %1333 = vmatpush1.bf16.msra.mxu0 0
    %1334 = vmatprep.subr.bf16.mxu0 0
    %1335 = vmatpush1.bf16.msra.mxu0 0
    %1336 = vmatprep.subr.bf16.mxu0 0
    %1337 = vmatpush1.bf16.msra.mxu0 0
    %1338 = vmatprep.subr.bf16.mxu0 0
    %1339 = vmatpush1.bf16.msra.mxu0 0
    %1340 = vmatprep.subr.bf16.mxu0 0
    %1341 = vmatpush1.bf16.msra.mxu0 0
    %1342 = vmatprep.subr.bf16.mxu0 0
    %1343 = vmatpush1.bf16.msra.mxu0 0
    %1344 = vmatprep.subr.bf16.mxu0 0
    %1345 = vmatpush1.bf16.msra.mxu0 0
    %1346 = vmatprep.subr.bf16.mxu0 0
    %1347 = vmatpush1.bf16.msra.mxu0 0
    %1348 = vmatprep.mubr.bf16.mxu0 0
    %1349 = vmatmul.mubr.bf16.gmra.mrb[0].mxu0 %v1261
    %v1350 = vpop.f32.mrb[0].mxu0
    %v1351 = vadd.f32 %v1266, %v1350
    %v1352 = vpop.f32.mrb[0].mxu0
    %v1353 = vpop.f32.mrb[0].mxu0
    %v1354 = vpop.f32.mrb[0].mxu0
    %1355 = vdwg.mxu0
    %v1356 = vadd.f32 %v678, %v1351
    %v1357 = vld [vmem:[#allocation9] sm:$0xf]
    %v1358 = vld [vmem:[#allocation9 + $0x4] sm:$0xf]
    %v1359 = vld [vmem:[#allocation9 + $0x8] sm:$0xf]
    %v1360 = vld [vmem:[#allocation9 + $0xc] sm:$0xf]
    %v1361 = vld [vmem:[#allocation9 + $0x10] sm:$0xf]
    %v1362 = vld [vmem:[#allocation9 + $0x14] sm:$0xf]
    %v1363 = vld [vmem:[#allocation9 + $0x18] sm:$0xf]
    %v1364 = vld [vmem:[#allocation9 + $0x1c] sm:$0xf]
    %v1365 = vld [vmem:[#allocation9 + $0x20] sm:$0xf]
    %v1366 = vld [vmem:[#allocation9 + $0x24] sm:$0xf]
    %v1367 = vld [vmem:[#allocation9 + $0x28] sm:$0xf]
    %v1368 = vld [vmem:[#allocation9 + $0x2c] sm:$0xf]
    %v1369 = vld [vmem:[#allocation9 + $0x30] sm:$0xf]
    %v1370 = vld [vmem:[#allocation9 + $0x34] sm:$0xf]
    %v1371 = vld [vmem:[#allocation9 + $0x38] sm:$0xf]
    %v1372 = vld [vmem:[#allocation9 + $0x3c] sm:$0xf]
    %v1373 = vld [vmem:[%s31] sm:$0x1]
    %v1374 = vpack.c.bf16 %v1356, %v1356
    %v1376 = vlaneseq
    %v1377 = vshrl.u32 %v1376, 7
    %v1378 = vsub.s32 0, %v1377
    %v1379 = vrot.slane %v1373, %v1378
    %v1397 = vunpack.c.l.b16 %v1357
    %v1398 = vunpack.c.l.b16 %v1358
    %v1399 = vunpack.c.l.b16 %v1359
    %v1400 = vunpack.c.l.b16 %v1360
    %v1401 = vunpack.c.l.b16 %v1361
    %v1402 = vunpack.c.l.b16 %v1362
    %v1403 = vunpack.c.l.b16 %v1363
    %v1404 = vunpack.c.l.b16 %v1364
    %v1405 = vunpack.c.l.b16 %v1365
    %v1406 = vunpack.c.l.b16 %v1366
    %v1407 = vunpack.c.l.b16 %v1367
    %v1408 = vunpack.c.l.b16 %v1368
    %v1409 = vunpack.c.l.b16 %v1369
    %v1410 = vunpack.c.l.b16 %v1370
    %v1411 = vunpack.c.l.b16 %v1371
    %v1412 = vunpack.c.l.b16 %v1372
    %v1413 = vpack.c.b16 %v1398, %v1397
    %v1414 = vpack.c.b16 %v1400, %v1399
    %v1415 = vpack.c.b16 %v1402, %v1401
    %v1416 = vpack.c.b16 %v1404, %v1403
    %v1417 = vpack.c.b16 %v1406, %v1405
    %v1418 = vpack.c.b16 %v1408, %v1407
    %v1419 = vpack.c.b16 %v1410, %v1409
    %v1420 = vpack.c.b16 %v1412, %v1411
    %1429 = vmatprep.subr.bf16.mxu0 0
    %1430 = vmatpush1.bf16.msra.mxu0 %v1413
    %1431 = vmatprep.subr.bf16.mxu0 0
    %1432 = vmatpush1.bf16.msra.mxu0 %v1414
    %1433 = vmatprep.subr.bf16.mxu0 0
    %1434 = vmatpush1.bf16.msra.mxu0 %v1415
    %1435 = vmatprep.subr.bf16.mxu0 0
    %1436 = vmatpush1.bf16.msra.mxu0 %v1416
    %1437 = vmatprep.subr.bf16.mxu0 0
    %1438 = vmatpush1.bf16.msra.mxu0 %v1417
    %1439 = vmatprep.subr.bf16.mxu0 0
    %1440 = vmatpush1.bf16.msra.mxu0 %v1418
    %1441 = vmatprep.subr.bf16.mxu0 0
    %1442 = vmatpush1.bf16.msra.mxu0 %v1419
    %1443 = vmatprep.subr.bf16.mxu0 0
    %1444 = vmatpush1.bf16.msra.mxu0 %v1420
    %1445 = vmatprep.subr.bf16.mxu0 0
    %1446 = vmatpush1.bf16.msra.mxu0 0
    %1447 = vmatprep.subr.bf16.mxu0 0
    %1448 = vmatpush1.bf16.msra.mxu0 0
    %1449 = vmatprep.subr.bf16.mxu0 0
    %1450 = vmatpush1.bf16.msra.mxu0 0
    %1451 = vmatprep.subr.bf16.mxu0 0
    %1452 = vmatpush1.bf16.msra.mxu0 0
    %1453 = vmatprep.subr.bf16.mxu0 0
    %1454 = vmatpush1.bf16.msra.mxu0 0
    %1455 = vmatprep.subr.bf16.mxu0 0
    %1456 = vmatpush1.bf16.msra.mxu0 0
    %1457 = vmatprep.subr.bf16.mxu0 0
    %1458 = vmatpush1.bf16.msra.mxu0 0
    %1459 = vmatprep.subr.bf16.mxu0 0
    %1460 = vmatpush1.bf16.msra.mxu0 0
    %1461 = vmatprep.mubr.bf16.mxu0 0
    %1462 = vmatmul.mubr.bf16.gmra.mrb[0].mxu0 %v1374
    %v1463 = vpop.f32.mrb[0].mxu0
    %v1464 = vadd.f32 %v1379, %v1463
    %v1465 = vpop.f32.mrb[0].mxu0
    %v1466 = vpop.f32.mrb[0].mxu0
    %v1467 = vpop.f32.mrb[0].mxu0
    %1468 = vdwg.mxu0
    %v1469 = vmax.f32 %v1464, 0.0
    %v1470 = vld [vmem:[#allocation10] sm:$0xf]
    %v1471 = vld [vmem:[#allocation10 + $0x4] sm:$0xf]
    %v1472 = vld [vmem:[#allocation10 + $0x8] sm:$0xf]
    %v1473 = vld [vmem:[#allocation10 + $0xc] sm:$0xf]
    %v1474 = vld [vmem:[#allocation10 + $0x10] sm:$0xf]
    %v1475 = vld [vmem:[#allocation10 + $0x14] sm:$0xf]
    %v1476 = vld [vmem:[#allocation10 + $0x18] sm:$0xf]
    %v1477 = vld [vmem:[#allocation10 + $0x1c] sm:$0xf]
    %v1478 = vld [vmem:[#allocation10 + $0x20] sm:$0xf]
    %v1479 = vld [vmem:[#allocation10 + $0x24] sm:$0xf]
    %v1480 = vld [vmem:[#allocation10 + $0x28] sm:$0xf]
    %v1481 = vld [vmem:[#allocation10 + $0x2c] sm:$0xf]
    %v1482 = vld [vmem:[#allocation10 + $0x30] sm:$0xf]
    %v1483 = vld [vmem:[#allocation10 + $0x34] sm:$0xf]
    %v1484 = vld [vmem:[#allocation10 + $0x38] sm:$0xf]
    %v1485 = vld [vmem:[#allocation10 + $0x3c] sm:$0xf]
    %v1486 = vld [vmem:[%s35] sm:$0x1]
    %v1487 = vpack.c.bf16 %v1469, %v1469
    %v1489 = vlaneseq
    %v1490 = vshrl.u32 %v1489, 7
    %v1491 = vsub.s32 0, %v1490
    %v1492 = vrot.slane %v1486, %v1491
    %v1510 = vunpack.c.l.b16 %v1470
    %v1511 = vunpack.c.l.b16 %v1471
    %v1512 = vunpack.c.l.b16 %v1472
    %v1513 = vunpack.c.l.b16 %v1473
    %v1514 = vunpack.c.l.b16 %v1474
    %v1515 = vunpack.c.l.b16 %v1475
    %v1516 = vunpack.c.l.b16 %v1476
    %v1517 = vunpack.c.l.b16 %v1477
    %v1518 = vunpack.c.l.b16 %v1478
    %v1519 = vunpack.c.l.b16 %v1479
    %v1520 = vunpack.c.l.b16 %v1480
    %v1521 = vunpack.c.l.b16 %v1481
    %v1522 = vunpack.c.l.b16 %v1482
    %v1523 = vunpack.c.l.b16 %v1483
    %v1524 = vunpack.c.l.b16 %v1484
    %v1525 = vunpack.c.l.b16 %v1485
    %v1526 = vpack.c.b16 %v1511, %v1510
    %v1527 = vpack.c.b16 %v1513, %v1512
    %v1528 = vpack.c.b16 %v1515, %v1514
    %v1529 = vpack.c.b16 %v1517, %v1516
    %v1530 = vpack.c.b16 %v1519, %v1518
    %v1531 = vpack.c.b16 %v1521, %v1520
    %v1532 = vpack.c.b16 %v1523, %v1522
    %v1533 = vpack.c.b16 %v1525, %v1524
    %1542 = vmatprep.subr.bf16.mxu0 0
    %1543 = vmatpush1.bf16.msra.mxu0 %v1526
    %1544 = vmatprep.subr.bf16.mxu0 0
    %1545 = vmatpush1.bf16.msra.mxu0 %v1527
    %1546 = vmatprep.subr.bf16.mxu0 0
    %1547 = vmatpush1.bf16.msra.mxu0 %v1528
    %1548 = vmatprep.subr.bf16.mxu0 0
    %1549 = vmatpush1.bf16.msra.mxu0 %v1529
    %1550 = vmatprep.subr.bf16.mxu0 0
    %1551 = vmatpush1.bf16.msra.mxu0 %v1530
    %1552 = vmatprep.subr.bf16.mxu0 0
    %1553 = vmatpush1.bf16.msra.mxu0 %v1531
    %1554 = vmatprep.subr.bf16.mxu0 0
    %1555 = vmatpush1.bf16.msra.mxu0 %v1532
    %1556 = vmatprep.subr.bf16.mxu0 0
    %1557 = vmatpush1.bf16.msra.mxu0 %v1533
    %1558 = vmatprep.subr.bf16.mxu0 0
    %1559 = vmatpush1.bf16.msra.mxu0 0
    %1560 = vmatprep.subr.bf16.mxu0 0
    %1561 = vmatpush1.bf16.msra.mxu0 0
    %1562 = vmatprep.subr.bf16.mxu0 0
    %1563 = vmatpush1.bf16.msra.mxu0 0
    %1564 = vmatprep.subr.bf16.mxu0 0
    %1565 = vmatpush1.bf16.msra.mxu0 0
    %1566 = vmatprep.subr.bf16.mxu0 0
    %1567 = vmatpush1.bf16.msra.mxu0 0
    %1568 = vmatprep.subr.bf16.mxu0 0
    %1569 = vmatpush1.bf16.msra.mxu0 0
    %1570 = vmatprep.subr.bf16.mxu0 0
    %1571 = vmatpush1.bf16.msra.mxu0 0
    %1572 = vmatprep.subr.bf16.mxu0 0
    %1573 = vmatpush1.bf16.msra.mxu0 0
    %1574 = vmatprep.mubr.bf16.mxu0 0
    %1575 = vmatmul.mubr.bf16.gmra.mrb[0].mxu0 %v1487
    %v1576 = vpop.f32.mrb[0].mxu0
    %v1577 = vadd.f32 %v1492, %v1576
    %v1578 = vpop.f32.mrb[0].mxu0
    %v1579 = vpop.f32.mrb[0].mxu0
    %v1580 = vpop.f32.mrb[0].mxu0
    %1581 = vdwg.mxu0
    %v1582 = vmax.f32 %v1577, 0.0
    %v1583 = vld [vmem:[#allocation12] sm:$0xf]
    %v1584 = vld [vmem:[#allocation12 + $0x4] sm:$0xf]
    %v1585 = vld [vmem:[#allocation12 + $0x8] sm:$0xf]
    %v1586 = vld [vmem:[#allocation12 + $0xc] sm:$0xf]
    %v1587 = vld [vmem:[#allocation12 + $0x10] sm:$0xf]
    %v1588 = vld [vmem:[#allocation12 + $0x14] sm:$0xf]
    %v1589 = vld [vmem:[#allocation12 + $0x18] sm:$0xf]
    %v1590 = vld [vmem:[#allocation12 + $0x1c] sm:$0xf]
    %v1591 = vld [vmem:[#allocation12 + $0x20] sm:$0xf]
    %v1592 = vld [vmem:[#allocation12 + $0x24] sm:$0xf]
    %v1593 = vld [vmem:[#allocation12 + $0x28] sm:$0xf]
    %v1594 = vld [vmem:[#allocation12 + $0x2c] sm:$0xf]
    %v1595 = vld [vmem:[#allocation12 + $0x30] sm:$0xf]
    %v1596 = vld [vmem:[#allocation12 + $0x34] sm:$0xf]
    %v1597 = vld [vmem:[#allocation12 + $0x38] sm:$0xf]
    %v1598 = vld [vmem:[#allocation12 + $0x3c] sm:$0xf]
    %v1599 = vld [vmem:[%s39] sm:$0x1]
    %v1600 = vpack.c.bf16 %v1582, %v1582
    %v1602 = vlaneseq
    %v1603 = vshrl.u32 %v1602, 7
    %v1604 = vsub.s32 0, %v1603
    %v1605 = vrot.slane %v1599, %v1604
    %v1623 = vunpack.c.l.b16 %v1583
    %v1624 = vunpack.c.l.b16 %v1584
    %v1625 = vunpack.c.l.b16 %v1585
    %v1626 = vunpack.c.l.b16 %v1586
    %v1627 = vunpack.c.l.b16 %v1587
    %v1628 = vunpack.c.l.b16 %v1588
    %v1629 = vunpack.c.l.b16 %v1589
    %v1630 = vunpack.c.l.b16 %v1590
    %v1631 = vunpack.c.l.b16 %v1591
    %v1632 = vunpack.c.l.b16 %v1592
    %v1633 = vunpack.c.l.b16 %v1593
    %v1634 = vunpack.c.l.b16 %v1594
    %v1635 = vunpack.c.l.b16 %v1595
    %v1636 = vunpack.c.l.b16 %v1596
    %v1637 = vunpack.c.l.b16 %v1597
    %v1638 = vunpack.c.l.b16 %v1598
    %v1639 = vpack.c.b16 %v1624, %v1623
    %v1640 = vpack.c.b16 %v1626, %v1625
    %v1641 = vpack.c.b16 %v1628, %v1627
    %v1642 = vpack.c.b16 %v1630, %v1629
    %v1643 = vpack.c.b16 %v1632, %v1631
    %v1644 = vpack.c.b16 %v1634, %v1633
    %v1645 = vpack.c.b16 %v1636, %v1635
    %v1646 = vpack.c.b16 %v1638, %v1637
    %1655 = vmatprep.subr.bf16.mxu0 0
    %1656 = vmatpush1.bf16.msra.mxu0 %v1639
    %1657 = vmatprep.subr.bf16.mxu0 0
    %1658 = vmatpush1.bf16.msra.mxu0 %v1640
    %1659 = vmatprep.subr.bf16.mxu0 0
    %1660 = vmatpush1.bf16.msra.mxu0 %v1641
    %1661 = vmatprep.subr.bf16.mxu0 0
    %1662 = vmatpush1.bf16.msra.mxu0 %v1642
    %1663 = vmatprep.subr.bf16.mxu0 0
    %1664 = vmatpush1.bf16.msra.mxu0 %v1643
    %1665 = vmatprep.subr.bf16.mxu0 0
    %1666 = vmatpush1.bf16.msra.mxu0 %v1644
    %1667 = vmatprep.subr.bf16.mxu0 0
    %1668 = vmatpush1.bf16.msra.mxu0 %v1645
    %1669 = vmatprep.subr.bf16.mxu0 0
    %1670 = vmatpush1.bf16.msra.mxu0 %v1646
    %1671 = vmatprep.subr.bf16.mxu0 0
    %1672 = vmatpush1.bf16.msra.mxu0 0
    %1673 = vmatprep.subr.bf16.mxu0 0
    %1674 = vmatpush1.bf16.msra.mxu0 0
    %1675 = vmatprep.subr.bf16.mxu0 0
    %1676 = vmatpush1.bf16.msra.mxu0 0
    %1677 = vmatprep.subr.bf16.mxu0 0
    %1678 = vmatpush1.bf16.msra.mxu0 0
    %1679 = vmatprep.subr.bf16.mxu0 0
    %1680 = vmatpush1.bf16.msra.mxu0 0
    %1681 = vmatprep.subr.bf16.mxu0 0
    %1682 = vmatpush1.bf16.msra.mxu0 0
    %1683 = vmatprep.subr.bf16.mxu0 0
    %1684 = vmatpush1.bf16.msra.mxu0 0
    %1685 = vmatprep.subr.bf16.mxu0 0
    %1686 = vmatpush1.bf16.msra.mxu0 0
    %1687 = vmatprep.mubr.bf16.mxu0 0
    %1688 = vmatmul.mubr.bf16.gmra.mrb[0].mxu0 %v1600
    %v1689 = vpop.f32.mrb[0].mxu0
    %v1690 = vadd.f32 %v1605, %v1689
    %v1691 = vpop.f32.mrb[0].mxu0
    %v1692 = vpop.f32.mrb[0].mxu0
    %v1693 = vpop.f32.mrb[0].mxu0
    %1694 = vdwg.mxu0
    %v1695 = vmax.f32 %v1690, 0.0
    %v1696 = vld [vmem:[#allocation13] sm:$0xf]
    %v1697 = vld [vmem:[#allocation13 + $0x4] sm:$0xf]
    %v1698 = vld [vmem:[#allocation13 + $0x8] sm:$0xf]
    %v1699 = vld [vmem:[#allocation13 + $0xc] sm:$0xf]
    %v1700 = vld [vmem:[#allocation13 + $0x10] sm:$0xf]
    %v1701 = vld [vmem:[#allocation13 + $0x14] sm:$0xf]
    %v1702 = vld [vmem:[#allocation13 + $0x18] sm:$0xf]
    %v1703 = vld [vmem:[#allocation13 + $0x1c] sm:$0xf]
    %v1704 = vld [vmem:[#allocation13 + $0x20] sm:$0xf]
    %v1705 = vld [vmem:[#allocation13 + $0x24] sm:$0xf]
    %v1706 = vld [vmem:[#allocation13 + $0x28] sm:$0xf]
    %v1707 = vld [vmem:[#allocation13 + $0x2c] sm:$0xf]
    %v1708 = vld [vmem:[#allocation13 + $0x30] sm:$0xf]
    %v1709 = vld [vmem:[#allocation13 + $0x34] sm:$0xf]
    %v1710 = vld [vmem:[#allocation13 + $0x38] sm:$0xf]
    %v1711 = vld [vmem:[#allocation13 + $0x3c] sm:$0xf]
    %v1712 = vld [vmem:[%s43] sm:$0x1]
    %v1713 = vpack.c.bf16 %v1695, %v1695
    %v1715 = vlaneseq
    %v1716 = vshrl.u32 %v1715, 7
    %v1717 = vsub.s32 0, %v1716
    %v1718 = vrot.slane %v1712, %v1717
    %v1736 = vunpack.c.l.b16 %v1696
    %v1737 = vunpack.c.l.b16 %v1697
    %v1738 = vunpack.c.l.b16 %v1698
    %v1739 = vunpack.c.l.b16 %v1699
    %v1740 = vunpack.c.l.b16 %v1700
    %v1741 = vunpack.c.l.b16 %v1701
    %v1742 = vunpack.c.l.b16 %v1702
    %v1743 = vunpack.c.l.b16 %v1703
    %v1744 = vunpack.c.l.b16 %v1704
    %v1745 = vunpack.c.l.b16 %v1705
    %v1746 = vunpack.c.l.b16 %v1706
    %v1747 = vunpack.c.l.b16 %v1707
    %v1748 = vunpack.c.l.b16 %v1708
    %v1749 = vunpack.c.l.b16 %v1709
    %v1750 = vunpack.c.l.b16 %v1710
    %v1751 = vunpack.c.l.b16 %v1711
    %v1752 = vpack.c.b16 %v1737, %v1736
    %v1753 = vpack.c.b16 %v1739, %v1738
    %v1754 = vpack.c.b16 %v1741, %v1740
    %v1755 = vpack.c.b16 %v1743, %v1742
    %v1756 = vpack.c.b16 %v1745, %v1744
    %v1757 = vpack.c.b16 %v1747, %v1746
    %v1758 = vpack.c.b16 %v1749, %v1748
    %v1759 = vpack.c.b16 %v1751, %v1750
    %1768 = vmatprep.subr.bf16.mxu0 0
    %1769 = vmatpush1.bf16.msra.mxu0 %v1752
    %1770 = vmatprep.subr.bf16.mxu0 0
    %1771 = vmatpush1.bf16.msra.mxu0 %v1753
    %1772 = vmatprep.subr.bf16.mxu0 0
    %1773 = vmatpush1.bf16.msra.mxu0 %v1754
    %1774 = vmatprep.subr.bf16.mxu0 0
    %1775 = vmatpush1.bf16.msra.mxu0 %v1755
    %1776 = vmatprep.subr.bf16.mxu0 0
    %1777 = vmatpush1.bf16.msra.mxu0 %v1756
    %1778 = vmatprep.subr.bf16.mxu0 0
    %1779 = vmatpush1.bf16.msra.mxu0 %v1757
    %1780 = vmatprep.subr.bf16.mxu0 0
    %1781 = vmatpush1.bf16.msra.mxu0 %v1758
    %1782 = vmatprep.subr.bf16.mxu0 0
    %1783 = vmatpush1.bf16.msra.mxu0 %v1759
    %1784 = vmatprep.subr.bf16.mxu0 0
    %1785 = vmatpush1.bf16.msra.mxu0 0
    %1786 = vmatprep.subr.bf16.mxu0 0
    %1787 = vmatpush1.bf16.msra.mxu0 0
    %1788 = vmatprep.subr.bf16.mxu0 0
    %1789 = vmatpush1.bf16.msra.mxu0 0
    %1790 = vmatprep.subr.bf16.mxu0 0
    %1791 = vmatpush1.bf16.msra.mxu0 0
    %1792 = vmatprep.subr.bf16.mxu0 0
    %1793 = vmatpush1.bf16.msra.mxu0 0
    %1794 = vmatprep.subr.bf16.mxu0 0
    %1795 = vmatpush1.bf16.msra.mxu0 0
    %1796 = vmatprep.subr.bf16.mxu0 0
    %1797 = vmatpush1.bf16.msra.mxu0 0
    %1798 = vmatprep.subr.bf16.mxu0 0
    %1799 = vmatpush1.bf16.msra.mxu0 0
    %1800 = vmatprep.mubr.bf16.mxu0 0
    %1801 = vmatmul.mubr.bf16.gmra.mrb[0].mxu0 %v1713
    %v1802 = vpop.f32.mrb[0].mxu0
    %v1803 = vadd.f32 %v1718, %v1802
    %v1804 = vpop.f32.mrb[0].mxu0
    %v1805 = vpop.f32.mrb[0].mxu0
    %v1806 = vpop.f32.mrb[0].mxu0
    %1807 = vdwg.mxu0
    %v1808 = vmax.f32 %v1803, 0.0
    %v1809 = vld [vmem:[#allocation15] sm:$0xf]
    %v1810 = vld [vmem:[#allocation15 + $0x4] sm:$0xf]
    %v1811 = vld [vmem:[#allocation15 + $0x8] sm:$0xf]
    %v1812 = vld [vmem:[#allocation15 + $0xc] sm:$0xf]
    %v1813 = vld [vmem:[#allocation15 + $0x10] sm:$0xf]
    %v1814 = vld [vmem:[#allocation15 + $0x14] sm:$0xf]
    %v1815 = vld [vmem:[#allocation15 + $0x18] sm:$0xf]
    %v1816 = vld [vmem:[#allocation15 + $0x1c] sm:$0xf]
    %v1817 = vld [vmem:[#allocation15 + $0x20] sm:$0xf]
    %v1818 = vld [vmem:[#allocation15 + $0x24] sm:$0xf]
    %v1819 = vld [vmem:[#allocation15 + $0x28] sm:$0xf]
    %v1820 = vld [vmem:[#allocation15 + $0x2c] sm:$0xf]
    %v1821 = vld [vmem:[#allocation15 + $0x30] sm:$0xf]
    %v1822 = vld [vmem:[#allocation15 + $0x34] sm:$0xf]
    %v1823 = vld [vmem:[#allocation15 + $0x38] sm:$0xf]
    %v1824 = vld [vmem:[#allocation15 + $0x3c] sm:$0xf]
    %v1825 = vld [vmem:[%s47] sm:$0x1]
    %v1826 = vpack.c.bf16 %v1808, %v1808
    %v1828 = vlaneseq
    %v1829 = vshrl.u32 %v1828, 7
    %v1830 = vsub.s32 0, %v1829
    %v1831 = vrot.slane %v1825, %v1830
    %v1849 = vunpack.c.l.b16 %v1809
    %v1850 = vunpack.c.l.b16 %v1810
    %v1851 = vunpack.c.l.b16 %v1811
    %v1852 = vunpack.c.l.b16 %v1812
    %v1853 = vunpack.c.l.b16 %v1813
    %v1854 = vunpack.c.l.b16 %v1814
    %v1855 = vunpack.c.l.b16 %v1815
    %v1856 = vunpack.c.l.b16 %v1816
    %v1857 = vunpack.c.l.b16 %v1817
    %v1858 = vunpack.c.l.b16 %v1818
    %v1859 = vunpack.c.l.b16 %v1819
    %v1860 = vunpack.c.l.b16 %v1820
    %v1861 = vunpack.c.l.b16 %v1821
    %v1862 = vunpack.c.l.b16 %v1822
    %v1863 = vunpack.c.l.b16 %v1823
    %v1864 = vunpack.c.l.b16 %v1824
    %v1865 = vpack.c.b16 %v1850, %v1849
    %v1866 = vpack.c.b16 %v1852, %v1851
    %v1867 = vpack.c.b16 %v1854, %v1853
    %v1868 = vpack.c.b16 %v1856, %v1855
    %v1869 = vpack.c.b16 %v1858, %v1857
    %v1870 = vpack.c.b16 %v1860, %v1859
    %v1871 = vpack.c.b16 %v1862, %v1861
    %v1872 = vpack.c.b16 %v1864, %v1863
    %1881 = vmatprep.subr.bf16.mxu0 0
    %1882 = vmatpush1.bf16.msra.mxu0 %v1865
    %1883 = vmatprep.subr.bf16.mxu0 0
    %1884 = vmatpush1.bf16.msra.mxu0 %v1866
    %1885 = vmatprep.subr.bf16.mxu0 0
    %1886 = vmatpush1.bf16.msra.mxu0 %v1867
    %1887 = vmatprep.subr.bf16.mxu0 0
    %1888 = vmatpush1.bf16.msra.mxu0 %v1868
    %1889 = vmatprep.subr.bf16.mxu0 0
    %1890 = vmatpush1.bf16.msra.mxu0 %v1869
    %1891 = vmatprep.subr.bf16.mxu0 0
    %1892 = vmatpush1.bf16.msra.mxu0 %v1870
    %1893 = vmatprep.subr.bf16.mxu0 0
    %1894 = vmatpush1.bf16.msra.mxu0 %v1871
    %1895 = vmatprep.subr.bf16.mxu0 0
    %1896 = vmatpush1.bf16.msra.mxu0 %v1872
    %1897 = vmatprep.subr.bf16.mxu0 0
    %1898 = vmatpush1.bf16.msra.mxu0 0
    %1899 = vmatprep.subr.bf16.mxu0 0
    %1900 = vmatpush1.bf16.msra.mxu0 0
    %1901 = vmatprep.subr.bf16.mxu0 0
    %1902 = vmatpush1.bf16.msra.mxu0 0
    %1903 = vmatprep.subr.bf16.mxu0 0
    %1904 = vmatpush1.bf16.msra.mxu0 0
    %1905 = vmatprep.subr.bf16.mxu0 0
    %1906 = vmatpush1.bf16.msra.mxu0 0
    %1907 = vmatprep.subr.bf16.mxu0 0
    %1908 = vmatpush1.bf16.msra.mxu0 0
    %1909 = vmatprep.subr.bf16.mxu0 0
    %1910 = vmatpush1.bf16.msra.mxu0 0
    %1911 = vmatprep.subr.bf16.mxu0 0
    %1912 = vmatpush1.bf16.msra.mxu0 0
    %1913 = vmatprep.mubr.bf16.mxu0 0
    %1914 = vmatmul.mubr.bf16.gmra.mrb[0].mxu0 %v1826
    %v1915 = vpop.f32.mrb[0].mxu0
    %v1916 = vadd.f32 %v1831, %v1915
    %v1917 = vpop.f32.mrb[0].mxu0
    %v1918 = vpop.f32.mrb[0].mxu0
    %v1919 = vpop.f32.mrb[0].mxu0
    %1920 = vdwg.mxu0
    %v1921 = vmax.f32 %v1916, 0.0
    %v1922 = vld [vmem:[#allocation16] sm:$0xf]
    %v1923 = vld [vmem:[#allocation16 + $0x4] sm:$0xf]
    %v1924 = vld [vmem:[#allocation16 + $0x8] sm:$0xf]
    %v1925 = vld [vmem:[#allocation16 + $0xc] sm:$0xf]
    %v1926 = vld [vmem:[#allocation16 + $0x10] sm:$0xf]
    %v1927 = vld [vmem:[#allocation16 + $0x14] sm:$0xf]
    %v1928 = vld [vmem:[#allocation16 + $0x18] sm:$0xf]
    %v1929 = vld [vmem:[#allocation16 + $0x1c] sm:$0xf]
    %v1930 = vld [vmem:[#allocation16 + $0x20] sm:$0xf]
    %v1931 = vld [vmem:[#allocation16 + $0x24] sm:$0xf]
    %v1932 = vld [vmem:[#allocation16 + $0x28] sm:$0xf]
    %v1933 = vld [vmem:[#allocation16 + $0x2c] sm:$0xf]
    %v1934 = vld [vmem:[#allocation16 + $0x30] sm:$0xf]
    %v1935 = vld [vmem:[#allocation16 + $0x34] sm:$0xf]
    %v1936 = vld [vmem:[#allocation16 + $0x38] sm:$0xf]
    %v1937 = vld [vmem:[#allocation16 + $0x3c] sm:$0xf]
    %v1938 = vld [vmem:[%s51] sm:$0x1]
    %v1939 = vpack.c.bf16 %v1921, %v1921
    %v1941 = vlaneseq
    %v1942 = vshrl.u32 %v1941, 7
    %v1943 = vsub.s32 0, %v1942
    %v1944 = vrot.slane %v1938, %v1943
    %v1962 = vunpack.c.l.b16 %v1922
    %v1963 = vunpack.c.l.b16 %v1923
    %v1964 = vunpack.c.l.b16 %v1924
    %v1965 = vunpack.c.l.b16 %v1925
    %v1966 = vunpack.c.l.b16 %v1926
    %v1967 = vunpack.c.l.b16 %v1927
    %v1968 = vunpack.c.l.b16 %v1928
    %v1969 = vunpack.c.l.b16 %v1929
    %v1970 = vunpack.c.l.b16 %v1930
    %v1971 = vunpack.c.l.b16 %v1931
    %v1972 = vunpack.c.l.b16 %v1932
    %v1973 = vunpack.c.l.b16 %v1933
    %v1974 = vunpack.c.l.b16 %v1934
    %v1975 = vunpack.c.l.b16 %v1935
    %v1976 = vunpack.c.l.b16 %v1936
    %v1977 = vunpack.c.l.b16 %v1937
    %v1978 = vpack.c.b16 %v1963, %v1962
    %v1979 = vpack.c.b16 %v1965, %v1964
    %v1980 = vpack.c.b16 %v1967, %v1966
    %v1981 = vpack.c.b16 %v1969, %v1968
    %v1982 = vpack.c.b16 %v1971, %v1970
    %v1983 = vpack.c.b16 %v1973, %v1972
    %v1984 = vpack.c.b16 %v1975, %v1974
    %v1985 = vpack.c.b16 %v1977, %v1976
    %1994 = vmatprep.subr.bf16.mxu0 0
    %1995 = vmatpush1.bf16.msra.mxu0 %v1978
    %1996 = vmatprep.subr.bf16.mxu0 0
    %1997 = vmatpush1.bf16.msra.mxu0 %v1979
    %1998 = vmatprep.subr.bf16.mxu0 0
    %1999 = vmatpush1.bf16.msra.mxu0 %v1980
    %2000 = vmatprep.subr.bf16.mxu0 0
    %2001 = vmatpush1.bf16.msra.mxu0 %v1981
    %2002 = vmatprep.subr.bf16.mxu0 0
    %2003 = vmatpush1.bf16.msra.mxu0 %v1982
    %2004 = vmatprep.subr.bf16.mxu0 0
    %2005 = vmatpush1.bf16.msra.mxu0 %v1983
    %2006 = vmatprep.subr.bf16.mxu0 0
    %2007 = vmatpush1.bf16.msra.mxu0 %v1984
    %2008 = vmatprep.subr.bf16.mxu0 0
    %2009 = vmatpush1.bf16.msra.mxu0 %v1985
    %2010 = vmatprep.subr.bf16.mxu0 0
    %2011 = vmatpush1.bf16.msra.mxu0 0
    %2012 = vmatprep.subr.bf16.mxu0 0
    %2013 = vmatpush1.bf16.msra.mxu0 0
    %2014 = vmatprep.subr.bf16.mxu0 0
    %2015 = vmatpush1.bf16.msra.mxu0 0
    %2016 = vmatprep.subr.bf16.mxu0 0
    %2017 = vmatpush1.bf16.msra.mxu0 0
    %2018 = vmatprep.subr.bf16.mxu0 0
    %2019 = vmatpush1.bf16.msra.mxu0 0
    %2020 = vmatprep.subr.bf16.mxu0 0
    %2021 = vmatpush1.bf16.msra.mxu0 0
    %2022 = vmatprep.subr.bf16.mxu0 0
    %2023 = vmatpush1.bf16.msra.mxu0 0
    %2024 = vmatprep.subr.bf16.mxu0 0
    %2025 = vmatpush1.bf16.msra.mxu0 0
    %2026 = vmatprep.mubr.bf16.mxu0 0
    %2027 = vmatmul.mubr.bf16.gmra.mrb[0].mxu0 %v1939
    %v2028 = vpop.f32.mrb[0].mxu0
    %v2029 = vadd.f32 %v1944, %v2028
    %v2030 = vpop.f32.mrb[0].mxu0
    %v2031 = vpop.f32.mrb[0].mxu0
    %v2032 = vpop.f32.mrb[0].mxu0
    %2033 = vdwg.mxu0
    %v2034 = vadd.f32 %v677, %v2029
    %v2035 = vld [vmem:[#allocation18] sm:$0xf]
    %v2036 = vld [vmem:[#allocation18 + $0x4] sm:$0xf]
    %v2037 = vld [vmem:[#allocation18 + $0x8] sm:$0xf]
    %v2038 = vld [vmem:[#allocation18 + $0xc] sm:$0xf]
    %v2039 = vld [vmem:[#allocation18 + $0x10] sm:$0xf]
    %v2040 = vld [vmem:[#allocation18 + $0x14] sm:$0xf]
    %v2041 = vld [vmem:[#allocation18 + $0x18] sm:$0xf]
    %v2042 = vld [vmem:[#allocation18 + $0x1c] sm:$0xf]
    %v2043 = vld [vmem:[#allocation18 + $0x20] sm:$0xf]
    %v2044 = vld [vmem:[#allocation18 + $0x24] sm:$0xf]
    %v2045 = vld [vmem:[#allocation18 + $0x28] sm:$0xf]
    %v2046 = vld [vmem:[#allocation18 + $0x2c] sm:$0xf]
    %v2047 = vld [vmem:[#allocation18 + $0x30] sm:$0xf]
    %v2048 = vld [vmem:[#allocation18 + $0x34] sm:$0xf]
    %v2049 = vld [vmem:[#allocation18 + $0x38] sm:$0xf]
    %v2050 = vld [vmem:[#allocation18 + $0x3c] sm:$0xf]
    %v2051 = vld [vmem:[#allocation19] sm:$0x1]
    %v2053 = vlaneseq
    %v2054 = vshrl.u32 %v2053, 7
    %v2055 = vsub.s32 0, %v2054
    %v2056 = vrot.slane %v2051, %v2055
    %v2074 = vunpack.c.l.b16 %v2035
    %v2075 = vunpack.c.l.b16 %v2036
    %v2076 = vunpack.c.l.b16 %v2037
    %v2077 = vunpack.c.l.b16 %v2038
    %v2078 = vunpack.c.l.b16 %v2039
    %v2079 = vunpack.c.l.b16 %v2040
    %v2080 = vunpack.c.l.b16 %v2041
    %v2081 = vunpack.c.l.b16 %v2042
    %v2082 = vunpack.c.l.b16 %v2043
    %v2083 = vunpack.c.l.b16 %v2044
    %v2084 = vunpack.c.l.b16 %v2045
    %v2085 = vunpack.c.l.b16 %v2046
    %v2086 = vunpack.c.l.b16 %v2047
    %v2087 = vunpack.c.l.b16 %v2048
    %v2088 = vunpack.c.l.b16 %v2049
    %v2089 = vunpack.c.l.b16 %v2050
    %v2090 = vpack.c.b16 %v2075, %v2074
    %v2091 = vpack.c.b16 %v2077, %v2076
    %v2092 = vpack.c.b16 %v2079, %v2078
    %v2093 = vpack.c.b16 %v2081, %v2080
    %v2094 = vpack.c.b16 %v2083, %v2082
    %v2095 = vpack.c.b16 %v2085, %v2084
    %v2096 = vpack.c.b16 %v2087, %v2086
    %v2097 = vpack.c.b16 %v2089, %v2088
    %2106 = vmatprep.subr.bf16.mxu0 0
    %2107 = vmatpush1.bf16.msra.mxu0 %v2090
    %2108 = vmatprep.subr.bf16.mxu0 0
    %2109 = vmatpush1.bf16.msra.mxu0 %v2091
    %2110 = vmatprep.subr.bf16.mxu0 0
    %2111 = vmatpush1.bf16.msra.mxu0 %v2092
    %2112 = vmatprep.subr.bf16.mxu0 0
    %2113 = vmatpush1.bf16.msra.mxu0 %v2093
    %2114 = vmatprep.subr.bf16.mxu0 0
    %2115 = vmatpush1.bf16.msra.mxu0 %v2094
    %2116 = vmatprep.subr.bf16.mxu0 0
    %2117 = vmatpush1.bf16.msra.mxu0 %v2095
    %2118 = vmatprep.subr.bf16.mxu0 0
    %2119 = vmatpush1.bf16.msra.mxu0 %v2096
    %2120 = vmatprep.subr.bf16.mxu0 0
    %2121 = vmatpush1.bf16.msra.mxu0 %v2097
    %2122 = vmatprep.subr.bf16.mxu0 0
    %2123 = vmatpush1.bf16.msra.mxu0 0
    %2124 = vmatprep.subr.bf16.mxu0 0
    %2125 = vmatpush1.bf16.msra.mxu0 0
    %2126 = vmatprep.subr.bf16.mxu0 0
    %2127 = vmatpush1.bf16.msra.mxu0 0
    %2128 = vmatprep.subr.bf16.mxu0 0
    %2129 = vmatpush1.bf16.msra.mxu0 0
    %2130 = vmatprep.subr.bf16.mxu0 0
    %2131 = vmatpush1.bf16.msra.mxu0 0
    %2132 = vmatprep.subr.bf16.mxu0 0
    %2133 = vmatpush1.bf16.msra.mxu0 0
    %2134 = vmatprep.subr.bf16.mxu0 0
    %2135 = vmatpush1.bf16.msra.mxu0 0
    %2136 = vmatprep.subr.bf16.mxu0 0
    %2137 = vmatpush1.bf16.msra.mxu0 0
    %2138 = vmatprep.mubr.bf16.mxu0 0
    %2139 = vmatmul.mubr.bf16.gmra.mrb[0].mxu0 %v1374
    %v2140 = vpop.f32.mrb[0].mxu0
    %v2141 = vadd.f32 %v2056, %v2140
    %v2142 = vpop.f32.mrb[0].mxu0
    %v2143 = vpop.f32.mrb[0].mxu0
    %v2144 = vpop.f32.mrb[0].mxu0
    %2145 = vdwg.mxu0
    %v2146 = vmax.f32 %v2141, 0.0
    %v2147 = vld [vmem:[#allocation21] sm:$0xf]
    %v2148 = vld [vmem:[#allocation21 + $0x4] sm:$0xf]
    %v2149 = vld [vmem:[#allocation21 + $0x8] sm:$0xf]
    %v2150 = vld [vmem:[#allocation21 + $0xc] sm:$0xf]
    %v2151 = vld [vmem:[#allocation21 + $0x10] sm:$0xf]
    %v2152 = vld [vmem:[#allocation21 + $0x14] sm:$0xf]
    %v2153 = vld [vmem:[#allocation21 + $0x18] sm:$0xf]
    %v2154 = vld [vmem:[#allocation21 + $0x1c] sm:$0xf]
    %v2155 = vld [vmem:[#allocation21 + $0x20] sm:$0xf]
    %v2156 = vld [vmem:[#allocation21 + $0x24] sm:$0xf]
    %v2157 = vld [vmem:[#allocation21 + $0x28] sm:$0xf]
    %v2158 = vld [vmem:[#allocation21 + $0x2c] sm:$0xf]
    %v2159 = vld [vmem:[#allocation21 + $0x30] sm:$0xf]
    %v2160 = vld [vmem:[#allocation21 + $0x34] sm:$0xf]
    %v2161 = vld [vmem:[#allocation21 + $0x38] sm:$0xf]
    %v2162 = vld [vmem:[#allocation21 + $0x3c] sm:$0xf]
    %v2163 = vld [vmem:[#allocation22] sm:$0x1]
    %v2164 = vpack.c.bf16 %v2146, %v2146
    %v2166 = vlaneseq
    %v2167 = vshrl.u32 %v2166, 7
    %v2168 = vsub.s32 0, %v2167
    %v2169 = vrot.slane %v2163, %v2168
    %v2187 = vunpack.c.l.b16 %v2147
    %v2188 = vunpack.c.l.b16 %v2148
    %v2189 = vunpack.c.l.b16 %v2149
    %v2190 = vunpack.c.l.b16 %v2150
    %v2191 = vunpack.c.l.b16 %v2151
    %v2192 = vunpack.c.l.b16 %v2152
    %v2193 = vunpack.c.l.b16 %v2153
    %v2194 = vunpack.c.l.b16 %v2154
    %v2195 = vunpack.c.l.b16 %v2155
    %v2196 = vunpack.c.l.b16 %v2156
    %v2197 = vunpack.c.l.b16 %v2157
    %v2198 = vunpack.c.l.b16 %v2158
    %v2199 = vunpack.c.l.b16 %v2159
    %v2200 = vunpack.c.l.b16 %v2160
    %v2201 = vunpack.c.l.b16 %v2161
    %v2202 = vunpack.c.l.b16 %v2162
    %v2203 = vpack.c.b16 %v2188, %v2187
    %v2204 = vpack.c.b16 %v2190, %v2189
    %v2205 = vpack.c.b16 %v2192, %v2191
    %v2206 = vpack.c.b16 %v2194, %v2193
    %v2207 = vpack.c.b16 %v2196, %v2195
    %v2208 = vpack.c.b16 %v2198, %v2197
    %v2209 = vpack.c.b16 %v2200, %v2199
    %v2210 = vpack.c.b16 %v2202, %v2201
    %2219 = vmatprep.subr.bf16.mxu0 0
    %2220 = vmatpush1.bf16.msra.mxu0 %v2203
    %2221 = vmatprep.subr.bf16.mxu0 0
    %2222 = vmatpush1.bf16.msra.mxu0 %v2204
    %2223 = vmatprep.subr.bf16.mxu0 0
    %2224 = vmatpush1.bf16.msra.mxu0 %v2205
    %2225 = vmatprep.subr.bf16.mxu0 0
    %2226 = vmatpush1.bf16.msra.mxu0 %v2206
    %2227 = vmatprep.subr.bf16.mxu0 0
    %2228 = vmatpush1.bf16.msra.mxu0 %v2207
    %2229 = vmatprep.subr.bf16.mxu0 0
    %2230 = vmatpush1.bf16.msra.mxu0 %v2208
    %2231 = vmatprep.subr.bf16.mxu0 0
    %2232 = vmatpush1.bf16.msra.mxu0 %v2209
    %2233 = vmatprep.subr.bf16.mxu0 0
    %2234 = vmatpush1.bf16.msra.mxu0 %v2210
    %2235 = vmatprep.subr.bf16.mxu0 0
    %2236 = vmatpush1.bf16.msra.mxu0 0
    %2237 = vmatprep.subr.bf16.mxu0 0
    %2238 = vmatpush1.bf16.msra.mxu0 0
    %2239 = vmatprep.subr.bf16.mxu0 0
    %2240 = vmatpush1.bf16.msra.mxu0 0
    %2241 = vmatprep.subr.bf16.mxu0 0
    %2242 = vmatpush1.bf16.msra.mxu0 0
    %2243 = vmatprep.subr.bf16.mxu0 0
    %2244 = vmatpush1.bf16.msra.mxu0 0
    %2245 = vmatprep.subr.bf16.mxu0 0
    %2246 = vmatpush1.bf16.msra.mxu0 0
    %2247 = vmatprep.subr.bf16.mxu0 0
    %2248 = vmatpush1.bf16.msra.mxu0 0
    %2249 = vmatprep.subr.bf16.mxu0 0
    %2250 = vmatpush1.bf16.msra.mxu0 0
    %2251 = vmatprep.mubr.bf16.mxu0 0
    %2252 = vmatmul.mubr.bf16.gmra.mrb[0].mxu0 %v2164
    %v2253 = vpop.f32.mrb[0].mxu0
    %v2254 = vadd.f32 %v2169, %v2253
    %v2255 = vpop.f32.mrb[0].mxu0
    %v2256 = vpop.f32.mrb[0].mxu0
    %v2257 = vpop.f32.mrb[0].mxu0
    %2258 = vdwg.mxu0
    %v2259 = vmax.f32 %v2254, 0.0
    %v2260 = vld [vmem:[#allocation24] sm:$0xf]
    %v2261 = vld [vmem:[#allocation24 + $0x4] sm:$0xf]
    %v2262 = vld [vmem:[#allocation24 + $0x8] sm:$0xf]
    %v2263 = vld [vmem:[#allocation24 + $0xc] sm:$0xf]
    %v2264 = vld [vmem:[#allocation24 + $0x10] sm:$0xf]
    %v2265 = vld [vmem:[#allocation24 + $0x14] sm:$0xf]
    %v2266 = vld [vmem:[#allocation24 + $0x18] sm:$0xf]
    %v2267 = vld [vmem:[#allocation24 + $0x1c] sm:$0xf]
    %v2268 = vld [vmem:[#allocation24 + $0x20] sm:$0xf]
    %v2269 = vld [vmem:[#allocation24 + $0x24] sm:$0xf]
    %v2270 = vld [vmem:[#allocation24 + $0x28] sm:$0xf]
    %v2271 = vld [vmem:[#allocation24 + $0x2c] sm:$0xf]
    %v2272 = vld [vmem:[#allocation24 + $0x30] sm:$0xf]
    %v2273 = vld [vmem:[#allocation24 + $0x34] sm:$0xf]
    %v2274 = vld [vmem:[#allocation24 + $0x38] sm:$0xf]
    %v2275 = vld [vmem:[#allocation24 + $0x3c] sm:$0xf]
    %v2276 = vld [vmem:[#allocation25] sm:$0x1]
    %v2277 = vpack.c.bf16 %v2259, %v2259
    %v2279 = vlaneseq
    %v2280 = vshrl.u32 %v2279, 7
    %v2281 = vsub.s32 0, %v2280
    %v2282 = vrot.slane %v2276, %v2281
    %v2300 = vunpack.c.l.b16 %v2260
    %v2301 = vunpack.c.l.b16 %v2261
    %v2302 = vunpack.c.l.b16 %v2262
    %v2303 = vunpack.c.l.b16 %v2263
    %v2304 = vunpack.c.l.b16 %v2264
    %v2305 = vunpack.c.l.b16 %v2265
    %v2306 = vunpack.c.l.b16 %v2266
    %v2307 = vunpack.c.l.b16 %v2267
    %v2308 = vunpack.c.l.b16 %v2268
    %v2309 = vunpack.c.l.b16 %v2269
    %v2310 = vunpack.c.l.b16 %v2270
    %v2311 = vunpack.c.l.b16 %v2271
    %v2312 = vunpack.c.l.b16 %v2272
    %v2313 = vunpack.c.l.b16 %v2273
    %v2314 = vunpack.c.l.b16 %v2274
    %v2315 = vunpack.c.l.b16 %v2275
    %v2316 = vpack.c.b16 %v2301, %v2300
    %v2317 = vpack.c.b16 %v2303, %v2302
    %v2318 = vpack.c.b16 %v2305, %v2304
    %v2319 = vpack.c.b16 %v2307, %v2306
    %v2320 = vpack.c.b16 %v2309, %v2308
    %v2321 = vpack.c.b16 %v2311, %v2310
    %v2322 = vpack.c.b16 %v2313, %v2312
    %v2323 = vpack.c.b16 %v2315, %v2314
    %2332 = vmatprep.subr.bf16.mxu0 0
    %2333 = vmatpush1.bf16.msra.mxu0 %v2316
    %2334 = vmatprep.subr.bf16.mxu0 0
    %2335 = vmatpush1.bf16.msra.mxu0 %v2317
    %2336 = vmatprep.subr.bf16.mxu0 0
    %2337 = vmatpush1.bf16.msra.mxu0 %v2318
    %2338 = vmatprep.subr.bf16.mxu0 0
    %2339 = vmatpush1.bf16.msra.mxu0 %v2319
    %2340 = vmatprep.subr.bf16.mxu0 0
    %2341 = vmatpush1.bf16.msra.mxu0 %v2320
    %2342 = vmatprep.subr.bf16.mxu0 0
    %2343 = vmatpush1.bf16.msra.mxu0 %v2321
    %2344 = vmatprep.subr.bf16.mxu0 0
    %2345 = vmatpush1.bf16.msra.mxu0 %v2322
    %2346 = vmatprep.subr.bf16.mxu0 0
    %2347 = vmatpush1.bf16.msra.mxu0 %v2323
    %2348 = vmatprep.subr.bf16.mxu0 0
    %2349 = vmatpush1.bf16.msra.mxu0 0
    %2350 = vmatprep.subr.bf16.mxu0 0
    %2351 = vmatpush1.bf16.msra.mxu0 0
    %2352 = vmatprep.subr.bf16.mxu0 0
    %2353 = vmatpush1.bf16.msra.mxu0 0
    %2354 = vmatprep.subr.bf16.mxu0 0
    %2355 = vmatpush1.bf16.msra.mxu0 0
    %2356 = vmatprep.subr.bf16.mxu0 0
    %2357 = vmatpush1.bf16.msra.mxu0 0
    %2358 = vmatprep.subr.bf16.mxu0 0
    %2359 = vmatpush1.bf16.msra.mxu0 0
    %2360 = vmatprep.subr.bf16.mxu0 0
    %2361 = vmatpush1.bf16.msra.mxu0 0
    %2362 = vmatprep.subr.bf16.mxu0 0
    %2363 = vmatpush1.bf16.msra.mxu0 0
    %2364 = vmatprep.mubr.bf16.mxu0 0
    %2365 = vmatmul.mubr.bf16.gmra.mrb[0].mxu0 %v2277
    %v2366 = vpop.f32.mrb[0].mxu0
    %v2367 = vadd.f32 %v2282, %v2366
    %v2368 = vpop.f32.mrb[0].mxu0
    %v2369 = vpop.f32.mrb[0].mxu0
    %v2370 = vpop.f32.mrb[0].mxu0
    %2371 = vdwg.mxu0
    %v2372 = vmax.f32 %v2367, 0.0
    %v2373 = vld [vmem:[#allocation27] sm:$0xf]
    %v2374 = vld [vmem:[#allocation27 + $0x4] sm:$0xf]
    %v2375 = vld [vmem:[#allocation27 + $0x8] sm:$0xf]
    %v2376 = vld [vmem:[#allocation27 + $0xc] sm:$0xf]
    %v2377 = vld [vmem:[#allocation27 + $0x10] sm:$0xf]
    %v2378 = vld [vmem:[#allocation27 + $0x14] sm:$0xf]
    %v2379 = vld [vmem:[#allocation27 + $0x18] sm:$0xf]
    %v2380 = vld [vmem:[#allocation27 + $0x1c] sm:$0xf]
    %v2381 = vld [vmem:[#allocation27 + $0x20] sm:$0xf]
    %v2382 = vld [vmem:[#allocation27 + $0x24] sm:$0xf]
    %v2383 = vld [vmem:[#allocation27 + $0x28] sm:$0xf]
    %v2384 = vld [vmem:[#allocation27 + $0x2c] sm:$0xf]
    %v2385 = vld [vmem:[#allocation27 + $0x30] sm:$0xf]
    %v2386 = vld [vmem:[#allocation27 + $0x34] sm:$0xf]
    %v2387 = vld [vmem:[#allocation27 + $0x38] sm:$0xf]
    %v2388 = vld [vmem:[#allocation27 + $0x3c] sm:$0xf]
    %v2389 = vld [vmem:[#allocation28] sm:$0x1]
    %v2390 = vpack.c.bf16 %v2372, %v2372
    %v2392 = vlaneseq
    %v2393 = vshrl.u32 %v2392, 7
    %v2394 = vsub.s32 0, %v2393
    %v2395 = vrot.slane %v2389, %v2394
    %v2413 = vunpack.c.l.b16 %v2373
    %v2414 = vunpack.c.l.b16 %v2374
    %v2415 = vunpack.c.l.b16 %v2375
    %v2416 = vunpack.c.l.b16 %v2376
    %v2417 = vunpack.c.l.b16 %v2377
    %v2418 = vunpack.c.l.b16 %v2378
    %v2419 = vunpack.c.l.b16 %v2379
    %v2420 = vunpack.c.l.b16 %v2380
    %v2421 = vunpack.c.l.b16 %v2381
    %v2422 = vunpack.c.l.b16 %v2382
    %v2423 = vunpack.c.l.b16 %v2383
    %v2424 = vunpack.c.l.b16 %v2384
    %v2425 = vunpack.c.l.b16 %v2385
    %v2426 = vunpack.c.l.b16 %v2386
    %v2427 = vunpack.c.l.b16 %v2387
    %v2428 = vunpack.c.l.b16 %v2388
    %v2429 = vpack.c.b16 %v2414, %v2413
    %v2430 = vpack.c.b16 %v2416, %v2415
    %v2431 = vpack.c.b16 %v2418, %v2417
    %v2432 = vpack.c.b16 %v2420, %v2419
    %v2433 = vpack.c.b16 %v2422, %v2421
    %v2434 = vpack.c.b16 %v2424, %v2423
    %v2435 = vpack.c.b16 %v2426, %v2425
    %v2436 = vpack.c.b16 %v2428, %v2427
    %2445 = vmatprep.subr.bf16.mxu0 0
    %2446 = vmatpush1.bf16.msra.mxu0 %v2429
    %2447 = vmatprep.subr.bf16.mxu0 0
    %2448 = vmatpush1.bf16.msra.mxu0 %v2430
    %2449 = vmatprep.subr.bf16.mxu0 0
    %2450 = vmatpush1.bf16.msra.mxu0 %v2431
    %2451 = vmatprep.subr.bf16.mxu0 0
    %2452 = vmatpush1.bf16.msra.mxu0 %v2432
    %2453 = vmatprep.subr.bf16.mxu0 0
    %2454 = vmatpush1.bf16.msra.mxu0 %v2433
    %2455 = vmatprep.subr.bf16.mxu0 0
    %2456 = vmatpush1.bf16.msra.mxu0 %v2434
    %2457 = vmatprep.subr.bf16.mxu0 0
    %2458 = vmatpush1.bf16.msra.mxu0 %v2435
    %2459 = vmatprep.subr.bf16.mxu0 0
    %2460 = vmatpush1.bf16.msra.mxu0 %v2436
    %2461 = vmatprep.subr.bf16.mxu0 0
    %2462 = vmatpush1.bf16.msra.mxu0 0
    %2463 = vmatprep.subr.bf16.mxu0 0
    %2464 = vmatpush1.bf16.msra.mxu0 0
    %2465 = vmatprep.subr.bf16.mxu0 0
    %2466 = vmatpush1.bf16.msra.mxu0 0
    %2467 = vmatprep.subr.bf16.mxu0 0
    %2468 = vmatpush1.bf16.msra.mxu0 0
    %2469 = vmatprep.subr.bf16.mxu0 0
    %2470 = vmatpush1.bf16.msra.mxu0 0
    %2471 = vmatprep.subr.bf16.mxu0 0
    %2472 = vmatpush1.bf16.msra.mxu0 0
    %2473 = vmatprep.subr.bf16.mxu0 0
    %2474 = vmatpush1.bf16.msra.mxu0 0
    %2475 = vmatprep.subr.bf16.mxu0 0
    %2476 = vmatpush1.bf16.msra.mxu0 0
    %2477 = vmatprep.mubr.bf16.mxu0 0
    %2478 = vmatmul.mubr.bf16.gmra.mrb[0].mxu0 %v2390
    %v2479 = vpop.f32.mrb[0].mxu0
    %v2480 = vadd.f32 %v2395, %v2479
    %v2481 = vpop.f32.mrb[0].mxu0
    %v2482 = vpop.f32.mrb[0].mxu0
    %v2483 = vpop.f32.mrb[0].mxu0
    %2484 = vdwg.mxu0
    %v2485 = vmax.f32 %v2480, 0.0
    %v2486 = vld [vmem:[#allocation30] sm:$0xf]
    %v2487 = vld [vmem:[#allocation30 + $0x4] sm:$0xf]
    %v2488 = vld [vmem:[#allocation30 + $0x8] sm:$0xf]
    %v2489 = vld [vmem:[#allocation30 + $0xc] sm:$0xf]
    %v2490 = vld [vmem:[#allocation30 + $0x10] sm:$0xf]
    %v2491 = vld [vmem:[#allocation30 + $0x14] sm:$0xf]
    %v2492 = vld [vmem:[#allocation30 + $0x18] sm:$0xf]
    %v2493 = vld [vmem:[#allocation30 + $0x1c] sm:$0xf]
    %v2494 = vld [vmem:[#allocation30 + $0x20] sm:$0xf]
    %v2495 = vld [vmem:[#allocation30 + $0x24] sm:$0xf]
    %v2496 = vld [vmem:[#allocation30 + $0x28] sm:$0xf]
    %v2497 = vld [vmem:[#allocation30 + $0x2c] sm:$0xf]
    %v2498 = vld [vmem:[#allocation30 + $0x30] sm:$0xf]
    %v2499 = vld [vmem:[#allocation30 + $0x34] sm:$0xf]
    %v2500 = vld [vmem:[#allocation30 + $0x38] sm:$0xf]
    %v2501 = vld [vmem:[#allocation30 + $0x3c] sm:$0xf]
    %v2502 = vld [vmem:[#allocation31] sm:$0x1]
    %v2503 = vpack.c.bf16 %v2485, %v2485
    %v2505 = vlaneseq
    %v2506 = vshrl.u32 %v2505, 7
    %v2507 = vsub.s32 0, %v2506
    %v2508 = vrot.slane %v2502, %v2507
    %v2526 = vunpack.c.l.b16 %v2486
    %v2527 = vunpack.c.l.b16 %v2487
    %v2528 = vunpack.c.l.b16 %v2488
    %v2529 = vunpack.c.l.b16 %v2489
    %v2530 = vunpack.c.l.b16 %v2490
    %v2531 = vunpack.c.l.b16 %v2491
    %v2532 = vunpack.c.l.b16 %v2492
    %v2533 = vunpack.c.l.b16 %v2493
    %v2534 = vunpack.c.l.b16 %v2494
    %v2535 = vunpack.c.l.b16 %v2495
    %v2536 = vunpack.c.l.b16 %v2496
    %v2537 = vunpack.c.l.b16 %v2497
    %v2538 = vunpack.c.l.b16 %v2498
    %v2539 = vunpack.c.l.b16 %v2499
    %v2540 = vunpack.c.l.b16 %v2500
    %v2541 = vunpack.c.l.b16 %v2501
    %v2542 = vpack.c.b16 %v2527, %v2526
    %v2543 = vpack.c.b16 %v2529, %v2528
    %v2544 = vpack.c.b16 %v2531, %v2530
    %v2545 = vpack.c.b16 %v2533, %v2532
    %v2546 = vpack.c.b16 %v2535, %v2534
    %v2547 = vpack.c.b16 %v2537, %v2536
    %v2548 = vpack.c.b16 %v2539, %v2538
    %v2549 = vpack.c.b16 %v2541, %v2540
    %2558 = vmatprep.subr.bf16.mxu0 0
    %2559 = vmatpush1.bf16.msra.mxu0 %v2542
    %2560 = vmatprep.subr.bf16.mxu0 0
    %2561 = vmatpush1.bf16.msra.mxu0 %v2543
    %2562 = vmatprep.subr.bf16.mxu0 0
    %2563 = vmatpush1.bf16.msra.mxu0 %v2544
    %2564 = vmatprep.subr.bf16.mxu0 0
    %2565 = vmatpush1.bf16.msra.mxu0 %v2545
    %2566 = vmatprep.subr.bf16.mxu0 0
    %2567 = vmatpush1.bf16.msra.mxu0 %v2546
    %2568 = vmatprep.subr.bf16.mxu0 0
    %2569 = vmatpush1.bf16.msra.mxu0 %v2547
    %2570 = vmatprep.subr.bf16.mxu0 0
    %2571 = vmatpush1.bf16.msra.mxu0 %v2548
    %2572 = vmatprep.subr.bf16.mxu0 0
    %2573 = vmatpush1.bf16.msra.mxu0 %v2549
    %2574 = vmatprep.subr.bf16.mxu0 0
    %2575 = vmatpush1.bf16.msra.mxu0 0
    %2576 = vmatprep.subr.bf16.mxu0 0
    %2577 = vmatpush1.bf16.msra.mxu0 0
    %2578 = vmatprep.subr.bf16.mxu0 0
    %2579 = vmatpush1.bf16.msra.mxu0 0
    %2580 = vmatprep.subr.bf16.mxu0 0
    %2581 = vmatpush1.bf16.msra.mxu0 0
    %2582 = vmatprep.subr.bf16.mxu0 0
    %2583 = vmatpush1.bf16.msra.mxu0 0
    %2584 = vmatprep.subr.bf16.mxu0 0
    %2585 = vmatpush1.bf16.msra.mxu0 0
    %2586 = vmatprep.subr.bf16.mxu0 0
    %2587 = vmatpush1.bf16.msra.mxu0 0
    %2588 = vmatprep.subr.bf16.mxu0 0
    %2589 = vmatpush1.bf16.msra.mxu0 0
    %2590 = vmatprep.mubr.bf16.mxu0 0
    %2591 = vmatmul.mubr.bf16.gmra.mrb[0].mxu0 %v2503
    %v2592 = vpop.f32.mrb[0].mxu0
    %v2593 = vadd.f32 %v2508, %v2592
    %v2594 = vpop.f32.mrb[0].mxu0
    %v2595 = vpop.f32.mrb[0].mxu0
    %v2596 = vpop.f32.mrb[0].mxu0
    %2597 = vdwg.mxu0
    %v2598 = vmax.f32 %v2593, 0.0
    %v2599 = vld [vmem:[#allocation33] sm:$0xf]
    %v2600 = vld [vmem:[#allocation33 + $0x4] sm:$0xf]
    %v2601 = vld [vmem:[#allocation33 + $0x8] sm:$0xf]
    %v2602 = vld [vmem:[#allocation33 + $0xc] sm:$0xf]
    %v2603 = vld [vmem:[#allocation33 + $0x10] sm:$0xf]
    %v2604 = vld [vmem:[#allocation33 + $0x14] sm:$0xf]
    %v2605 = vld [vmem:[#allocation33 + $0x18] sm:$0xf]
    %v2606 = vld [vmem:[#allocation33 + $0x1c] sm:$0xf]
    %v2607 = vld [vmem:[#allocation33 + $0x20] sm:$0xf]
    %v2608 = vld [vmem:[#allocation33 + $0x24] sm:$0xf]
    %v2609 = vld [vmem:[#allocation33 + $0x28] sm:$0xf]
    %v2610 = vld [vmem:[#allocation33 + $0x2c] sm:$0xf]
    %v2611 = vld [vmem:[#allocation33 + $0x30] sm:$0xf]
    %v2612 = vld [vmem:[#allocation33 + $0x34] sm:$0xf]
    %v2613 = vld [vmem:[#allocation33 + $0x38] sm:$0xf]
    %v2614 = vld [vmem:[#allocation33 + $0x3c] sm:$0xf]
    %v2615 = vld [vmem:[#allocation34] sm:$0x1]
    %v2616 = vpack.c.bf16 %v2598, %v2598
    %v2618 = vlaneseq
    %v2619 = vshrl.u32 %v2618, 7
    %v2620 = vsub.s32 0, %v2619
    %v2621 = vrot.slane %v2615, %v2620
    %v2639 = vunpack.c.l.b16 %v2599
    %v2640 = vunpack.c.l.b16 %v2600
    %v2641 = vunpack.c.l.b16 %v2601
    %v2642 = vunpack.c.l.b16 %v2602
    %v2643 = vunpack.c.l.b16 %v2603
    %v2644 = vunpack.c.l.b16 %v2604
    %v2645 = vunpack.c.l.b16 %v2605
    %v2646 = vunpack.c.l.b16 %v2606
    %v2647 = vunpack.c.l.b16 %v2607
    %v2648 = vunpack.c.l.b16 %v2608
    %v2649 = vunpack.c.l.b16 %v2609
    %v2650 = vunpack.c.l.b16 %v2610
    %v2651 = vunpack.c.l.b16 %v2611
    %v2652 = vunpack.c.l.b16 %v2612
    %v2653 = vunpack.c.l.b16 %v2613
    %v2654 = vunpack.c.l.b16 %v2614
    %v2655 = vpack.c.b16 %v2640, %v2639
    %v2656 = vpack.c.b16 %v2642, %v2641
    %v2657 = vpack.c.b16 %v2644, %v2643
    %v2658 = vpack.c.b16 %v2646, %v2645
    %v2659 = vpack.c.b16 %v2648, %v2647
    %v2660 = vpack.c.b16 %v2650, %v2649
    %v2661 = vpack.c.b16 %v2652, %v2651
    %v2662 = vpack.c.b16 %v2654, %v2653
    %2671 = vmatprep.subr.bf16.mxu0 0
    %2672 = vmatpush1.bf16.msra.mxu0 %v2655
    %2673 = vmatprep.subr.bf16.mxu0 0
    %2674 = vmatpush1.bf16.msra.mxu0 %v2656
    %2675 = vmatprep.subr.bf16.mxu0 0
    %2676 = vmatpush1.bf16.msra.mxu0 %v2657
    %2677 = vmatprep.subr.bf16.mxu0 0
    %2678 = vmatpush1.bf16.msra.mxu0 %v2658
    %2679 = vmatprep.subr.bf16.mxu0 0
    %2680 = vmatpush1.bf16.msra.mxu0 %v2659
    %2681 = vmatprep.subr.bf16.mxu0 0
    %2682 = vmatpush1.bf16.msra.mxu0 %v2660
    %2683 = vmatprep.subr.bf16.mxu0 0
    %2684 = vmatpush1.bf16.msra.mxu0 %v2661
    %2685 = vmatprep.subr.bf16.mxu0 0
    %2686 = vmatpush1.bf16.msra.mxu0 %v2662
    %2687 = vmatprep.subr.bf16.mxu0 0
    %2688 = vmatpush1.bf16.msra.mxu0 0
    %2689 = vmatprep.subr.bf16.mxu0 0
    %2690 = vmatpush1.bf16.msra.mxu0 0
    %2691 = vmatprep.subr.bf16.mxu0 0
    %2692 = vmatpush1.bf16.msra.mxu0 0
    %2693 = vmatprep.subr.bf16.mxu0 0
    %2694 = vmatpush1.bf16.msra.mxu0 0
    %2695 = vmatprep.subr.bf16.mxu0 0
    %2696 = vmatpush1.bf16.msra.mxu0 0
    %2697 = vmatprep.subr.bf16.mxu0 0
    %2698 = vmatpush1.bf16.msra.mxu0 0
    %2699 = vmatprep.subr.bf16.mxu0 0
    %2700 = vmatpush1.bf16.msra.mxu0 0
    %2701 = vmatprep.subr.bf16.mxu0 0
    %2702 = vmatpush1.bf16.msra.mxu0 0
    %2703 = vmatprep.mubr.bf16.mxu0 0
    %2704 = vmatmul.mubr.bf16.gmra.mrb[0].mxu0 %v2616
    %v2705 = vpop.f32.mrb[0].mxu0
    %v2706 = vadd.f32 %v2621, %v2705
    %v2707 = vpop.f32.mrb[0].mxu0
    %v2708 = vpop.f32.mrb[0].mxu0
    %v2709 = vpop.f32.mrb[0].mxu0
    %2710 = vdwg.mxu0
    %v2711 = vadd.f32 %v2034, %v2706
    %v2712 = vld [vmem:[#allocation36] sm:$0xf]
    %v2713 = vld [vmem:[#allocation36 + $0x4] sm:$0xf]
    %v2714 = vld [vmem:[#allocation36 + $0x8] sm:$0xf]
    %v2715 = vld [vmem:[#allocation36 + $0xc] sm:$0xf]
    %v2716 = vld [vmem:[#allocation36 + $0x10] sm:$0xf]
    %v2717 = vld [vmem:[#allocation36 + $0x14] sm:$0xf]
    %v2718 = vld [vmem:[#allocation36 + $0x18] sm:$0xf]
    %v2719 = vld [vmem:[#allocation36 + $0x1c] sm:$0xf]
    %v2720 = vld [vmem:[#allocation36 + $0x20] sm:$0xf]
    %v2721 = vld [vmem:[#allocation36 + $0x24] sm:$0xf]
    %v2722 = vld [vmem:[#allocation36 + $0x28] sm:$0xf]
    %v2723 = vld [vmem:[#allocation36 + $0x2c] sm:$0xf]
    %v2724 = vld [vmem:[#allocation36 + $0x30] sm:$0xf]
    %v2725 = vld [vmem:[#allocation36 + $0x34] sm:$0xf]
    %v2726 = vld [vmem:[#allocation36 + $0x38] sm:$0xf]
    %v2727 = vld [vmem:[#allocation36 + $0x3c] sm:$0xf]
    %v2728 = vld [vmem:[#allocation37] sm:$0x1]
    %v2729 = vpack.c.bf16 %v2711, %v2711
    %v2731 = vlaneseq
    %v2732 = vshrl.u32 %v2731, 7
    %v2733 = vsub.s32 0, %v2732
    %v2734 = vrot.slane %v2728, %v2733
    %v2752 = vunpack.c.l.b16 %v2712
    %v2753 = vunpack.c.l.b16 %v2713
    %v2754 = vunpack.c.l.b16 %v2714
    %v2755 = vunpack.c.l.b16 %v2715
    %v2756 = vunpack.c.l.b16 %v2716
    %v2757 = vunpack.c.l.b16 %v2717
    %v2758 = vunpack.c.l.b16 %v2718
    %v2759 = vunpack.c.l.b16 %v2719
    %v2760 = vunpack.c.l.b16 %v2720
    %v2761 = vunpack.c.l.b16 %v2721
    %v2762 = vunpack.c.l.b16 %v2722
    %v2763 = vunpack.c.l.b16 %v2723
    %v2764 = vunpack.c.l.b16 %v2724
    %v2765 = vunpack.c.l.b16 %v2725
    %v2766 = vunpack.c.l.b16 %v2726
    %v2767 = vunpack.c.l.b16 %v2727
    %v2768 = vpack.c.b16 %v2753, %v2752
    %v2769 = vpack.c.b16 %v2755, %v2754
    %v2770 = vpack.c.b16 %v2757, %v2756
    %v2771 = vpack.c.b16 %v2759, %v2758
    %v2772 = vpack.c.b16 %v2761, %v2760
    %v2773 = vpack.c.b16 %v2763, %v2762
    %v2774 = vpack.c.b16 %v2765, %v2764
    %v2775 = vpack.c.b16 %v2767, %v2766
    %2784 = vmatprep.subr.bf16.mxu0 0
    %2785 = vmatpush1.bf16.msra.mxu0 %v2768
    %2786 = vmatprep.subr.bf16.mxu0 0
    %2787 = vmatpush1.bf16.msra.mxu0 %v2769
    %2788 = vmatprep.subr.bf16.mxu0 0
    %2789 = vmatpush1.bf16.msra.mxu0 %v2770
    %2790 = vmatprep.subr.bf16.mxu0 0
    %2791 = vmatpush1.bf16.msra.mxu0 %v2771
    %2792 = vmatprep.subr.bf16.mxu0 0
    %2793 = vmatpush1.bf16.msra.mxu0 %v2772
    %2794 = vmatprep.subr.bf16.mxu0 0
    %2795 = vmatpush1.bf16.msra.mxu0 %v2773
    %2796 = vmatprep.subr.bf16.mxu0 0
    %2797 = vmatpush1.bf16.msra.mxu0 %v2774
    %2798 = vmatprep.subr.bf16.mxu0 0
    %2799 = vmatpush1.bf16.msra.mxu0 %v2775
    %2800 = vmatprep.subr.bf16.mxu0 0
    %2801 = vmatpush1.bf16.msra.mxu0 0
    %2802 = vmatprep.subr.bf16.mxu0 0
    %2803 = vmatpush1.bf16.msra.mxu0 0
    %2804 = vmatprep.subr.bf16.mxu0 0
    %2805 = vmatpush1.bf16.msra.mxu0 0
    %2806 = vmatprep.subr.bf16.mxu0 0
    %2807 = vmatpush1.bf16.msra.mxu0 0
    %2808 = vmatprep.subr.bf16.mxu0 0
    %2809 = vmatpush1.bf16.msra.mxu0 0
    %2810 = vmatprep.subr.bf16.mxu0 0
    %2811 = vmatpush1.bf16.msra.mxu0 0
    %2812 = vmatprep.subr.bf16.mxu0 0
    %2813 = vmatpush1.bf16.msra.mxu0 0
    %2814 = vmatprep.subr.bf16.mxu0 0
    %2815 = vmatpush1.bf16.msra.mxu0 0
    %2816 = vmatprep.mubr.bf16.mxu0 0
    %2817 = vmatmul.mubr.bf16.gmra.mrb[0].mxu0 %v2729
    %v2818 = vpop.f32.mrb[0].mxu0
    %v2819 = vadd.f32 %v2734, %v2818
    %v2820 = vpop.f32.mrb[0].mxu0
    %v2821 = vpop.f32.mrb[0].mxu0
    %v2822 = vpop.f32.mrb[0].mxu0
    %2823 = vdwg.mxu0
    %v2824 = vmax.f32 %v2819, 0.0
    %v2825 = vld [vmem:[#allocation39] sm:$0xf]
    %v2826 = vld [vmem:[#allocation39 + $0x4] sm:$0xf]
    %v2827 = vld [vmem:[#allocation39 + $0x8] sm:$0xf]
    %v2828 = vld [vmem:[#allocation39 + $0xc] sm:$0xf]
    %v2829 = vld [vmem:[#allocation39 + $0x10] sm:$0xf]
    %v2830 = vld [vmem:[#allocation39 + $0x14] sm:$0xf]
    %v2831 = vld [vmem:[#allocation39 + $0x18] sm:$0xf]
    %v2832 = vld [vmem:[#allocation39 + $0x1c] sm:$0xf]
    %v2833 = vld [vmem:[#allocation39 + $0x20] sm:$0xf]
    %v2834 = vld [vmem:[#allocation39 + $0x24] sm:$0xf]
    %v2835 = vld [vmem:[#allocation39 + $0x28] sm:$0xf]
    %v2836 = vld [vmem:[#allocation39 + $0x2c] sm:$0xf]
    %v2837 = vld [vmem:[#allocation39 + $0x30] sm:$0xf]
    %v2838 = vld [vmem:[#allocation39 + $0x34] sm:$0xf]
    %v2839 = vld [vmem:[#allocation39 + $0x38] sm:$0xf]
    %v2840 = vld [vmem:[#allocation39 + $0x3c] sm:$0xf]
    %v2841 = vld [vmem:[#allocation40] sm:$0x1]
    %v2842 = vpack.c.bf16 %v2824, %v2824
    %v2844 = vlaneseq
    %v2845 = vshrl.u32 %v2844, 7
    %v2846 = vsub.s32 0, %v2845
    %v2847 = vrot.slane %v2841, %v2846
    %v2865 = vunpack.c.l.b16 %v2825
    %v2866 = vunpack.c.l.b16 %v2826
    %v2867 = vunpack.c.l.b16 %v2827
    %v2868 = vunpack.c.l.b16 %v2828
    %v2869 = vunpack.c.l.b16 %v2829
    %v2870 = vunpack.c.l.b16 %v2830
    %v2871 = vunpack.c.l.b16 %v2831
    %v2872 = vunpack.c.l.b16 %v2832
    %v2873 = vunpack.c.l.b16 %v2833
    %v2874 = vunpack.c.l.b16 %v2834
    %v2875 = vunpack.c.l.b16 %v2835
    %v2876 = vunpack.c.l.b16 %v2836
    %v2877 = vunpack.c.l.b16 %v2837
    %v2878 = vunpack.c.l.b16 %v2838
    %v2879 = vunpack.c.l.b16 %v2839
    %v2880 = vunpack.c.l.b16 %v2840
    %v2881 = vpack.c.b16 %v2866, %v2865
    %v2882 = vpack.c.b16 %v2868, %v2867
    %v2883 = vpack.c.b16 %v2870, %v2869
    %v2884 = vpack.c.b16 %v2872, %v2871
    %v2885 = vpack.c.b16 %v2874, %v2873
    %v2886 = vpack.c.b16 %v2876, %v2875
    %v2887 = vpack.c.b16 %v2878, %v2877
    %v2888 = vpack.c.b16 %v2880, %v2879
    %2897 = vmatprep.subr.bf16.mxu0 0
    %2898 = vmatpush1.bf16.msra.mxu0 %v2881
    %2899 = vmatprep.subr.bf16.mxu0 0
    %2900 = vmatpush1.bf16.msra.mxu0 %v2882
    %2901 = vmatprep.subr.bf16.mxu0 0
    %2902 = vmatpush1.bf16.msra.mxu0 %v2883
    %2903 = vmatprep.subr.bf16.mxu0 0
    %2904 = vmatpush1.bf16.msra.mxu0 %v2884
    %2905 = vmatprep.subr.bf16.mxu0 0
    %2906 = vmatpush1.bf16.msra.mxu0 %v2885
    %2907 = vmatprep.subr.bf16.mxu0 0
    %2908 = vmatpush1.bf16.msra.mxu0 %v2886
    %2909 = vmatprep.subr.bf16.mxu0 0
    %2910 = vmatpush1.bf16.msra.mxu0 %v2887
    %2911 = vmatprep.subr.bf16.mxu0 0
    %2912 = vmatpush1.bf16.msra.mxu0 %v2888
    %2913 = vmatprep.subr.bf16.mxu0 0
    %2914 = vmatpush1.bf16.msra.mxu0 0
    %2915 = vmatprep.subr.bf16.mxu0 0
    %2916 = vmatpush1.bf16.msra.mxu0 0
    %2917 = vmatprep.subr.bf16.mxu0 0
    %2918 = vmatpush1.bf16.msra.mxu0 0
    %2919 = vmatprep.subr.bf16.mxu0 0
    %2920 = vmatpush1.bf16.msra.mxu0 0
    %2921 = vmatprep.subr.bf16.mxu0 0
    %2922 = vmatpush1.bf16.msra.mxu0 0
    %2923 = vmatprep.subr.bf16.mxu0 0
    %2924 = vmatpush1.bf16.msra.mxu0 0
    %2925 = vmatprep.subr.bf16.mxu0 0
    %2926 = vmatpush1.bf16.msra.mxu0 0
    %2927 = vmatprep.subr.bf16.mxu0 0
    %2928 = vmatpush1.bf16.msra.mxu0 0
    %2929 = vmatprep.mubr.bf16.mxu0 0
    %2930 = vmatmul.mubr.bf16.gmra.mrb[0].mxu0 %v2842
    %v2931 = vpop.f32.mrb[0].mxu0
    %v2932 = vadd.f32 %v2847, %v2931
    %v2933 = vpop.f32.mrb[0].mxu0
    %v2934 = vpop.f32.mrb[0].mxu0
    %v2935 = vpop.f32.mrb[0].mxu0
    %2936 = vdwg.mxu0
    %v2937 = vmax.f32 %v2932, 0.0
    %v2938 = vld [vmem:[#allocation42] sm:$0xf]
    %v2939 = vld [vmem:[#allocation42 + $0x4] sm:$0xf]
    %v2940 = vld [vmem:[#allocation42 + $0x8] sm:$0xf]
    %v2941 = vld [vmem:[#allocation42 + $0xc] sm:$0xf]
    %v2942 = vld [vmem:[#allocation42 + $0x10] sm:$0xf]
    %v2943 = vld [vmem:[#allocation42 + $0x14] sm:$0xf]
    %v2944 = vld [vmem:[#allocation42 + $0x18] sm:$0xf]
    %v2945 = vld [vmem:[#allocation42 + $0x1c] sm:$0xf]
    %v2946 = vld [vmem:[#allocation42 + $0x20] sm:$0xf]
    %v2947 = vld [vmem:[#allocation42 + $0x24] sm:$0xf]
    %v2948 = vld [vmem:[#allocation42 + $0x28] sm:$0xf]
    %v2949 = vld [vmem:[#allocation42 + $0x2c] sm:$0xf]
    %v2950 = vld [vmem:[#allocation42 + $0x30] sm:$0xf]
    %v2951 = vld [vmem:[#allocation42 + $0x34] sm:$0xf]
    %v2952 = vld [vmem:[#allocation42 + $0x38] sm:$0xf]
    %v2953 = vld [vmem:[#allocation42 + $0x3c] sm:$0xf]
    %v2954 = vld [vmem:[#allocation43] sm:$0x1]
    %v2955 = vpack.c.bf16 %v2937, %v2937
    %v2957 = vlaneseq
    %v2958 = vshrl.u32 %v2957, 7
    %v2959 = vsub.s32 0, %v2958
    %v2960 = vrot.slane %v2954, %v2959
    %v2978 = vunpack.c.l.b16 %v2938
    %v2979 = vunpack.c.l.b16 %v2939
    %v2980 = vunpack.c.l.b16 %v2940
    %v2981 = vunpack.c.l.b16 %v2941
    %v2982 = vunpack.c.l.b16 %v2942
    %v2983 = vunpack.c.l.b16 %v2943
    %v2984 = vunpack.c.l.b16 %v2944
    %v2985 = vunpack.c.l.b16 %v2945
    %v2986 = vunpack.c.l.b16 %v2946
    %v2987 = vunpack.c.l.b16 %v2947
    %v2988 = vunpack.c.l.b16 %v2948
    %v2989 = vunpack.c.l.b16 %v2949
    %v2990 = vunpack.c.l.b16 %v2950
    %v2991 = vunpack.c.l.b16 %v2951
    %v2992 = vunpack.c.l.b16 %v2952
    %v2993 = vunpack.c.l.b16 %v2953
    %v2994 = vpack.c.b16 %v2979, %v2978
    %v2995 = vpack.c.b16 %v2981, %v2980
    %v2996 = vpack.c.b16 %v2983, %v2982
    %v2997 = vpack.c.b16 %v2985, %v2984
    %v2998 = vpack.c.b16 %v2987, %v2986
    %v2999 = vpack.c.b16 %v2989, %v2988
    %v3000 = vpack.c.b16 %v2991, %v2990
    %v3001 = vpack.c.b16 %v2993, %v2992
    %3010 = vmatprep.subr.bf16.mxu0 0
    %3011 = vmatpush1.bf16.msra.mxu0 %v2994
    %3012 = vmatprep.subr.bf16.mxu0 0
    %3013 = vmatpush1.bf16.msra.mxu0 %v2995
    %3014 = vmatprep.subr.bf16.mxu0 0
    %3015 = vmatpush1.bf16.msra.mxu0 %v2996
    %3016 = vmatprep.subr.bf16.mxu0 0
    %3017 = vmatpush1.bf16.msra.mxu0 %v2997
    %3018 = vmatprep.subr.bf16.mxu0 0
    %3019 = vmatpush1.bf16.msra.mxu0 %v2998
    %3020 = vmatprep.subr.bf16.mxu0 0
    %3021 = vmatpush1.bf16.msra.mxu0 %v2999
    %3022 = vmatprep.subr.bf16.mxu0 0
    %3023 = vmatpush1.bf16.msra.mxu0 %v3000
    %3024 = vmatprep.subr.bf16.mxu0 0
    %3025 = vmatpush1.bf16.msra.mxu0 %v3001
    %3026 = vmatprep.subr.bf16.mxu0 0
    %3027 = vmatpush1.bf16.msra.mxu0 0
    %3028 = vmatprep.subr.bf16.mxu0 0
    %3029 = vmatpush1.bf16.msra.mxu0 0
    %3030 = vmatprep.subr.bf16.mxu0 0
    %3031 = vmatpush1.bf16.msra.mxu0 0
    %3032 = vmatprep.subr.bf16.mxu0 0
    %3033 = vmatpush1.bf16.msra.mxu0 0
    %3034 = vmatprep.subr.bf16.mxu0 0
    %3035 = vmatpush1.bf16.msra.mxu0 0
    %3036 = vmatprep.subr.bf16.mxu0 0
    %3037 = vmatpush1.bf16.msra.mxu0 0
    %3038 = vmatprep.subr.bf16.mxu0 0
    %3039 = vmatpush1.bf16.msra.mxu0 0
    %3040 = vmatprep.subr.bf16.mxu0 0
    %3041 = vmatpush1.bf16.msra.mxu0 0
    %3042 = vmatprep.mubr.bf16.mxu0 0
    %3043 = vmatmul.mubr.bf16.gmra.mrb[0].mxu0 %v2955
    %v3044 = vpop.f32.mrb[0].mxu0
    %v3045 = vadd.f32 %v2960, %v3044
    %v3046 = vpop.f32.mrb[0].mxu0
    %v3047 = vpop.f32.mrb[0].mxu0
    %v3048 = vpop.f32.mrb[0].mxu0
    %3049 = vdwg.mxu0
    %v3050 = vmax.f32 %v3045, 0.0
    %v3051 = vld [vmem:[#allocation45] sm:$0xf]
    %v3052 = vld [vmem:[#allocation45 + $0x4] sm:$0xf]
    %v3053 = vld [vmem:[#allocation45 + $0x8] sm:$0xf]
    %v3054 = vld [vmem:[#allocation45 + $0xc] sm:$0xf]
    %v3055 = vld [vmem:[#allocation45 + $0x10] sm:$0xf]
    %v3056 = vld [vmem:[#allocation45 + $0x14] sm:$0xf]
    %v3057 = vld [vmem:[#allocation45 + $0x18] sm:$0xf]
    %v3058 = vld [vmem:[#allocation45 + $0x1c] sm:$0xf]
    %v3059 = vld [vmem:[#allocation45 + $0x20] sm:$0xf]
    %v3060 = vld [vmem:[#allocation45 + $0x24] sm:$0xf]
    %v3061 = vld [vmem:[#allocation45 + $0x28] sm:$0xf]
    %v3062 = vld [vmem:[#allocation45 + $0x2c] sm:$0xf]
    %v3063 = vld [vmem:[#allocation45 + $0x30] sm:$0xf]
    %v3064 = vld [vmem:[#allocation45 + $0x34] sm:$0xf]
    %v3065 = vld [vmem:[#allocation45 + $0x38] sm:$0xf]
    %v3066 = vld [vmem:[#allocation45 + $0x3c] sm:$0xf]
    %v3067 = vld [vmem:[#allocation46] sm:$0x1]
    %v3068 = vpack.c.bf16 %v3050, %v3050
    %v3070 = vlaneseq
    %v3071 = vshrl.u32 %v3070, 7
    %v3072 = vsub.s32 0, %v3071
    %v3073 = vrot.slane %v3067, %v3072
    %v3091 = vunpack.c.l.b16 %v3051
    %v3092 = vunpack.c.l.b16 %v3052
    %v3093 = vunpack.c.l.b16 %v3053
    %v3094 = vunpack.c.l.b16 %v3054
    %v3095 = vunpack.c.l.b16 %v3055
    %v3096 = vunpack.c.l.b16 %v3056
    %v3097 = vunpack.c.l.b16 %v3057
    %v3098 = vunpack.c.l.b16 %v3058
    %v3099 = vunpack.c.l.b16 %v3059
    %v3100 = vunpack.c.l.b16 %v3060
    %v3101 = vunpack.c.l.b16 %v3061
    %v3102 = vunpack.c.l.b16 %v3062
    %v3103 = vunpack.c.l.b16 %v3063
    %v3104 = vunpack.c.l.b16 %v3064
    %v3105 = vunpack.c.l.b16 %v3065
    %v3106 = vunpack.c.l.b16 %v3066
    %v3107 = vpack.c.b16 %v3092, %v3091
    %v3108 = vpack.c.b16 %v3094, %v3093
    %v3109 = vpack.c.b16 %v3096, %v3095
    %v3110 = vpack.c.b16 %v3098, %v3097
    %v3111 = vpack.c.b16 %v3100, %v3099
    %v3112 = vpack.c.b16 %v3102, %v3101
    %v3113 = vpack.c.b16 %v3104, %v3103
    %v3114 = vpack.c.b16 %v3106, %v3105
    %3123 = vmatprep.subr.bf16.mxu0 0
    %3124 = vmatpush1.bf16.msra.mxu0 %v3107
    %3125 = vmatprep.subr.bf16.mxu0 0
    %3126 = vmatpush1.bf16.msra.mxu0 %v3108
    %3127 = vmatprep.subr.bf16.mxu0 0
    %3128 = vmatpush1.bf16.msra.mxu0 %v3109
    %3129 = vmatprep.subr.bf16.mxu0 0
    %3130 = vmatpush1.bf16.msra.mxu0 %v3110
    %3131 = vmatprep.subr.bf16.mxu0 0
    %3132 = vmatpush1.bf16.msra.mxu0 %v3111
    %3133 = vmatprep.subr.bf16.mxu0 0
    %3134 = vmatpush1.bf16.msra.mxu0 %v3112
    %3135 = vmatprep.subr.bf16.mxu0 0
    %3136 = vmatpush1.bf16.msra.mxu0 %v3113
    %3137 = vmatprep.subr.bf16.mxu0 0
    %3138 = vmatpush1.bf16.msra.mxu0 %v3114
    %3139 = vmatprep.subr.bf16.mxu0 0
    %3140 = vmatpush1.bf16.msra.mxu0 0
    %3141 = vmatprep.subr.bf16.mxu0 0
    %3142 = vmatpush1.bf16.msra.mxu0 0
    %3143 = vmatprep.subr.bf16.mxu0 0
    %3144 = vmatpush1.bf16.msra.mxu0 0
    %3145 = vmatprep.subr.bf16.mxu0 0
    %3146 = vmatpush1.bf16.msra.mxu0 0
    %3147 = vmatprep.subr.bf16.mxu0 0
    %3148 = vmatpush1.bf16.msra.mxu0 0
    %3149 = vmatprep.subr.bf16.mxu0 0
    %3150 = vmatpush1.bf16.msra.mxu0 0
    %3151 = vmatprep.subr.bf16.mxu0 0
    %3152 = vmatpush1.bf16.msra.mxu0 0
    %3153 = vmatprep.subr.bf16.mxu0 0
    %3154 = vmatpush1.bf16.msra.mxu0 0
    %3155 = vmatprep.mubr.bf16.mxu0 0
    %3156 = vmatmul.mubr.bf16.gmra.mrb[0].mxu0 %v3068
    %v3157 = vpop.f32.mrb[0].mxu0
    %v3158 = vadd.f32 %v3073, %v3157
    %v3159 = vpop.f32.mrb[0].mxu0
    %v3160 = vpop.f32.mrb[0].mxu0
    %v3161 = vpop.f32.mrb[0].mxu0
    %3162 = vdwg.mxu0
    %v3163 = vmax.f32 %v3158, 0.0
    %v3164 = vld [vmem:[#allocation48] sm:$0xf]
    %v3165 = vld [vmem:[#allocation48 + $0x4] sm:$0xf]
    %v3166 = vld [vmem:[#allocation48 + $0x8] sm:$0xf]
    %v3167 = vld [vmem:[#allocation48 + $0xc] sm:$0xf]
    %v3168 = vld [vmem:[#allocation48 + $0x10] sm:$0xf]
    %v3169 = vld [vmem:[#allocation48 + $0x14] sm:$0xf]
    %v3170 = vld [vmem:[#allocation48 + $0x18] sm:$0xf]
    %v3171 = vld [vmem:[#allocation48 + $0x1c] sm:$0xf]
    %v3172 = vld [vmem:[#allocation48 + $0x20] sm:$0xf]
    %v3173 = vld [vmem:[#allocation48 + $0x24] sm:$0xf]
    %v3174 = vld [vmem:[#allocation48 + $0x28] sm:$0xf]
    %v3175 = vld [vmem:[#allocation48 + $0x2c] sm:$0xf]
    %v3176 = vld [vmem:[#allocation48 + $0x30] sm:$0xf]
    %v3177 = vld [vmem:[#allocation48 + $0x34] sm:$0xf]
    %v3178 = vld [vmem:[#allocation48 + $0x38] sm:$0xf]
    %v3179 = vld [vmem:[#allocation48 + $0x3c] sm:$0xf]
    %v3180 = vld [vmem:[#allocation49] sm:$0x1]
    %v3181 = vpack.c.bf16 %v3163, %v3163
    %v3183 = vlaneseq
    %v3184 = vshrl.u32 %v3183, 7
    %v3185 = vsub.s32 0, %v3184
    %v3186 = vrot.slane %v3180, %v3185
    %v3204 = vunpack.c.l.b16 %v3164
    %v3205 = vunpack.c.l.b16 %v3165
    %v3206 = vunpack.c.l.b16 %v3166
    %v3207 = vunpack.c.l.b16 %v3167
    %v3208 = vunpack.c.l.b16 %v3168
    %v3209 = vunpack.c.l.b16 %v3169
    %v3210 = vunpack.c.l.b16 %v3170
    %v3211 = vunpack.c.l.b16 %v3171
    %v3212 = vunpack.c.l.b16 %v3172
    %v3213 = vunpack.c.l.b16 %v3173
    %v3214 = vunpack.c.l.b16 %v3174
    %v3215 = vunpack.c.l.b16 %v3175
    %v3216 = vunpack.c.l.b16 %v3176
    %v3217 = vunpack.c.l.b16 %v3177
    %v3218 = vunpack.c.l.b16 %v3178
    %v3219 = vunpack.c.l.b16 %v3179
    %v3220 = vpack.c.b16 %v3205, %v3204
    %v3221 = vpack.c.b16 %v3207, %v3206
    %v3222 = vpack.c.b16 %v3209, %v3208
    %v3223 = vpack.c.b16 %v3211, %v3210
    %v3224 = vpack.c.b16 %v3213, %v3212
    %v3225 = vpack.c.b16 %v3215, %v3214
    %v3226 = vpack.c.b16 %v3217, %v3216
    %v3227 = vpack.c.b16 %v3219, %v3218
    %3236 = vmatprep.subr.bf16.mxu0 0
    %3237 = vmatpush1.bf16.msra.mxu0 %v3220
    %3238 = vmatprep.subr.bf16.mxu0 0
    %3239 = vmatpush1.bf16.msra.mxu0 %v3221
    %3240 = vmatprep.subr.bf16.mxu0 0
    %3241 = vmatpush1.bf16.msra.mxu0 %v3222
    %3242 = vmatprep.subr.bf16.mxu0 0
    %3243 = vmatpush1.bf16.msra.mxu0 %v3223
    %3244 = vmatprep.subr.bf16.mxu0 0
    %3245 = vmatpush1.bf16.msra.mxu0 %v3224
    %3246 = vmatprep.subr.bf16.mxu0 0
    %3247 = vmatpush1.bf16.msra.mxu0 %v3225
    %3248 = vmatprep.subr.bf16.mxu0 0
    %3249 = vmatpush1.bf16.msra.mxu0 %v3226
    %3250 = vmatprep.subr.bf16.mxu0 0
    %3251 = vmatpush1.bf16.msra.mxu0 %v3227
    %3252 = vmatprep.subr.bf16.mxu0 0
    %3253 = vmatpush1.bf16.msra.mxu0 0
    %3254 = vmatprep.subr.bf16.mxu0 0
    %3255 = vmatpush1.bf16.msra.mxu0 0
    %3256 = vmatprep.subr.bf16.mxu0 0
    %3257 = vmatpush1.bf16.msra.mxu0 0
    %3258 = vmatprep.subr.bf16.mxu0 0
    %3259 = vmatpush1.bf16.msra.mxu0 0
    %3260 = vmatprep.subr.bf16.mxu0 0
    %3261 = vmatpush1.bf16.msra.mxu0 0
    %3262 = vmatprep.subr.bf16.mxu0 0
    %3263 = vmatpush1.bf16.msra.mxu0 0
    %3264 = vmatprep.subr.bf16.mxu0 0
    %3265 = vmatpush1.bf16.msra.mxu0 0
    %3266 = vmatprep.subr.bf16.mxu0 0
    %3267 = vmatpush1.bf16.msra.mxu0 0
    %3268 = vmatprep.mubr.bf16.mxu0 0
    %3269 = vmatmul.mubr.bf16.gmra.mrb[0].mxu0 %v3181
    %v3270 = vpop.f32.mrb[0].mxu0
    %v3271 = vadd.f32 %v3186, %v3270
    %v3272 = vpop.f32.mrb[0].mxu0
    %v3273 = vpop.f32.mrb[0].mxu0
    %v3274 = vpop.f32.mrb[0].mxu0
    %3275 = vdwg.mxu0
    %v3276 = vmax.f32 %v3271, 0.0
    %v3277 = vld [vmem:[#allocation51] sm:$0xf]
    %v3278 = vld [vmem:[#allocation51 + $0x4] sm:$0xf]
    %v3279 = vld [vmem:[#allocation51 + $0x8] sm:$0xf]
    %v3280 = vld [vmem:[#allocation51 + $0xc] sm:$0xf]
    %v3281 = vld [vmem:[#allocation51 + $0x10] sm:$0xf]
    %v3282 = vld [vmem:[#allocation51 + $0x14] sm:$0xf]
    %v3283 = vld [vmem:[#allocation51 + $0x18] sm:$0xf]
    %v3284 = vld [vmem:[#allocation51 + $0x1c] sm:$0xf]
    %v3285 = vld [vmem:[#allocation51 + $0x20] sm:$0xf]
    %v3286 = vld [vmem:[#allocation51 + $0x24] sm:$0xf]
    %v3287 = vld [vmem:[#allocation51 + $0x28] sm:$0xf]
    %v3288 = vld [vmem:[#allocation51 + $0x2c] sm:$0xf]
    %v3289 = vld [vmem:[#allocation51 + $0x30] sm:$0xf]
    %v3290 = vld [vmem:[#allocation51 + $0x34] sm:$0xf]
    %v3291 = vld [vmem:[#allocation51 + $0x38] sm:$0xf]
    %v3292 = vld [vmem:[#allocation51 + $0x3c] sm:$0xf]
    %v3293 = vld [vmem:[#allocation52] sm:$0x1]
    %v3294 = vpack.c.bf16 %v3276, %v3276
    %v3296 = vlaneseq
    %v3297 = vshrl.u32 %v3296, 7
    %v3298 = vsub.s32 0, %v3297
    %v3299 = vrot.slane %v3293, %v3298
    %v3317 = vunpack.c.l.b16 %v3277
    %v3318 = vunpack.c.l.b16 %v3278
    %v3319 = vunpack.c.l.b16 %v3279
    %v3320 = vunpack.c.l.b16 %v3280
    %v3321 = vunpack.c.l.b16 %v3281
    %v3322 = vunpack.c.l.b16 %v3282
    %v3323 = vunpack.c.l.b16 %v3283
    %v3324 = vunpack.c.l.b16 %v3284
    %v3325 = vunpack.c.l.b16 %v3285
    %v3326 = vunpack.c.l.b16 %v3286
    %v3327 = vunpack.c.l.b16 %v3287
    %v3328 = vunpack.c.l.b16 %v3288
    %v3329 = vunpack.c.l.b16 %v3289
    %v3330 = vunpack.c.l.b16 %v3290
    %v3331 = vunpack.c.l.b16 %v3291
    %v3332 = vunpack.c.l.b16 %v3292
    %v3333 = vpack.c.b16 %v3318, %v3317
    %v3334 = vpack.c.b16 %v3320, %v3319
    %v3335 = vpack.c.b16 %v3322, %v3321
    %v3336 = vpack.c.b16 %v3324, %v3323
    %v3337 = vpack.c.b16 %v3326, %v3325
    %v3338 = vpack.c.b16 %v3328, %v3327
    %v3339 = vpack.c.b16 %v3330, %v3329
    %v3340 = vpack.c.b16 %v3332, %v3331
    %3349 = vmatprep.subr.bf16.mxu0 0
    %3350 = vmatpush1.bf16.msra.mxu0 %v3333
    %3351 = vmatprep.subr.bf16.mxu0 0
    %3352 = vmatpush1.bf16.msra.mxu0 %v3334
    %3353 = vmatprep.subr.bf16.mxu0 0
    %3354 = vmatpush1.bf16.msra.mxu0 %v3335
    %3355 = vmatprep.subr.bf16.mxu0 0
    %3356 = vmatpush1.bf16.msra.mxu0 %v3336
    %3357 = vmatprep.subr.bf16.mxu0 0
    %3358 = vmatpush1.bf16.msra.mxu0 %v3337
    %3359 = vmatprep.subr.bf16.mxu0 0
    %3360 = vmatpush1.bf16.msra.mxu0 %v3338
    %3361 = vmatprep.subr.bf16.mxu0 0
    %3362 = vmatpush1.bf16.msra.mxu0 %v3339
    %3363 = vmatprep.subr.bf16.mxu0 0
    %3364 = vmatpush1.bf16.msra.mxu0 %v3340
    %3365 = vmatprep.subr.bf16.mxu0 0
    %3366 = vmatpush1.bf16.msra.mxu0 0
    %3367 = vmatprep.subr.bf16.mxu0 0
    %3368 = vmatpush1.bf16.msra.mxu0 0
    %3369 = vmatprep.subr.bf16.mxu0 0
    %3370 = vmatpush1.bf16.msra.mxu0 0
    %3371 = vmatprep.subr.bf16.mxu0 0
    %3372 = vmatpush1.bf16.msra.mxu0 0
    %3373 = vmatprep.subr.bf16.mxu0 0
    %3374 = vmatpush1.bf16.msra.mxu0 0
    %3375 = vmatprep.subr.bf16.mxu0 0
    %3376 = vmatpush1.bf16.msra.mxu0 0
    %3377 = vmatprep.subr.bf16.mxu0 0
    %3378 = vmatpush1.bf16.msra.mxu0 0
    %3379 = vmatprep.subr.bf16.mxu0 0
    %3380 = vmatpush1.bf16.msra.mxu0 0
    %3381 = vmatprep.mubr.bf16.mxu0 0
    %3382 = vmatmul.mubr.bf16.gmra.mrb[0].mxu0 %v3294
    %v3383 = vpop.f32.mrb[0].mxu0
    %v3384 = vadd.f32 %v3299, %v3383
    %v3385 = vpop.f32.mrb[0].mxu0
    %v3386 = vpop.f32.mrb[0].mxu0
    %v3387 = vpop.f32.mrb[0].mxu0
    %3388 = vdwg.mxu0
    %v3389 = vadd.f32 %v1356, %v3384
    %v3390 = vld [vmem:[#allocation54] sm:$0x1]
    %v3392 = vlaneseq
    %v3393 = vshrl.u32 %v3392, 7
    %v3394 = vsub.s32 0, %v3393
    %v3395 = vrot.slane %v3390, %v3394
    %v3397 = vmul.f32 %v3395, %v2711
    %v3398 = vld [vmem:[#allocation55] sm:$0x1]
    %v3400 = vlaneseq
    %v3401 = vshrl.u32 %v3400, 7
    %v3402 = vsub.s32 0, %v3401
    %v3403 = vrot.slane %v3398, %v3402
    %v3405 = vmul.f32 %v3403, %v3389
    %3406 = vst [vmem:[%s105] sm:$0xff] %v3397
    %3407 = vst [vmem:[%s107] sm:$0xff] %v3405
    // Predicated region
    $region354: #{nice_forward.1} parent=1 // pred_check
      _
    $region355: #{nice_forward.1} parent=1 // pred_check_branch
      %3409 = sbr.rel (0) target = $region357
    $region356: #{nice_forward.1} parent=1 // pred_region
      _
    $region357: #{nice_forward.1} parent=1 // pred_fallthru
      _
    // Predicated region
    $region358: #{nice_forward.1} parent=1 // pred_check
      _
    $region359: #{nice_forward.1} parent=1 // pred_check_branch
      %3411 = sbr.rel (0) target = $region361
    $region360: #{nice_forward.1} parent=1 // pred_region
      _
    $region361: #{nice_forward.1} parent=1 // pred_fallthru
      _
    // Predicated region
    $region362: #{nice_forward.1} parent=1 // pred_check
      _
    $region363: #{nice_forward.1} parent=1 // pred_check_branch
      %3413 = sbr.rel (0) target = $region365
    $region364: #{nice_forward.1} parent=1 // pred_region
      _
    $region365: #{nice_forward.1} parent=1 // pred_fallthru
      _
    // Predicated region
    $region366: #{nice_forward.1} parent=1 // pred_check
      _
    $region367: #{nice_forward.1} parent=1 // pred_check_branch
      %3415 = sbr.rel (0) target = $region369
    $region368: #{nice_forward.1} parent=1 // pred_region
      _
    $region369: #{nice_forward.1} parent=1 // pred_fallthru
      _
    %3416 = vsyncpa [#allocation3], 1
    %3417 = vsyncpa [#allocation5], 1
    %3418 = vsyncpa [#allocation8], 1
    %3419 = vsyncpa [#allocation11], 1
    %3420 = vsyncpa [#allocation14], 1
    %3421 = vsyncpa [#allocation17], 1
    %3422 = vsyncpa [#allocation20], 1
    %3423 = vsyncpa [#allocation23], 1
    %3424 = vsyncpa [#allocation26], 1
    %3425 = vsyncpa [#allocation29], 1
    %3426 = vsyncpa [#allocation32], 1
    %3427 = vsyncpa [#allocation35], 1
    %3428 = vsyncpa [#allocation38], 1
    %3429 = vsyncpa [#allocation41], 1
    %3430 = vsyncpa [#allocation44], 1
    %3431 = vsyncpa [#allocation47], 1
    %3432 = vsyncpa [#allocation50], 1
    %3433 = vsyncpa [#allocation53], 1
    %3434 = vsyncpa [#allocation56], 1

</llo_original>
